<compile_context>
chip_gen: v6e
topology: v6e:2x2x1
jax: 0.10.0
libtpu: 0.0.40
codegen_flags: <defaults>
</compile_context>

<pallas_src>
from functools import partial

import jax
import jax.numpy as jnp
from jax.experimental import pallas as pl
from jax.experimental.pallas import tpu as pltpu

_OUT_PAD = 128  # lane-dense padded width for the 7-wide head output


# ---------------------------------------------------------------------------
# Weight packing (trace-time, in the JAX wrapper).
#
# Packed gate layout along the last dim (width 8H):
#   [i_f, i_b, f_f, f_b, g_f, g_b, o_f, o_b], each block H wide.
# With state layout [h_f | h_b] (width 2H) this makes every gate slab a
# contiguous 2H slice and lets one matmul serve both directions.
# ---------------------------------------------------------------------------
def _pack_lstm_layer(lp, H, mm_dtype):
    def interleave_cols(wf, wb):
        blocks = []
        for j in range(4):  # PyTorch gate order i, f, g, o
            blocks.append(wf[:, j * H:(j + 1) * H])
            blocks.append(wb[:, j * H:(j + 1) * H])
        return jnp.concatenate(blocks, axis=-1)

    wih_p = interleave_cols(lp["w_ih_f"], lp["w_ih_b"]).astype(mm_dtype)  # (in, 8H)
    b_p = interleave_cols(lp["b_f"], lp["b_b"])                           # (1, 8H) f32

    zero = jnp.zeros((H, H), lp["w_hh_f"].dtype)
    rows_f, rows_b = [], []
    for j in range(4):
        rows_f += [lp["w_hh_f"][:, j * H:(j + 1) * H], zero]
        rows_b += [zero, lp["w_hh_b"][:, j * H:(j + 1) * H]]
    whh_p = jnp.concatenate(
        [jnp.concatenate(rows_f, axis=-1),
         jnp.concatenate(rows_b, axis=-1)], axis=0).astype(mm_dtype)      # (2H, 8H)
    return wih_p, whh_p, b_p


# ---------------------------------------------------------------------------
# Fused kernel: bi-LSTM stack + MLP head, single invocation (no grid).
# ---------------------------------------------------------------------------
def _make_fused_kernel(T, B_pad, H, num_layers, mm_dtype):
    G = 8 * H        # packed gate width (both directions)
    GH = 2 * H       # one gate slab (both directions) / state width
    n_lstm_refs = 3 + 4 * (num_layers - 1)
    n_in = 1 + n_lstm_refs + 5

    def kernel(*args):
        x_ref = args[0]
        lstm_refs = args[1:1 + n_lstm_refs]
        w1t_ref, w1b_ref, b1_ref, w2_ref, b2_ref = args[1 + n_lstm_refs:n_in]
        out_ref = args[n_in]
        gx_scr, gsel_scr, actf_scr, actb_scr = args[n_in + 1:n_in + 5]

        # Mask of forward-direction columns in the packed gate layout.
        # Built once (hoisted) from comparisons only.
        col = jax.lax.broadcasted_iota(jnp.int32, (B_pad, G), 1)
        fwd_mask = col < H
        for j in range(1, 4):
            fwd_mask = fwd_mask | ((col >= j * GH) & (col < j * GH + H))

        def run_recurrence(whh):
            # whh: (2H, 8H) packed block-diagonal recurrent weights (value,
            # loaded once -> loop invariant, already in mm_dtype).

            # Bulk direction pre-select (off the serial chain): row-block s of
            # gsel holds forward gates for time s and backward gates for time
            # T-1-s.  All row offsets are multiples of B_pad = 8 (aligned).
            for s in range(T):
                rf = s * B_pad
                rb = (T - 1 - s) * B_pad
                gsel_scr[rf:rf + B_pad, :] = jnp.where(
                    fwd_mask, gx_scr[rf:rf + B_pad, :], gx_scr[rb:rb + B_pad, :])

            h = jnp.zeros((B_pad, GH), jnp.float32)   # [h_f | h_b]
            c = jnp.zeros((B_pad, GH), jnp.float32)   # [c_f | c_b]
            # Serial recurrence over time (static unroll; T is small).
            # TODO(synk): lax.fori_loop(unroll=2..4) for large T.
            for s in range(T):
                rf = s * B_pad
                rb = (T - 1 - s) * B_pad
                gates = gsel_scr[rf:rf + B_pad, :] + jnp.dot(
                    h.astype(mm_dtype), whh, preferred_element_type=jnp.float32)
                # Full 128-lane EUP ops, gates sliced out afterwards.
                sig = jax.nn.sigmoid(gates)
                th = jnp.tanh(gates)
                i_g = sig[:, 0 * GH:1 * GH]
                f_g = sig[:, 1 * GH:2 * GH]
                o_g = sig[:, 3 * GH:4 * GH]
                g_g = th[:, 2 * GH:3 * GH]
                c = f_g * c + i_g * g_g
                h = o_g * jnp.tanh(c)
                actf_scr[rf:rf + B_pad, :] = h[:, 0:H]
                actb_scr[rb:rb + B_pad, :] = h[:, H:GH]

        # ---- Layer 0: hoisted input projection from x (already mm_dtype). ----
        wih0_ref, whh0_ref, b0_ref = lstm_refs[0], lstm_refs[1], lstm_refs[2]
        gx_scr[...] = jnp.dot(x_ref[...], wih0_ref[...],
                              preferred_element_type=jnp.float32) + b0_ref[...]
        run_recurrence(whh0_ref[...])

        # ---- Layers 1..: no lane concat; split-W_ih sum of two matmuls. ----
        for layer in range(1, num_layers):
            base = 3 + 4 * (layer - 1)
            wt_ref, wb_ref, wh_ref, bb_ref = (
                lstm_refs[base], lstm_refs[base + 1],
                lstm_refs[base + 2], lstm_refs[base + 3])
            gx_scr[...] = (
                jnp.dot(actf_scr[...].astype(mm_dtype), wt_ref[...],
                        preferred_element_type=jnp.float32)
                + jnp.dot(actb_scr[...].astype(mm_dtype), wb_ref[...],
                          preferred_element_type=jnp.float32)
                + bb_ref[...])
            run_recurrence(wh_ref[...])

        # ---- MLP head: linear1 -> ReLU -> linear2 (output padded to 128). ----
        hidden = jnp.maximum(
            jnp.dot(actf_scr[...].astype(mm_dtype), w1t_ref[...],
                    preferred_element_type=jnp.float32)
            + jnp.dot(actb_scr[...].astype(mm_dtype), w1b_ref[...],
                      preferred_element_type=jnp.float32)
            + b1_ref[...], 0.0)
        out_ref[...] = (
            jnp.dot(hidden.astype(mm_dtype), w2_ref[...],
                    preferred_element_type=jnp.float32) + b2_ref[...])

    return kernel


# ---------------------------------------------------------------------------
# Full forward wrapper.
# matmul_dtype: MXU input dtype only (weights pre-cast once here; activations
# cast per matmul).  Accumulation, biases and the cell/hidden state stay f32.
# bfloat16 default — the MXU on v5e/v6e/v7x is bf16-native and the recurrence
# is 2*T strictly serial matmuls, so fewer MXU passes is pure latency win.
# ---------------------------------------------------------------------------
def unimodal_text_forward(x, params, *, matmul_dtype=jnp.bfloat16):
    T, B, E = x.shape
    lstm_layers = params["lstm"]
    num_layers = len(lstm_layers)
    H = lstm_layers[0]["w_hh_f"].shape[0]
    D2 = params["w1"].shape[1]
    n_out = params["w2"].shape[1]

    # Pad batch rows to a sublane multiple so every per-step slab slice is an
    # aligned (8, lanes) access (zero rows are inert: the recurrent matmul
    # never mixes rows, and padded rows are dropped at the end).
    B_pad = max(8, ((B + 7) // 8) * 8)
    x_pad = jnp.zeros((T, B_pad, E), jnp.float32).at[:, :B, :].set(x)
    inputs = [x_pad.reshape(T * B_pad, E).astype(matmul_dtype)]

    for layer, lp in enumerate(lstm_layers):
        wih_p, whh_p, b_p = _pack_lstm_layer(lp, H, matmul_dtype)
        if layer == 0:
            inputs += [wih_p, whh_p, b_p]
        else:
            # Split W_ih rows into forward/backward halves -> no lane concat
            # of the previous layer's direction slabs is ever needed.
            inputs += [wih_p[:H], wih_p[H:], whh_p, b_p]

    w1 = params["w1"].astype(matmul_dtype)
    w2p = jnp.zeros((D2, _OUT_PAD), jnp.float32).at[:, :n_out].set(
        params["w2"]).astype(matmul_dtype)
    b2p = jnp.zeros((1, _OUT_PAD), jnp.float32).at[:, :n_out].set(params["b2"])
    inputs += [w1[:H], w1[H:], params["b1"], w2p, b2p]

    kernel = _make_fused_kernel(T, B_pad, H, num_layers, matmul_dtype)

    y = pl.pallas_call(
        kernel,
        out_shape=jax.ShapeDtypeStruct((T * B_pad, _OUT_PAD), jnp.float32),
        in_specs=[pl.BlockSpec(memory_space=pltpu.MemorySpace.VMEM)
                  for _ in inputs],
        out_specs=pl.BlockSpec(memory_space=pltpu.MemorySpace.VMEM),
        scratch_shapes=[
            pltpu.VMEM((T * B_pad, 8 * H), jnp.float32),   # packed input-gate slab
            pltpu.VMEM((T * B_pad, 8 * H), jnp.float32),   # pre-selected gate slab
            pltpu.VMEM((T * B_pad, H), jnp.float32),       # forward hidden slab
            pltpu.VMEM((T * B_pad, H), jnp.float32),       # backward hidden slab
        ],
        compiler_params=pltpu.CompilerParams(
            vmem_limit_bytes=32 * 1024 * 1024),
    )(*inputs)

    y = y.reshape(T, B_pad, _OUT_PAD)[:, :B, :n_out]
    # torch.flatten(output, 1, 2): (T, B, 7) -> (T, B*7)
    return y.reshape(T, B * n_out)


# ---------------------------------------------------------------------------
# Parameter init (deterministic, synthetic; PyTorch-style uniform init).
# Weight layout is (in_dim, 4H), i.e. transposed vs PyTorch's weight_ih_l*.
# Bias is the fused b_ih + b_hh, shape (1, 4H).  Gate order [i, f, g, o].
# ---------------------------------------------------------------------------
def init_params(key, embedding_dim, hidden_dim1, hidden_dim2, num_layers):
    assert hidden_dim1 % 2 == 0
    H = hidden_dim1 // 2
    params = {"lstm": []}
    k = key
    bound = 1.0 / (H ** 0.5)
    for layer in range(num_layers):
        in_dim = embedding_dim if layer == 0 else hidden_dim1
        layer_p = {}
        for direction in ("f", "b"):
            k, k1, k2, k3 = jax.random.split(k, 4)
            layer_p["w_ih_" + direction] = jax.random.uniform(
                k1, (in_dim, 4 * H), jnp.float32, -bound, bound)
            layer_p["w_hh_" + direction] = jax.random.uniform(
                k2, (H, 4 * H), jnp.float32, -bound, bound)
            layer_p["b_" + direction] = jax.random.uniform(
                k3, (1, 4 * H), jnp.float32, -bound, bound)
        params["lstm"].append(layer_p)

    k, k1, k2, k3, k4 = jax.random.split(k, 5)
    bound1 = 1.0 / (hidden_dim1 ** 0.5)
    bound2 = 1.0 / (hidden_dim2 ** 0.5)
    params["w1"] = jax.random.uniform(k1, (hidden_dim1, hidden_dim2),
                                      jnp.float32, -bound1, bound1)
    params["b1"] = jax.random.uniform(k2, (1, hidden_dim2),
                                      jnp.float32, -bound1, bound1)
    params["w2"] = jax.random.uniform(k3, (hidden_dim2, 7),
                                      jnp.float32, -bound2, bound2)
    params["b2"] = jax.random.uniform(k4, (1, 7),
                                      jnp.float32, -bound2, bound2)
    return params


# ---------------------------------------------------------------------------
# Pure-JAX reference (uses the original, unpacked per-direction weights).
# ---------------------------------------------------------------------------
def _lstm_direction_ref(x, w_ih, w_hh, b, reverse):
    _, B, _ = x.shape
    H = w_hh.shape[0]
    xs = jnp.flip(x, axis=0) if reverse else x

    def step(carry, x_t):
        h, c = carry
        gates = x_t @ w_ih + h @ w_hh + b
        i = jax.nn.sigmoid(gates[:, 0:H])
        f = jax.nn.sigmoid(gates[:, H:2 * H])
        g = jnp.tanh(gates[:, 2 * H:3 * H])
        o = jax.nn.sigmoid(gates[:, 3 * H:4 * H])
        c = f * c + i * g
        h = o * jnp.tanh(c)
        return (h, c), h

    init = (jnp.zeros((B, H), jnp.float32), jnp.zeros((B, H), jnp.float32))
    _, ys = jax.lax.scan(step, init, xs)
    return jnp.flip(ys, axis=0) if reverse else ys


def unimodal_text_forward_ref(x, params):
    out = x
    for lp in params["lstm"]:
        f = _lstm_direction_ref(out, lp["w_ih_f"], lp["w_hh_f"], lp["b_f"], False)
        b = _lstm_direction_ref(out, lp["w_ih_b"], lp["w_hh_b"], lp["b_b"], True)
        out = jnp.concatenate([f, b], axis=-1)
    T, B, D1 = out.shape
    h = jnp.maximum(out.reshape(T * B, D1) @ params["w1"] + params["b1"], 0.0)
    y = h @ params["w2"] + params["b2"]
    n_out = params["w2"].shape[1]
    return y.reshape(T, B, n_out).reshape(T, B * n_out)


if __name__ == "__main__":
    embedding_dim = 32
    hidden_dim1 = 32        # bidirectional hidden size = 16 per direction
    hidden_dim2 = 64
    num_layers = 2
    seq_len = 8
    batch = 2

    key = jax.random.PRNGKey(0)
    kx, kp = jax.random.split(key)
    x = jax.random.normal(kx, (seq_len, batch, embedding_dim), jnp.float32)
    params = init_params(kp, embedding_dim, hidden_dim1, hidden_dim2, num_layers)

    ref = jax.block_until_ready(unimodal_text_forward_ref(x, params))

    # f32 MXU-input path: validates the packed layout tightly.
    fwd_f32 = jax.jit(partial(unimodal_text_forward, matmul_dtype=jnp.float32))
    out_f32 = jax.block_until_ready(fwd_f32(x, params))
    assert out_f32.shape == (seq_len, batch * 7), out_f32.shape
    err_f32 = float(jnp.max(jnp.abs(out_f32 - ref)))
    assert jnp.allclose(out_f32, ref, atol=5e-3, rtol=5e-3), err_f32

    # Default bf16 MXU-input path (f32 accumulation / f32 state): perf default.
    fwd = jax.jit(unimodal_text_forward)
    out = jax.block_until_ready(fwd(x, params))
    assert out.shape == (seq_len, batch * 7), out.shape
    err_bf16 = float(jnp.max(jnp.abs(out - ref)))
    assert jnp.allclose(out, ref, atol=1e-1, rtol=1e-1), err_bf16

    print("KERNEL_OK")
</pallas_src>

<mosaic_0001>
module attributes {stable_mosaic.version = 11 : i64} {
  func.func @kernel(%arg0: memref<64x32xf32, #tpu.memory_space<vmem>>, %arg1: memref<32x128xf32, #tpu.memory_space<vmem>>, %arg2: memref<32x128xf32, #tpu.memory_space<vmem>>, %arg3: memref<1x128xf32, #tpu.memory_space<vmem>>, %arg4: memref<16x128xf32, #tpu.memory_space<vmem>>, %arg5: memref<16x128xf32, #tpu.memory_space<vmem>>, %arg6: memref<32x128xf32, #tpu.memory_space<vmem>>, %arg7: memref<1x128xf32, #tpu.memory_space<vmem>>, %arg8: memref<16x64xf32, #tpu.memory_space<vmem>>, %arg9: memref<16x64xf32, #tpu.memory_space<vmem>>, %arg10: memref<1x64xf32, #tpu.memory_space<vmem>>, %arg11: memref<64x128xf32, #tpu.memory_space<vmem>>, %arg12: memref<1x128xf32, #tpu.memory_space<vmem>>, %arg13: memref<64x128xf32, #tpu.memory_space<vmem>>, %arg14: memref<64x128xf32, #tpu.memory_space<vmem>>, %arg15: memref<64x128xf32, #tpu.memory_space<vmem>>, %arg16: memref<64x16xf32, #tpu.memory_space<vmem>>, %arg17: memref<64x16xf32, #tpu.memory_space<vmem>>) attributes {dimension_semantics = [], scalar_prefetch = 0 : i64, scratch_operands = 4 : i64, tpu.core_type = #tpu.core_type<tc>} {
    %0 = tpu.iota {dimensions = array<i32: 1>} : vector<8x128xi32>
    %c16_i32 = arith.constant 16 : i32
    %1 = vector.broadcast %c16_i32 : i32 to vector<8x128xi32>
    %2 = arith.cmpi slt, %0, %1 : vector<8x128xi32>
    %c32_i32 = arith.constant 32 : i32
    %3 = vector.broadcast %c32_i32 : i32 to vector<8x128xi32>
    %4 = arith.cmpi sge, %0, %3 : vector<8x128xi32>
    %c48_i32 = arith.constant 48 : i32
    %5 = vector.broadcast %c48_i32 : i32 to vector<8x128xi32>
    %6 = arith.cmpi slt, %0, %5 : vector<8x128xi32>
    %7 = arith.andi %4, %6 : vector<8x128xi1>
    %8 = arith.ori %2, %7 : vector<8x128xi1>
    %c64_i32 = arith.constant 64 : i32
    %9 = vector.broadcast %c64_i32 : i32 to vector<8x128xi32>
    %10 = arith.cmpi sge, %0, %9 : vector<8x128xi32>
    %c80_i32 = arith.constant 80 : i32
    %11 = vector.broadcast %c80_i32 : i32 to vector<8x128xi32>
    %12 = arith.cmpi slt, %0, %11 : vector<8x128xi32>
    %13 = arith.andi %10, %12 : vector<8x128xi1>
    %14 = arith.ori %8, %13 : vector<8x128xi1>
    %c96_i32 = arith.constant 96 : i32
    %15 = vector.broadcast %c96_i32 : i32 to vector<8x128xi32>
    %16 = arith.cmpi sge, %0, %15 : vector<8x128xi32>
    %c112_i32 = arith.constant 112 : i32
    %17 = vector.broadcast %c112_i32 : i32 to vector<8x128xi32>
    %18 = arith.cmpi slt, %0, %17 : vector<8x128xi32>
    %19 = arith.andi %16, %18 : vector<8x128xi1>
    %20 = arith.ori %14, %19 : vector<8x128xi1>
    %c0 = arith.constant 0 : index
    %c0_0 = arith.constant 0 : index
    %21 = vector.load %arg0[%c0, %c0_0] : memref<64x32xf32, #tpu.memory_space<vmem>>, vector<64x32xf32>
    %c0_1 = arith.constant 0 : index
    %c0_2 = arith.constant 0 : index
    %22 = vector.load %arg1[%c0_1, %c0_2] : memref<32x128xf32, #tpu.memory_space<vmem>>, vector<32x128xf32>
    %cst = arith.constant dense<0.000000e+00> : vector<64x128xf32>
    %23 = tpu.matmul %21, %22, %cst {dimension_numbers = #tpu.dot_dimension_numbers<[1], [0], [0], [1], [0, 0, 1, 1], [], []>} : vector<64x32xf32>, vector<32x128xf32>, vector<64x128xf32> -> vector<64x128xf32>
    %c0_3 = arith.constant 0 : index
    %c0_4 = arith.constant 0 : index
    %24 = vector.load %arg3[%c0_3, %c0_4] : memref<1x128xf32, #tpu.memory_space<vmem>>, vector<1x128xf32>
    %25 = vector.broadcast %24 : vector<1x128xf32> to vector<64x128xf32>
    %26 = arith.addf %23, %25 : vector<64x128xf32>
    %c0_5 = arith.constant 0 : index
    %c0_6 = arith.constant 0 : index
    %27 = vector.load %arg14[%c0_5, %c0_6] : memref<64x128xf32, #tpu.memory_space<vmem>>, vector<64x128xf32>
    tpu.vector_store %arg14[%c0_5, %c0_6], %26 {strides = array<i32>} : memref<64x128xf32, #tpu.memory_space<vmem>>, vector<64x128xf32>,
    %c0_7 = arith.constant 0 : index
    %c0_8 = arith.constant 0 : index
    %28 = vector.load %arg2[%c0_7, %c0_8] : memref<32x128xf32, #tpu.memory_space<vmem>>, vector<32x128xf32>
    %c0_9 = arith.constant 0 : index
    %c0_10 = arith.constant 0 : index
    %29 = vector.load %arg14[%c0_9, %c0_10] : memref<64x128xf32, #tpu.memory_space<vmem>>, vector<8x128xf32>
    %c56 = arith.constant 56 : index
    %c0_11 = arith.constant 0 : index
    %30 = vector.load %arg14[%c56, %c0_11] : memref<64x128xf32, #tpu.memory_space<vmem>>, vector<8x128xf32>
    %31 = arith.select %20, %29, %30 : vector<8x128xi1>, vector<8x128xf32>
    %c0_12 = arith.constant 0 : index
    %c0_13 = arith.constant 0 : index
    %32 = vector.load %arg15[%c0_12, %c0_13] : memref<64x128xf32, #tpu.memory_space<vmem>>, vector<8x128xf32>
    tpu.vector_store %arg15[%c0_12, %c0_13], %31 {strides = array<i32>} : memref<64x128xf32, #tpu.memory_space<vmem>>, vector<8x128xf32>,
    %c8 = arith.constant 8 : index
    %c0_14 = arith.constant 0 : index
    %33 = vector.load %arg14[%c8, %c0_14] : memref<64x128xf32, #tpu.memory_space<vmem>>, vector<8x128xf32>
    %c48 = arith.constant 48 : index
    %c0_15 = arith.constant 0 : index
    %34 = vector.load %arg14[%c48, %c0_15] : memref<64x128xf32, #tpu.memory_space<vmem>>, vector<8x128xf32>
    %35 = arith.select %20, %33, %34 : vector<8x128xi1>, vector<8x128xf32>
    %c8_16 = arith.constant 8 : index
    %c0_17 = arith.constant 0 : index
    %36 = vector.load %arg15[%c8_16, %c0_17] : memref<64x128xf32, #tpu.memory_space<vmem>>, vector<8x128xf32>
    tpu.vector_store %arg15[%c8_16, %c0_17], %35 {strides = array<i32>} : memref<64x128xf32, #tpu.memory_space<vmem>>, vector<8x128xf32>,
    %c16 = arith.constant 16 : index
    %c0_18 = arith.constant 0 : index
    %37 = vector.load %arg14[%c16, %c0_18] : memref<64x128xf32, #tpu.memory_space<vmem>>, vector<8x128xf32>
    %c40 = arith.constant 40 : index
    %c0_19 = arith.constant 0 : index
    %38 = vector.load %arg14[%c40, %c0_19] : memref<64x128xf32, #tpu.memory_space<vmem>>, vector<8x128xf32>
    %39 = arith.select %20, %37, %38 : vector<8x128xi1>, vector<8x128xf32>
    %c16_20 = arith.constant 16 : index
    %c0_21 = arith.constant 0 : index
    %40 = vector.load %arg15[%c16_20, %c0_21] : memref<64x128xf32, #tpu.memory_space<vmem>>, vector<8x128xf32>
    tpu.vector_store %arg15[%c16_20, %c0_21], %39 {strides = array<i32>} : memref<64x128xf32, #tpu.memory_space<vmem>>, vector<8x128xf32>,
    %c24 = arith.constant 24 : index
    %c0_22 = arith.constant 0 : index
    %41 = vector.load %arg14[%c24, %c0_22] : memref<64x128xf32, #tpu.memory_space<vmem>>, vector<8x128xf32>
    %c32 = arith.constant 32 : index
    %c0_23 = arith.constant 0 : index
    %42 = vector.load %arg14[%c32, %c0_23] : memref<64x128xf32, #tpu.memory_space<vmem>>, vector<8x128xf32>
    %43 = arith.select %20, %41, %42 : vector<8x128xi1>, vector<8x128xf32>
    %c24_24 = arith.constant 24 : index
    %c0_25 = arith.constant 0 : index
    %44 = vector.load %arg15[%c24_24, %c0_25] : memref<64x128xf32, #tpu.memory_space<vmem>>, vector<8x128xf32>
    tpu.vector_store %arg15[%c24_24, %c0_25], %43 {strides = array<i32>} : memref<64x128xf32, #tpu.memory_space<vmem>>, vector<8x128xf32>,
    %c32_26 = arith.constant 32 : index
    %c0_27 = arith.constant 0 : index
    %45 = vector.load %arg14[%c32_26, %c0_27] : memref<64x128xf32, #tpu.memory_space<vmem>>, vector<8x128xf32>
    %c24_28 = arith.constant 24 : index
    %c0_29 = arith.constant 0 : index
    %46 = vector.load %arg14[%c24_28, %c0_29] : memref<64x128xf32, #tpu.memory_space<vmem>>, vector<8x128xf32>
    %47 = arith.select %20, %45, %46 : vector<8x128xi1>, vector<8x128xf32>
    %c32_30 = arith.constant 32 : index
    %c0_31 = arith.constant 0 : index
    %48 = vector.load %arg15[%c32_30, %c0_31] : memref<64x128xf32, #tpu.memory_space<vmem>>, vector<8x128xf32>
    tpu.vector_store %arg15[%c32_30, %c0_31], %47 {strides = array<i32>} : memref<64x128xf32, #tpu.memory_space<vmem>>, vector<8x128xf32>,
    %c40_32 = arith.constant 40 : index
    %c0_33 = arith.constant 0 : index
    %49 = vector.load %arg14[%c40_32, %c0_33] : memref<64x128xf32, #tpu.memory_space<vmem>>, vector<8x128xf32>
    %c16_34 = arith.constant 16 : index
    %c0_35 = arith.constant 0 : index
    %50 = vector.load %arg14[%c16_34, %c0_35] : memref<64x128xf32, #tpu.memory_space<vmem>>, vector<8x128xf32>
    %51 = arith.select %20, %49, %50 : vector<8x128xi1>, vector<8x128xf32>
    %c40_36 = arith.constant 40 : index
    %c0_37 = arith.constant 0 : index
    %52 = vector.load %arg15[%c40_36, %c0_37] : memref<64x128xf32, #tpu.memory_space<vmem>>, vector<8x128xf32>
    tpu.vector_store %arg15[%c40_36, %c0_37], %51 {strides = array<i32>} : memref<64x128xf32, #tpu.memory_space<vmem>>, vector<8x128xf32>,
    %c48_38 = arith.constant 48 : index
    %c0_39 = arith.constant 0 : index
    %53 = vector.load %arg14[%c48_38, %c0_39] : memref<64x128xf32, #tpu.memory_space<vmem>>, vector<8x128xf32>
    %c8_40 = arith.constant 8 : index
    %c0_41 = arith.constant 0 : index
    %54 = vector.load %arg14[%c8_40, %c0_41] : memref<64x128xf32, #tpu.memory_space<vmem>>, vector<8x128xf32>
    %55 = arith.select %20, %53, %54 : vector<8x128xi1>, vector<8x128xf32>
    %c48_42 = arith.constant 48 : index
    %c0_43 = arith.constant 0 : index
    %56 = vector.load %arg15[%c48_42, %c0_43] : memref<64x128xf32, #tpu.memory_space<vmem>>, vector<8x128xf32>
    tpu.vector_store %arg15[%c48_42, %c0_43], %55 {strides = array<i32>} : memref<64x128xf32, #tpu.memory_space<vmem>>, vector<8x128xf32>,
    %c56_44 = arith.constant 56 : index
    %c0_45 = arith.constant 0 : index
    %57 = vector.load %arg14[%c56_44, %c0_45] : memref<64x128xf32, #tpu.memory_space<vmem>>, vector<8x128xf32>
    %c0_46 = arith.constant 0 : index
    %c0_47 = arith.constant 0 : index
    %58 = vector.load %arg14[%c0_46, %c0_47] : memref<64x128xf32, #tpu.memory_space<vmem>>, vector<8x128xf32>
    %59 = arith.select %20, %57, %58 : vector<8x128xi1>, vector<8x128xf32>
    %c56_48 = arith.constant 56 : index
    %c0_49 = arith.constant 0 : index
    %60 = vector.load %arg15[%c56_48, %c0_49] : memref<64x128xf32, #tpu.memory_space<vmem>>, vector<8x128xf32>
    tpu.vector_store %arg15[%c56_48, %c0_49], %59 {strides = array<i32>} : memref<64x128xf32, #tpu.memory_space<vmem>>, vector<8x128xf32>,
    %cst_50 = arith.constant 0.000000e+00 : f32
    %61 = vector.broadcast %cst_50 : f32 to vector<8x32xf32>
    %cst_51 = arith.constant 0.000000e+00 : f32
    %62 = vector.broadcast %cst_51 : f32 to vector<8x32xf32>
    %c0_52 = arith.constant 0 : index
    %c0_53 = arith.constant 0 : index
    %63 = vector.load %arg15[%c0_52, %c0_53] : memref<64x128xf32, #tpu.memory_space<vmem>>, vector<8x128xf32>
    %cst_54 = arith.constant dense<0.000000e+00> : vector<8x128xf32>
    %64 = tpu.matmul %61, %28, %cst_54 {dimension_numbers = #tpu.dot_dimension_numbers<[1], [0], [0], [1], [0, 0, 1, 1], [], []>} : vector<8x32xf32>, vector<32x128xf32>, vector<8x128xf32> -> vector<8x128xf32>
    %65 = arith.addf %63, %64 : vector<8x128xf32>
    %66 = arith.negf %65 : vector<8x128xf32>
    %67 = math.exp %66 : vector<8x128xf32>
    %cst_55 = arith.constant 1.000000e+00 : f32
    %68 = vector.broadcast %cst_55 : f32 to vector<8x128xf32>
    %69 = arith.addf %68, %67 : vector<8x128xf32>
    %70 = arith.divf %68, %69 : vector<8x128xf32>
    %71 = math.tanh %65 : vector<8x128xf32>
    %72 = vector.extract_strided_slice %70 {offsets = [0, 0], sizes = [8, 32], strides = [1, 1]} : vector<8x128xf32> to vector<8x32xf32>
    %73 = vector.extract_strided_slice %70 {offsets = [0, 32], sizes = [8, 32], strides = [1, 1]} : vector<8x128xf32> to vector<8x32xf32>
    %74 = vector.extract_strided_slice %70 {offsets = [0, 96], sizes = [8, 32], strides = [1, 1]} : vector<8x128xf32> to vector<8x32xf32>
    %75 = vector.extract_strided_slice %71 {offsets = [0, 64], sizes = [8, 32], strides = [1, 1]} : vector<8x128xf32> to vector<8x32xf32>
    %76 = arith.mulf %73, %62 : vector<8x32xf32>
    %77 = arith.mulf %72, %75 : vector<8x32xf32>
    %78 = arith.addf %76, %77 : vector<8x32xf32>
    %79 = math.tanh %78 : vector<8x32xf32>
    %80 = arith.mulf %74, %79 : vector<8x32xf32>
    %81 = vector.extract_strided_slice %80 {offsets = [0, 0], sizes = [8, 16], strides = [1, 1]} : vector<8x32xf32> to vector<8x16xf32>
    %c0_56 = arith.constant 0 : index
    %c0_57 = arith.constant 0 : index
    %82 = vector.load %arg16[%c0_56, %c0_57] : memref<64x16xf32, #tpu.memory_space<vmem>>, vector<8x16xf32>
    tpu.vector_store %arg16[%c0_56, %c0_57], %81 {strides = array<i32>} : memref<64x16xf32, #tpu.memory_space<vmem>>, vector<8x16xf32>,
    %83 = vector.extract_strided_slice %80 {offsets = [0, 16], sizes = [8, 16], strides = [1, 1]} : vector<8x32xf32> to vector<8x16xf32>
    %c56_58 = arith.constant 56 : index
    %c0_59 = arith.constant 0 : index
    %84 = vector.load %arg17[%c56_58, %c0_59] : memref<64x16xf32, #tpu.memory_space<vmem>>, vector<8x16xf32>
    tpu.vector_store %arg17[%c56_58, %c0_59], %83 {strides = array<i32>} : memref<64x16xf32, #tpu.memory_space<vmem>>, vector<8x16xf32>,
    %c8_60 = arith.constant 8 : index
    %c0_61 = arith.constant 0 : index
    %85 = vector.load %arg15[%c8_60, %c0_61] : memref<64x128xf32, #tpu.memory_space<vmem>>, vector<8x128xf32>
    %cst_62 = arith.constant dense<0.000000e+00> : vector<8x128xf32>
    %86 = tpu.matmul %80, %28, %cst_62 {dimension_numbers = #tpu.dot_dimension_numbers<[1], [0], [0], [1], [0, 0, 1, 1], [], []>} : vector<8x32xf32>, vector<32x128xf32>, vector<8x128xf32> -> vector<8x128xf32>
    %87 = arith.addf %85, %86 : vector<8x128xf32>
    %88 = arith.negf %87 : vector<8x128xf32>
    %89 = math.exp %88 : vector<8x128xf32>
    %cst_63 = arith.constant 1.000000e+00 : f32
    %90 = vector.broadcast %cst_63 : f32 to vector<8x128xf32>
    %91 = arith.addf %90, %89 : vector<8x128xf32>
    %92 = arith.divf %90, %91 : vector<8x128xf32>
    %93 = math.tanh %87 : vector<8x128xf32>
    %94 = vector.extract_strided_slice %92 {offsets = [0, 0], sizes = [8, 32], strides = [1, 1]} : vector<8x128xf32> to vector<8x32xf32>
    %95 = vector.extract_strided_slice %92 {offsets = [0, 32], sizes = [8, 32], strides = [1, 1]} : vector<8x128xf32> to vector<8x32xf32>
    %96 = vector.extract_strided_slice %92 {offsets = [0, 96], sizes = [8, 32], strides = [1, 1]} : vector<8x128xf32> to vector<8x32xf32>
    %97 = vector.extract_strided_slice %93 {offsets = [0, 64], sizes = [8, 32], strides = [1, 1]} : vector<8x128xf32> to vector<8x32xf32>
    %98 = arith.mulf %95, %78 : vector<8x32xf32>
    %99 = arith.mulf %94, %97 : vector<8x32xf32>
    %100 = arith.addf %98, %99 : vector<8x32xf32>
    %101 = math.tanh %100 : vector<8x32xf32>
    %102 = arith.mulf %96, %101 : vector<8x32xf32>
    %103 = vector.extract_strided_slice %102 {offsets = [0, 0], sizes = [8, 16], strides = [1, 1]} : vector<8x32xf32> to vector<8x16xf32>
    %c8_64 = arith.constant 8 : index
    %c0_65 = arith.constant 0 : index
    %104 = vector.load %arg16[%c8_64, %c0_65] : memref<64x16xf32, #tpu.memory_space<vmem>>, vector<8x16xf32>
    tpu.vector_store %arg16[%c8_64, %c0_65], %103 {strides = array<i32>} : memref<64x16xf32, #tpu.memory_space<vmem>>, vector<8x16xf32>,
    %105 = vector.extract_strided_slice %102 {offsets = [0, 16], sizes = [8, 16], strides = [1, 1]} : vector<8x32xf32> to vector<8x16xf32>
    %c48_66 = arith.constant 48 : index
    %c0_67 = arith.constant 0 : index
    %106 = vector.load %arg17[%c48_66, %c0_67] : memref<64x16xf32, #tpu.memory_space<vmem>>, vector<8x16xf32>
    tpu.vector_store %arg17[%c48_66, %c0_67], %105 {strides = array<i32>} : memref<64x16xf32, #tpu.memory_space<vmem>>, vector<8x16xf32>,
    %c16_68 = arith.constant 16 : index
    %c0_69 = arith.constant 0 : index
    %107 = vector.load %arg15[%c16_68, %c0_69] : memref<64x128xf32, #tpu.memory_space<vmem>>, vector<8x128xf32>
    %cst_70 = arith.constant dense<0.000000e+00> : vector<8x128xf32>
    %108 = tpu.matmul %102, %28, %cst_70 {dimension_numbers = #tpu.dot_dimension_numbers<[1], [0], [0], [1], [0, 0, 1, 1], [], []>} : vector<8x32xf32>, vector<32x128xf32>, vector<8x128xf32> -> vector<8x128xf32>
    %109 = arith.addf %107, %108 : vector<8x128xf32>
    %110 = arith.negf %109 : vector<8x128xf32>
    %111 = math.exp %110 : vector<8x128xf32>
    %cst_71 = arith.constant 1.000000e+00 : f32
    %112 = vector.broadcast %cst_71 : f32 to vector<8x128xf32>
    %113 = arith.addf %112, %111 : vector<8x128xf32>
    %114 = arith.divf %112, %113 : vector<8x128xf32>
    %115 = math.tanh %109 : vector<8x128xf32>
    %116 = vector.extract_strided_slice %114 {offsets = [0, 0], sizes = [8, 32], strides = [1, 1]} : vector<8x128xf32> to vector<8x32xf32>
    %117 = vector.extract_strided_slice %114 {offsets = [0, 32], sizes = [8, 32], strides = [1, 1]} : vector<8x128xf32> to vector<8x32xf32>
    %118 = vector.extract_strided_slice %114 {offsets = [0, 96], sizes = [8, 32], strides = [1, 1]} : vector<8x128xf32> to vector<8x32xf32>
    %119 = vector.extract_strided_slice %115 {offsets = [0, 64], sizes = [8, 32], strides = [1, 1]} : vector<8x128xf32> to vector<8x32xf32>
    %120 = arith.mulf %117, %100 : vector<8x32xf32>
    %121 = arith.mulf %116, %119 : vector<8x32xf32>
    %122 = arith.addf %120, %121 : vector<8x32xf32>
    %123 = math.tanh %122 : vector<8x32xf32>
    %124 = arith.mulf %118, %123 : vector<8x32xf32>
    %125 = vector.extract_strided_slice %124 {offsets = [0, 0], sizes = [8, 16], strides = [1, 1]} : vector<8x32xf32> to vector<8x16xf32>
    %c16_72 = arith.constant 16 : index
    %c0_73 = arith.constant 0 : index
    %126 = vector.load %arg16[%c16_72, %c0_73] : memref<64x16xf32, #tpu.memory_space<vmem>>, vector<8x16xf32>
    tpu.vector_store %arg16[%c16_72, %c0_73], %125 {strides = array<i32>} : memref<64x16xf32, #tpu.memory_space<vmem>>, vector<8x16xf32>,
    %127 = vector.extract_strided_slice %124 {offsets = [0, 16], sizes = [8, 16], strides = [1, 1]} : vector<8x32xf32> to vector<8x16xf32>
    %c40_74 = arith.constant 40 : index
    %c0_75 = arith.constant 0 : index
    %128 = vector.load %arg17[%c40_74, %c0_75] : memref<64x16xf32, #tpu.memory_space<vmem>>, vector<8x16xf32>
    tpu.vector_store %arg17[%c40_74, %c0_75], %127 {strides = array<i32>} : memref<64x16xf32, #tpu.memory_space<vmem>>, vector<8x16xf32>,
    %c24_76 = arith.constant 24 : index
    %c0_77 = arith.constant 0 : index
    %129 = vector.load %arg15[%c24_76, %c0_77] : memref<64x128xf32, #tpu.memory_space<vmem>>, vector<8x128xf32>
    %cst_78 = arith.constant dense<0.000000e+00> : vector<8x128xf32>
    %130 = tpu.matmul %124, %28, %cst_78 {dimension_numbers = #tpu.dot_dimension_numbers<[1], [0], [0], [1], [0, 0, 1, 1], [], []>} : vector<8x32xf32>, vector<32x128xf32>, vector<8x128xf32> -> vector<8x128xf32>
    %131 = arith.addf %129, %130 : vector<8x128xf32>
    %132 = arith.negf %131 : vector<8x128xf32>
    %133 = math.exp %132 : vector<8x128xf32>
    %cst_79 = arith.constant 1.000000e+00 : f32
    %134 = vector.broadcast %cst_79 : f32 to vector<8x128xf32>
    %135 = arith.addf %134, %133 : vector<8x128xf32>
    %136 = arith.divf %134, %135 : vector<8x128xf32>
    %137 = math.tanh %131 : vector<8x128xf32>
    %138 = vector.extract_strided_slice %136 {offsets = [0, 0], sizes = [8, 32], strides = [1, 1]} : vector<8x128xf32> to vector<8x32xf32>
    %139 = vector.extract_strided_slice %136 {offsets = [0, 32], sizes = [8, 32], strides = [1, 1]} : vector<8x128xf32> to vector<8x32xf32>
    %140 = vector.extract_strided_slice %136 {offsets = [0, 96], sizes = [8, 32], strides = [1, 1]} : vector<8x128xf32> to vector<8x32xf32>
    %141 = vector.extract_strided_slice %137 {offsets = [0, 64], sizes = [8, 32], strides = [1, 1]} : vector<8x128xf32> to vector<8x32xf32>
    %142 = arith.mulf %139, %122 : vector<8x32xf32>
    %143 = arith.mulf %138, %141 : vector<8x32xf32>
    %144 = arith.addf %142, %143 : vector<8x32xf32>
    %145 = math.tanh %144 : vector<8x32xf32>
    %146 = arith.mulf %140, %145 : vector<8x32xf32>
    %147 = vector.extract_strided_slice %146 {offsets = [0, 0], sizes = [8, 16], strides = [1, 1]} : vector<8x32xf32> to vector<8x16xf32>
    %c24_80 = arith.constant 24 : index
    %c0_81 = arith.constant 0 : index
    %148 = vector.load %arg16[%c24_80, %c0_81] : memref<64x16xf32, #tpu.memory_space<vmem>>, vector<8x16xf32>
    tpu.vector_store %arg16[%c24_80, %c0_81], %147 {strides = array<i32>} : memref<64x16xf32, #tpu.memory_space<vmem>>, vector<8x16xf32>,
    %149 = vector.extract_strided_slice %146 {offsets = [0, 16], sizes = [8, 16], strides = [1, 1]} : vector<8x32xf32> to vector<8x16xf32>
    %c32_82 = arith.constant 32 : index
    %c0_83 = arith.constant 0 : index
    %150 = vector.load %arg17[%c32_82, %c0_83] : memref<64x16xf32, #tpu.memory_space<vmem>>, vector<8x16xf32>
    tpu.vector_store %arg17[%c32_82, %c0_83], %149 {strides = array<i32>} : memref<64x16xf32, #tpu.memory_space<vmem>>, vector<8x16xf32>,
    %c32_84 = arith.constant 32 : index
    %c0_85 = arith.constant 0 : index
    %151 = vector.load %arg15[%c32_84, %c0_85] : memref<64x128xf32, #tpu.memory_space<vmem>>, vector<8x128xf32>
    %cst_86 = arith.constant dense<0.000000e+00> : vector<8x128xf32>
    %152 = tpu.matmul %146, %28, %cst_86 {dimension_numbers = #tpu.dot_dimension_numbers<[1], [0], [0], [1], [0, 0, 1, 1], [], []>} : vector<8x32xf32>, vector<32x128xf32>, vector<8x128xf32> -> vector<8x128xf32>
    %153 = arith.addf %151, %152 : vector<8x128xf32>
    %154 = arith.negf %153 : vector<8x128xf32>
    %155 = math.exp %154 : vector<8x128xf32>
    %cst_87 = arith.constant 1.000000e+00 : f32
    %156 = vector.broadcast %cst_87 : f32 to vector<8x128xf32>
    %157 = arith.addf %156, %155 : vector<8x128xf32>
    %158 = arith.divf %156, %157 : vector<8x128xf32>
    %159 = math.tanh %153 : vector<8x128xf32>
    %160 = vector.extract_strided_slice %158 {offsets = [0, 0], sizes = [8, 32], strides = [1, 1]} : vector<8x128xf32> to vector<8x32xf32>
    %161 = vector.extract_strided_slice %158 {offsets = [0, 32], sizes = [8, 32], strides = [1, 1]} : vector<8x128xf32> to vector<8x32xf32>
    %162 = vector.extract_strided_slice %158 {offsets = [0, 96], sizes = [8, 32], strides = [1, 1]} : vector<8x128xf32> to vector<8x32xf32>
    %163 = vector.extract_strided_slice %159 {offsets = [0, 64], sizes = [8, 32], strides = [1, 1]} : vector<8x128xf32> to vector<8x32xf32>
    %164 = arith.mulf %161, %144 : vector<8x32xf32>
    %165 = arith.mulf %160, %163 : vector<8x32xf32>
    %166 = arith.addf %164, %165 : vector<8x32xf32>
    %167 = math.tanh %166 : vector<8x32xf32>
    %168 = arith.mulf %162, %167 : vector<8x32xf32>
    %169 = vector.extract_strided_slice %168 {offsets = [0, 0], sizes = [8, 16], strides = [1, 1]} : vector<8x32xf32> to vector<8x16xf32>
    %c32_88 = arith.constant 32 : index
    %c0_89 = arith.constant 0 : index
    %170 = vector.load %arg16[%c32_88, %c0_89] : memref<64x16xf32, #tpu.memory_space<vmem>>, vector<8x16xf32>
    tpu.vector_store %arg16[%c32_88, %c0_89], %169 {strides = array<i32>} : memref<64x16xf32, #tpu.memory_space<vmem>>, vector<8x16xf32>,
    %171 = vector.extract_strided_slice %168 {offsets = [0, 16], sizes = [8, 16], strides = [1, 1]} : vector<8x32xf32> to vector<8x16xf32>
    %c24_90 = arith.constant 24 : index
    %c0_91 = arith.constant 0 : index
    %172 = vector.load %arg17[%c24_90, %c0_91] : memref<64x16xf32, #tpu.memory_space<vmem>>, vector<8x16xf32>
    tpu.vector_store %arg17[%c24_90, %c0_91], %171 {strides = array<i32>} : memref<64x16xf32, #tpu.memory_space<vmem>>, vector<8x16xf32>,
    %c40_92 = arith.constant 40 : index
    %c0_93 = arith.constant 0 : index
    %173 = vector.load %arg15[%c40_92, %c0_93] : memref<64x128xf32, #tpu.memory_space<vmem>>, vector<8x128xf32>
    %cst_94 = arith.constant dense<0.000000e+00> : vector<8x128xf32>
    %174 = tpu.matmul %168, %28, %cst_94 {dimension_numbers = #tpu.dot_dimension_numbers<[1], [0], [0], [1], [0, 0, 1, 1], [], []>} : vector<8x32xf32>, vector<32x128xf32>, vector<8x128xf32> -> vector<8x128xf32>
    %175 = arith.addf %173, %174 : vector<8x128xf32>
    %176 = arith.negf %175 : vector<8x128xf32>
    %177 = math.exp %176 : vector<8x128xf32>
    %cst_95 = arith.constant 1.000000e+00 : f32
    %178 = vector.broadcast %cst_95 : f32 to vector<8x128xf32>
    %179 = arith.addf %178, %177 : vector<8x128xf32>
    %180 = arith.divf %178, %179 : vector<8x128xf32>
    %181 = math.tanh %175 : vector<8x128xf32>
    %182 = vector.extract_strided_slice %180 {offsets = [0, 0], sizes = [8, 32], strides = [1, 1]} : vector<8x128xf32> to vector<8x32xf32>
    %183 = vector.extract_strided_slice %180 {offsets = [0, 32], sizes = [8, 32], strides = [1, 1]} : vector<8x128xf32> to vector<8x32xf32>
    %184 = vector.extract_strided_slice %180 {offsets = [0, 96], sizes = [8, 32], strides = [1, 1]} : vector<8x128xf32> to vector<8x32xf32>
    %185 = vector.extract_strided_slice %181 {offsets = [0, 64], sizes = [8, 32], strides = [1, 1]} : vector<8x128xf32> to vector<8x32xf32>
    %186 = arith.mulf %183, %166 : vector<8x32xf32>
    %187 = arith.mulf %182, %185 : vector<8x32xf32>
    %188 = arith.addf %186, %187 : vector<8x32xf32>
    %189 = math.tanh %188 : vector<8x32xf32>
    %190 = arith.mulf %184, %189 : vector<8x32xf32>
    %191 = vector.extract_strided_slice %190 {offsets = [0, 0], sizes = [8, 16], strides = [1, 1]} : vector<8x32xf32> to vector<8x16xf32>
    %c40_96 = arith.constant 40 : index
    %c0_97 = arith.constant 0 : index
    %192 = vector.load %arg16[%c40_96, %c0_97] : memref<64x16xf32, #tpu.memory_space<vmem>>, vector<8x16xf32>
    tpu.vector_store %arg16[%c40_96, %c0_97], %191 {strides = array<i32>} : memref<64x16xf32, #tpu.memory_space<vmem>>, vector<8x16xf32>,
    %193 = vector.extract_strided_slice %190 {offsets = [0, 16], sizes = [8, 16], strides = [1, 1]} : vector<8x32xf32> to vector<8x16xf32>
    %c16_98 = arith.constant 16 : index
    %c0_99 = arith.constant 0 : index
    %194 = vector.load %arg17[%c16_98, %c0_99] : memref<64x16xf32, #tpu.memory_space<vmem>>, vector<8x16xf32>
    tpu.vector_store %arg17[%c16_98, %c0_99], %193 {strides = array<i32>} : memref<64x16xf32, #tpu.memory_space<vmem>>, vector<8x16xf32>,
    %c48_100 = arith.constant 48 : index
    %c0_101 = arith.constant 0 : index
    %195 = vector.load %arg15[%c48_100, %c0_101] : memref<64x128xf32, #tpu.memory_space<vmem>>, vector<8x128xf32>
    %cst_102 = arith.constant dense<0.000000e+00> : vector<8x128xf32>
    %196 = tpu.matmul %190, %28, %cst_102 {dimension_numbers = #tpu.dot_dimension_numbers<[1], [0], [0], [1], [0, 0, 1, 1], [], []>} : vector<8x32xf32>, vector<32x128xf32>, vector<8x128xf32> -> vector<8x128xf32>
    %197 = arith.addf %195, %196 : vector<8x128xf32>
    %198 = arith.negf %197 : vector<8x128xf32>
    %199 = math.exp %198 : vector<8x128xf32>
    %cst_103 = arith.constant 1.000000e+00 : f32
    %200 = vector.broadcast %cst_103 : f32 to vector<8x128xf32>
    %201 = arith.addf %200, %199 : vector<8x128xf32>
    %202 = arith.divf %200, %201 : vector<8x128xf32>
    %203 = math.tanh %197 : vector<8x128xf32>
    %204 = vector.extract_strided_slice %202 {offsets = [0, 0], sizes = [8, 32], strides = [1, 1]} : vector<8x128xf32> to vector<8x32xf32>
    %205 = vector.extract_strided_slice %202 {offsets = [0, 32], sizes = [8, 32], strides = [1, 1]} : vector<8x128xf32> to vector<8x32xf32>
    %206 = vector.extract_strided_slice %202 {offsets = [0, 96], sizes = [8, 32], strides = [1, 1]} : vector<8x128xf32> to vector<8x32xf32>
    %207 = vector.extract_strided_slice %203 {offsets = [0, 64], sizes = [8, 32], strides = [1, 1]} : vector<8x128xf32> to vector<8x32xf32>
    %208 = arith.mulf %205, %188 : vector<8x32xf32>
    %209 = arith.mulf %204, %207 : vector<8x32xf32>
    %210 = arith.addf %208, %209 : vector<8x32xf32>
    %211 = math.tanh %210 : vector<8x32xf32>
    %212 = arith.mulf %206, %211 : vector<8x32xf32>
    %213 = vector.extract_strided_slice %212 {offsets = [0, 0], sizes = [8, 16], strides = [1, 1]} : vector<8x32xf32> to vector<8x16xf32>
    %c48_104 = arith.constant 48 : index
    %c0_105 = arith.constant 0 : index
    %214 = vector.load %arg16[%c48_104, %c0_105] : memref<64x16xf32, #tpu.memory_space<vmem>>, vector<8x16xf32>
    tpu.vector_store %arg16[%c48_104, %c0_105], %213 {strides = array<i32>} : memref<64x16xf32, #tpu.memory_space<vmem>>, vector<8x16xf32>,
    %215 = vector.extract_strided_slice %212 {offsets = [0, 16], sizes = [8, 16], strides = [1, 1]} : vector<8x32xf32> to vector<8x16xf32>
    %c8_106 = arith.constant 8 : index
    %c0_107 = arith.constant 0 : index
    %216 = vector.load %arg17[%c8_106, %c0_107] : memref<64x16xf32, #tpu.memory_space<vmem>>, vector<8x16xf32>
    tpu.vector_store %arg17[%c8_106, %c0_107], %215 {strides = array<i32>} : memref<64x16xf32, #tpu.memory_space<vmem>>, vector<8x16xf32>,
    %c56_108 = arith.constant 56 : index
    %c0_109 = arith.constant 0 : index
    %217 = vector.load %arg15[%c56_108, %c0_109] : memref<64x128xf32, #tpu.memory_space<vmem>>, vector<8x128xf32>
    %cst_110 = arith.constant dense<0.000000e+00> : vector<8x128xf32>
    %218 = tpu.matmul %212, %28, %cst_110 {dimension_numbers = #tpu.dot_dimension_numbers<[1], [0], [0], [1], [0, 0, 1, 1], [], []>} : vector<8x32xf32>, vector<32x128xf32>, vector<8x128xf32> -> vector<8x128xf32>
    %219 = arith.addf %217, %218 : vector<8x128xf32>
    %220 = arith.negf %219 : vector<8x128xf32>
    %221 = math.exp %220 : vector<8x128xf32>
    %cst_111 = arith.constant 1.000000e+00 : f32
    %222 = vector.broadcast %cst_111 : f32 to vector<8x128xf32>
    %223 = arith.addf %222, %221 : vector<8x128xf32>
    %224 = arith.divf %222, %223 : vector<8x128xf32>
    %225 = math.tanh %219 : vector<8x128xf32>
    %226 = vector.extract_strided_slice %224 {offsets = [0, 0], sizes = [8, 32], strides = [1, 1]} : vector<8x128xf32> to vector<8x32xf32>
    %227 = vector.extract_strided_slice %224 {offsets = [0, 32], sizes = [8, 32], strides = [1, 1]} : vector<8x128xf32> to vector<8x32xf32>
    %228 = vector.extract_strided_slice %224 {offsets = [0, 96], sizes = [8, 32], strides = [1, 1]} : vector<8x128xf32> to vector<8x32xf32>
    %229 = vector.extract_strided_slice %225 {offsets = [0, 64], sizes = [8, 32], strides = [1, 1]} : vector<8x128xf32> to vector<8x32xf32>
    %230 = arith.mulf %227, %210 : vector<8x32xf32>
    %231 = arith.mulf %226, %229 : vector<8x32xf32>
    %232 = arith.addf %230, %231 : vector<8x32xf32>
    %233 = math.tanh %232 : vector<8x32xf32>
    %234 = arith.mulf %228, %233 : vector<8x32xf32>
    %235 = vector.extract_strided_slice %234 {offsets = [0, 0], sizes = [8, 16], strides = [1, 1]} : vector<8x32xf32> to vector<8x16xf32>
    %c56_112 = arith.constant 56 : index
    %c0_113 = arith.constant 0 : index
    %236 = vector.load %arg16[%c56_112, %c0_113] : memref<64x16xf32, #tpu.memory_space<vmem>>, vector<8x16xf32>
    tpu.vector_store %arg16[%c56_112, %c0_113], %235 {strides = array<i32>} : memref<64x16xf32, #tpu.memory_space<vmem>>, vector<8x16xf32>,
    %237 = vector.extract_strided_slice %234 {offsets = [0, 16], sizes = [8, 16], strides = [1, 1]} : vector<8x32xf32> to vector<8x16xf32>
    %c0_114 = arith.constant 0 : index
    %c0_115 = arith.constant 0 : index
    %238 = vector.load %arg17[%c0_114, %c0_115] : memref<64x16xf32, #tpu.memory_space<vmem>>, vector<8x16xf32>
    tpu.vector_store %arg17[%c0_114, %c0_115], %237 {strides = array<i32>} : memref<64x16xf32, #tpu.memory_space<vmem>>, vector<8x16xf32>,
    %c0_116 = arith.constant 0 : index
    %c0_117 = arith.constant 0 : index
    %239 = vector.load %arg16[%c0_116, %c0_117] : memref<64x16xf32, #tpu.memory_space<vmem>>, vector<64x16xf32>
    %c0_118 = arith.constant 0 : index
    %c0_119 = arith.constant 0 : index
    %240 = vector.load %arg4[%c0_118, %c0_119] : memref<16x128xf32, #tpu.memory_space<vmem>>, vector<16x128xf32>
    %cst_120 = arith.constant dense<0.000000e+00> : vector<64x128xf32>
    %241 = tpu.matmul %239, %240, %cst_120 {dimension_numbers = #tpu.dot_dimension_numbers<[1], [0], [0], [1], [0, 0, 1, 1], [], []>} : vector<64x16xf32>, vector<16x128xf32>, vector<64x128xf32> -> vector<64x128xf32>
    %c0_121 = arith.constant 0 : index
    %c0_122 = arith.constant 0 : index
    %242 = vector.load %arg17[%c0_121, %c0_122] : memref<64x16xf32, #tpu.memory_space<vmem>>, vector<64x16xf32>
    %c0_123 = arith.constant 0 : index
    %c0_124 = arith.constant 0 : index
    %243 = vector.load %arg5[%c0_123, %c0_124] : memref<16x128xf32, #tpu.memory_space<vmem>>, vector<16x128xf32>
    %cst_125 = arith.constant dense<0.000000e+00> : vector<64x128xf32>
    %244 = tpu.matmul %242, %243, %cst_125 {dimension_numbers = #tpu.dot_dimension_numbers<[1], [0], [0], [1], [0, 0, 1, 1], [], []>} : vector<64x16xf32>, vector<16x128xf32>, vector<64x128xf32> -> vector<64x128xf32>
    %245 = arith.addf %241, %244 : vector<64x128xf32>
    %c0_126 = arith.constant 0 : index
    %c0_127 = arith.constant 0 : index
    %246 = vector.load %arg7[%c0_126, %c0_127] : memref<1x128xf32, #tpu.memory_space<vmem>>, vector<1x128xf32>
    %247 = vector.broadcast %246 : vector<1x128xf32> to vector<64x128xf32>
    %248 = arith.addf %245, %247 : vector<64x128xf32>
    %c0_128 = arith.constant 0 : index
    %c0_129 = arith.constant 0 : index
    %249 = vector.load %arg14[%c0_128, %c0_129] : memref<64x128xf32, #tpu.memory_space<vmem>>, vector<64x128xf32>
    tpu.vector_store %arg14[%c0_128, %c0_129], %248 {strides = array<i32>} : memref<64x128xf32, #tpu.memory_space<vmem>>, vector<64x128xf32>,
    %c0_130 = arith.constant 0 : index
    %c0_131 = arith.constant 0 : index
    %250 = vector.load %arg6[%c0_130, %c0_131] : memref<32x128xf32, #tpu.memory_space<vmem>>, vector<32x128xf32>
    %c0_132 = arith.constant 0 : index
    %c0_133 = arith.constant 0 : index
    %251 = vector.load %arg14[%c0_132, %c0_133] : memref<64x128xf32, #tpu.memory_space<vmem>>, vector<8x128xf32>
    %c56_134 = arith.constant 56 : index
    %c0_135 = arith.constant 0 : index
    %252 = vector.load %arg14[%c56_134, %c0_135] : memref<64x128xf32, #tpu.memory_space<vmem>>, vector<8x128xf32>
    %253 = arith.select %20, %251, %252 : vector<8x128xi1>, vector<8x128xf32>
    %c0_136 = arith.constant 0 : index
    %c0_137 = arith.constant 0 : index
    %254 = vector.load %arg15[%c0_136, %c0_137] : memref<64x128xf32, #tpu.memory_space<vmem>>, vector<8x128xf32>
    tpu.vector_store %arg15[%c0_136, %c0_137], %253 {strides = array<i32>} : memref<64x128xf32, #tpu.memory_space<vmem>>, vector<8x128xf32>,
    %c8_138 = arith.constant 8 : index
    %c0_139 = arith.constant 0 : index
    %255 = vector.load %arg14[%c8_138, %c0_139] : memref<64x128xf32, #tpu.memory_space<vmem>>, vector<8x128xf32>
    %c48_140 = arith.constant 48 : index
    %c0_141 = arith.constant 0 : index
    %256 = vector.load %arg14[%c48_140, %c0_141] : memref<64x128xf32, #tpu.memory_space<vmem>>, vector<8x128xf32>
    %257 = arith.select %20, %255, %256 : vector<8x128xi1>, vector<8x128xf32>
    %c8_142 = arith.constant 8 : index
    %c0_143 = arith.constant 0 : index
    %258 = vector.load %arg15[%c8_142, %c0_143] : memref<64x128xf32, #tpu.memory_space<vmem>>, vector<8x128xf32>
    tpu.vector_store %arg15[%c8_142, %c0_143], %257 {strides = array<i32>} : memref<64x128xf32, #tpu.memory_space<vmem>>, vector<8x128xf32>,
    %c16_144 = arith.constant 16 : index
    %c0_145 = arith.constant 0 : index
    %259 = vector.load %arg14[%c16_144, %c0_145] : memref<64x128xf32, #tpu.memory_space<vmem>>, vector<8x128xf32>
    %c40_146 = arith.constant 40 : index
    %c0_147 = arith.constant 0 : index
    %260 = vector.load %arg14[%c40_146, %c0_147] : memref<64x128xf32, #tpu.memory_space<vmem>>, vector<8x128xf32>
    %261 = arith.select %20, %259, %260 : vector<8x128xi1>, vector<8x128xf32>
    %c16_148 = arith.constant 16 : index
    %c0_149 = arith.constant 0 : index
    %262 = vector.load %arg15[%c16_148, %c0_149] : memref<64x128xf32, #tpu.memory_space<vmem>>, vector<8x128xf32>
    tpu.vector_store %arg15[%c16_148, %c0_149], %261 {strides = array<i32>} : memref<64x128xf32, #tpu.memory_space<vmem>>, vector<8x128xf32>,
    %c24_150 = arith.constant 24 : index
    %c0_151 = arith.constant 0 : index
    %263 = vector.load %arg14[%c24_150, %c0_151] : memref<64x128xf32, #tpu.memory_space<vmem>>, vector<8x128xf32>
    %c32_152 = arith.constant 32 : index
    %c0_153 = arith.constant 0 : index
    %264 = vector.load %arg14[%c32_152, %c0_153] : memref<64x128xf32, #tpu.memory_space<vmem>>, vector<8x128xf32>
    %265 = arith.select %20, %263, %264 : vector<8x128xi1>, vector<8x128xf32>
    %c24_154 = arith.constant 24 : index
    %c0_155 = arith.constant 0 : index
    %266 = vector.load %arg15[%c24_154, %c0_155] : memref<64x128xf32, #tpu.memory_space<vmem>>, vector<8x128xf32>
    tpu.vector_store %arg15[%c24_154, %c0_155], %265 {strides = array<i32>} : memref<64x128xf32, #tpu.memory_space<vmem>>, vector<8x128xf32>,
    %c32_156 = arith.constant 32 : index
    %c0_157 = arith.constant 0 : index
    %267 = vector.load %arg14[%c32_156, %c0_157] : memref<64x128xf32, #tpu.memory_space<vmem>>, vector<8x128xf32>
    %c24_158 = arith.constant 24 : index
    %c0_159 = arith.constant 0 : index
    %268 = vector.load %arg14[%c24_158, %c0_159] : memref<64x128xf32, #tpu.memory_space<vmem>>, vector<8x128xf32>
    %269 = arith.select %20, %267, %268 : vector<8x128xi1>, vector<8x128xf32>
    %c32_160 = arith.constant 32 : index
    %c0_161 = arith.constant 0 : index
    %270 = vector.load %arg15[%c32_160, %c0_161] : memref<64x128xf32, #tpu.memory_space<vmem>>, vector<8x128xf32>
    tpu.vector_store %arg15[%c32_160, %c0_161], %269 {strides = array<i32>} : memref<64x128xf32, #tpu.memory_space<vmem>>, vector<8x128xf32>,
    %c40_162 = arith.constant 40 : index
    %c0_163 = arith.constant 0 : index
    %271 = vector.load %arg14[%c40_162, %c0_163] : memref<64x128xf32, #tpu.memory_space<vmem>>, vector<8x128xf32>
    %c16_164 = arith.constant 16 : index
    %c0_165 = arith.constant 0 : index
    %272 = vector.load %arg14[%c16_164, %c0_165] : memref<64x128xf32, #tpu.memory_space<vmem>>, vector<8x128xf32>
    %273 = arith.select %20, %271, %272 : vector<8x128xi1>, vector<8x128xf32>
    %c40_166 = arith.constant 40 : index
    %c0_167 = arith.constant 0 : index
    %274 = vector.load %arg15[%c40_166, %c0_167] : memref<64x128xf32, #tpu.memory_space<vmem>>, vector<8x128xf32>
    tpu.vector_store %arg15[%c40_166, %c0_167], %273 {strides = array<i32>} : memref<64x128xf32, #tpu.memory_space<vmem>>, vector<8x128xf32>,
    %c48_168 = arith.constant 48 : index
    %c0_169 = arith.constant 0 : index
    %275 = vector.load %arg14[%c48_168, %c0_169] : memref<64x128xf32, #tpu.memory_space<vmem>>, vector<8x128xf32>
    %c8_170 = arith.constant 8 : index
    %c0_171 = arith.constant 0 : index
    %276 = vector.load %arg14[%c8_170, %c0_171] : memref<64x128xf32, #tpu.memory_space<vmem>>, vector<8x128xf32>
    %277 = arith.select %20, %275, %276 : vector<8x128xi1>, vector<8x128xf32>
    %c48_172 = arith.constant 48 : index
    %c0_173 = arith.constant 0 : index
    %278 = vector.load %arg15[%c48_172, %c0_173] : memref<64x128xf32, #tpu.memory_space<vmem>>, vector<8x128xf32>
    tpu.vector_store %arg15[%c48_172, %c0_173], %277 {strides = array<i32>} : memref<64x128xf32, #tpu.memory_space<vmem>>, vector<8x128xf32>,
    %c56_174 = arith.constant 56 : index
    %c0_175 = arith.constant 0 : index
    %279 = vector.load %arg14[%c56_174, %c0_175] : memref<64x128xf32, #tpu.memory_space<vmem>>, vector<8x128xf32>
    %c0_176 = arith.constant 0 : index
    %c0_177 = arith.constant 0 : index
    %280 = vector.load %arg14[%c0_176, %c0_177] : memref<64x128xf32, #tpu.memory_space<vmem>>, vector<8x128xf32>
    %281 = arith.select %20, %279, %280 : vector<8x128xi1>, vector<8x128xf32>
    %c56_178 = arith.constant 56 : index
    %c0_179 = arith.constant 0 : index
    %282 = vector.load %arg15[%c56_178, %c0_179] : memref<64x128xf32, #tpu.memory_space<vmem>>, vector<8x128xf32>
    tpu.vector_store %arg15[%c56_178, %c0_179], %281 {strides = array<i32>} : memref<64x128xf32, #tpu.memory_space<vmem>>, vector<8x128xf32>,
    %cst_180 = arith.constant 0.000000e+00 : f32
    %283 = vector.broadcast %cst_180 : f32 to vector<8x32xf32>
    %cst_181 = arith.constant 0.000000e+00 : f32
    %284 = vector.broadcast %cst_181 : f32 to vector<8x32xf32>
    %c0_182 = arith.constant 0 : index
    %c0_183 = arith.constant 0 : index
    %285 = vector.load %arg15[%c0_182, %c0_183] : memref<64x128xf32, #tpu.memory_space<vmem>>, vector<8x128xf32>
    %cst_184 = arith.constant dense<0.000000e+00> : vector<8x128xf32>
    %286 = tpu.matmul %283, %250, %cst_184 {dimension_numbers = #tpu.dot_dimension_numbers<[1], [0], [0], [1], [0, 0, 1, 1], [], []>} : vector<8x32xf32>, vector<32x128xf32>, vector<8x128xf32> -> vector<8x128xf32>
    %287 = arith.addf %285, %286 : vector<8x128xf32>
    %288 = arith.negf %287 : vector<8x128xf32>
    %289 = math.exp %288 : vector<8x128xf32>
    %cst_185 = arith.constant 1.000000e+00 : f32
    %290 = vector.broadcast %cst_185 : f32 to vector<8x128xf32>
    %291 = arith.addf %290, %289 : vector<8x128xf32>
    %292 = arith.divf %290, %291 : vector<8x128xf32>
    %293 = math.tanh %287 : vector<8x128xf32>
    %294 = vector.extract_strided_slice %292 {offsets = [0, 0], sizes = [8, 32], strides = [1, 1]} : vector<8x128xf32> to vector<8x32xf32>
    %295 = vector.extract_strided_slice %292 {offsets = [0, 32], sizes = [8, 32], strides = [1, 1]} : vector<8x128xf32> to vector<8x32xf32>
    %296 = vector.extract_strided_slice %292 {offsets = [0, 96], sizes = [8, 32], strides = [1, 1]} : vector<8x128xf32> to vector<8x32xf32>
    %297 = vector.extract_strided_slice %293 {offsets = [0, 64], sizes = [8, 32], strides = [1, 1]} : vector<8x128xf32> to vector<8x32xf32>
    %298 = arith.mulf %295, %284 : vector<8x32xf32>
    %299 = arith.mulf %294, %297 : vector<8x32xf32>
    %300 = arith.addf %298, %299 : vector<8x32xf32>
    %301 = math.tanh %300 : vector<8x32xf32>
    %302 = arith.mulf %296, %301 : vector<8x32xf32>
    %303 = vector.extract_strided_slice %302 {offsets = [0, 0], sizes = [8, 16], strides = [1, 1]} : vector<8x32xf32> to vector<8x16xf32>
    %c0_186 = arith.constant 0 : index
    %c0_187 = arith.constant 0 : index
    %304 = vector.load %arg16[%c0_186, %c0_187] : memref<64x16xf32, #tpu.memory_space<vmem>>, vector<8x16xf32>
    tpu.vector_store %arg16[%c0_186, %c0_187], %303 {strides = array<i32>} : memref<64x16xf32, #tpu.memory_space<vmem>>, vector<8x16xf32>,
    %305 = vector.extract_strided_slice %302 {offsets = [0, 16], sizes = [8, 16], strides = [1, 1]} : vector<8x32xf32> to vector<8x16xf32>
    %c56_188 = arith.constant 56 : index
    %c0_189 = arith.constant 0 : index
    %306 = vector.load %arg17[%c56_188, %c0_189] : memref<64x16xf32, #tpu.memory_space<vmem>>, vector<8x16xf32>
    tpu.vector_store %arg17[%c56_188, %c0_189], %305 {strides = array<i32>} : memref<64x16xf32, #tpu.memory_space<vmem>>, vector<8x16xf32>,
    %c8_190 = arith.constant 8 : index
    %c0_191 = arith.constant 0 : index
    %307 = vector.load %arg15[%c8_190, %c0_191] : memref<64x128xf32, #tpu.memory_space<vmem>>, vector<8x128xf32>
    %cst_192 = arith.constant dense<0.000000e+00> : vector<8x128xf32>
    %308 = tpu.matmul %302, %250, %cst_192 {dimension_numbers = #tpu.dot_dimension_numbers<[1], [0], [0], [1], [0, 0, 1, 1], [], []>} : vector<8x32xf32>, vector<32x128xf32>, vector<8x128xf32> -> vector<8x128xf32>
    %309 = arith.addf %307, %308 : vector<8x128xf32>
    %310 = arith.negf %309 : vector<8x128xf32>
    %311 = math.exp %310 : vector<8x128xf32>
    %cst_193 = arith.constant 1.000000e+00 : f32
    %312 = vector.broadcast %cst_193 : f32 to vector<8x128xf32>
    %313 = arith.addf %312, %311 : vector<8x128xf32>
    %314 = arith.divf %312, %313 : vector<8x128xf32>
    %315 = math.tanh %309 : vector<8x128xf32>
    %316 = vector.extract_strided_slice %314 {offsets = [0, 0], sizes = [8, 32], strides = [1, 1]} : vector<8x128xf32> to vector<8x32xf32>
    %317 = vector.extract_strided_slice %314 {offsets = [0, 32], sizes = [8, 32], strides = [1, 1]} : vector<8x128xf32> to vector<8x32xf32>
    %318 = vector.extract_strided_slice %314 {offsets = [0, 96], sizes = [8, 32], strides = [1, 1]} : vector<8x128xf32> to vector<8x32xf32>
    %319 = vector.extract_strided_slice %315 {offsets = [0, 64], sizes = [8, 32], strides = [1, 1]} : vector<8x128xf32> to vector<8x32xf32>
    %320 = arith.mulf %317, %300 : vector<8x32xf32>
    %321 = arith.mulf %316, %319 : vector<8x32xf32>
    %322 = arith.addf %320, %321 : vector<8x32xf32>
    %323 = math.tanh %322 : vector<8x32xf32>
    %324 = arith.mulf %318, %323 : vector<8x32xf32>
    %325 = vector.extract_strided_slice %324 {offsets = [0, 0], sizes = [8, 16], strides = [1, 1]} : vector<8x32xf32> to vector<8x16xf32>
    %c8_194 = arith.constant 8 : index
    %c0_195 = arith.constant 0 : index
    %326 = vector.load %arg16[%c8_194, %c0_195] : memref<64x16xf32, #tpu.memory_space<vmem>>, vector<8x16xf32>
    tpu.vector_store %arg16[%c8_194, %c0_195], %325 {strides = array<i32>} : memref<64x16xf32, #tpu.memory_space<vmem>>, vector<8x16xf32>,
    %327 = vector.extract_strided_slice %324 {offsets = [0, 16], sizes = [8, 16], strides = [1, 1]} : vector<8x32xf32> to vector<8x16xf32>
    %c48_196 = arith.constant 48 : index
    %c0_197 = arith.constant 0 : index
    %328 = vector.load %arg17[%c48_196, %c0_197] : memref<64x16xf32, #tpu.memory_space<vmem>>, vector<8x16xf32>
    tpu.vector_store %arg17[%c48_196, %c0_197], %327 {strides = array<i32>} : memref<64x16xf32, #tpu.memory_space<vmem>>, vector<8x16xf32>,
    %c16_198 = arith.constant 16 : index
    %c0_199 = arith.constant 0 : index
    %329 = vector.load %arg15[%c16_198, %c0_199] : memref<64x128xf32, #tpu.memory_space<vmem>>, vector<8x128xf32>
    %cst_200 = arith.constant dense<0.000000e+00> : vector<8x128xf32>
    %330 = tpu.matmul %324, %250, %cst_200 {dimension_numbers = #tpu.dot_dimension_numbers<[1], [0], [0], [1], [0, 0, 1, 1], [], []>} : vector<8x32xf32>, vector<32x128xf32>, vector<8x128xf32> -> vector<8x128xf32>
    %331 = arith.addf %329, %330 : vector<8x128xf32>
    %332 = arith.negf %331 : vector<8x128xf32>
    %333 = math.exp %332 : vector<8x128xf32>
    %cst_201 = arith.constant 1.000000e+00 : f32
    %334 = vector.broadcast %cst_201 : f32 to vector<8x128xf32>
    %335 = arith.addf %334, %333 : vector<8x128xf32>
    %336 = arith.divf %334, %335 : vector<8x128xf32>
    %337 = math.tanh %331 : vector<8x128xf32>
    %338 = vector.extract_strided_slice %336 {offsets = [0, 0], sizes = [8, 32], strides = [1, 1]} : vector<8x128xf32> to vector<8x32xf32>
    %339 = vector.extract_strided_slice %336 {offsets = [0, 32], sizes = [8, 32], strides = [1, 1]} : vector<8x128xf32> to vector<8x32xf32>
    %340 = vector.extract_strided_slice %336 {offsets = [0, 96], sizes = [8, 32], strides = [1, 1]} : vector<8x128xf32> to vector<8x32xf32>
    %341 = vector.extract_strided_slice %337 {offsets = [0, 64], sizes = [8, 32], strides = [1, 1]} : vector<8x128xf32> to vector<8x32xf32>
    %342 = arith.mulf %339, %322 : vector<8x32xf32>
    %343 = arith.mulf %338, %341 : vector<8x32xf32>
    %344 = arith.addf %342, %343 : vector<8x32xf32>
    %345 = math.tanh %344 : vector<8x32xf32>
    %346 = arith.mulf %340, %345 : vector<8x32xf32>
    %347 = vector.extract_strided_slice %346 {offsets = [0, 0], sizes = [8, 16], strides = [1, 1]} : vector<8x32xf32> to vector<8x16xf32>
    %c16_202 = arith.constant 16 : index
    %c0_203 = arith.constant 0 : index
    %348 = vector.load %arg16[%c16_202, %c0_203] : memref<64x16xf32, #tpu.memory_space<vmem>>, vector<8x16xf32>
    tpu.vector_store %arg16[%c16_202, %c0_203], %347 {strides = array<i32>} : memref<64x16xf32, #tpu.memory_space<vmem>>, vector<8x16xf32>,
    %349 = vector.extract_strided_slice %346 {offsets = [0, 16], sizes = [8, 16], strides = [1, 1]} : vector<8x32xf32> to vector<8x16xf32>
    %c40_204 = arith.constant 40 : index
    %c0_205 = arith.constant 0 : index
    %350 = vector.load %arg17[%c40_204, %c0_205] : memref<64x16xf32, #tpu.memory_space<vmem>>, vector<8x16xf32>
    tpu.vector_store %arg17[%c40_204, %c0_205], %349 {strides = array<i32>} : memref<64x16xf32, #tpu.memory_space<vmem>>, vector<8x16xf32>,
    %c24_206 = arith.constant 24 : index
    %c0_207 = arith.constant 0 : index
    %351 = vector.load %arg15[%c24_206, %c0_207] : memref<64x128xf32, #tpu.memory_space<vmem>>, vector<8x128xf32>
    %cst_208 = arith.constant dense<0.000000e+00> : vector<8x128xf32>
    %352 = tpu.matmul %346, %250, %cst_208 {dimension_numbers = #tpu.dot_dimension_numbers<[1], [0], [0], [1], [0, 0, 1, 1], [], []>} : vector<8x32xf32>, vector<32x128xf32>, vector<8x128xf32> -> vector<8x128xf32>
    %353 = arith.addf %351, %352 : vector<8x128xf32>
    %354 = arith.negf %353 : vector<8x128xf32>
    %355 = math.exp %354 : vector<8x128xf32>
    %cst_209 = arith.constant 1.000000e+00 : f32
    %356 = vector.broadcast %cst_209 : f32 to vector<8x128xf32>
    %357 = arith.addf %356, %355 : vector<8x128xf32>
    %358 = arith.divf %356, %357 : vector<8x128xf32>
    %359 = math.tanh %353 : vector<8x128xf32>
    %360 = vector.extract_strided_slice %358 {offsets = [0, 0], sizes = [8, 32], strides = [1, 1]} : vector<8x128xf32> to vector<8x32xf32>
    %361 = vector.extract_strided_slice %358 {offsets = [0, 32], sizes = [8, 32], strides = [1, 1]} : vector<8x128xf32> to vector<8x32xf32>
    %362 = vector.extract_strided_slice %358 {offsets = [0, 96], sizes = [8, 32], strides = [1, 1]} : vector<8x128xf32> to vector<8x32xf32>
    %363 = vector.extract_strided_slice %359 {offsets = [0, 64], sizes = [8, 32], strides = [1, 1]} : vector<8x128xf32> to vector<8x32xf32>
    %364 = arith.mulf %361, %344 : vector<8x32xf32>
    %365 = arith.mulf %360, %363 : vector<8x32xf32>
    %366 = arith.addf %364, %365 : vector<8x32xf32>
    %367 = math.tanh %366 : vector<8x32xf32>
    %368 = arith.mulf %362, %367 : vector<8x32xf32>
    %369 = vector.extract_strided_slice %368 {offsets = [0, 0], sizes = [8, 16], strides = [1, 1]} : vector<8x32xf32> to vector<8x16xf32>
    %c24_210 = arith.constant 24 : index
    %c0_211 = arith.constant 0 : index
    %370 = vector.load %arg16[%c24_210, %c0_211] : memref<64x16xf32, #tpu.memory_space<vmem>>, vector<8x16xf32>
    tpu.vector_store %arg16[%c24_210, %c0_211], %369 {strides = array<i32>} : memref<64x16xf32, #tpu.memory_space<vmem>>, vector<8x16xf32>,
    %371 = vector.extract_strided_slice %368 {offsets = [0, 16], sizes = [8, 16], strides = [1, 1]} : vector<8x32xf32> to vector<8x16xf32>
    %c32_212 = arith.constant 32 : index
    %c0_213 = arith.constant 0 : index
    %372 = vector.load %arg17[%c32_212, %c0_213] : memref<64x16xf32, #tpu.memory_space<vmem>>, vector<8x16xf32>
    tpu.vector_store %arg17[%c32_212, %c0_213], %371 {strides = array<i32>} : memref<64x16xf32, #tpu.memory_space<vmem>>, vector<8x16xf32>,
    %c32_214 = arith.constant 32 : index
    %c0_215 = arith.constant 0 : index
    %373 = vector.load %arg15[%c32_214, %c0_215] : memref<64x128xf32, #tpu.memory_space<vmem>>, vector<8x128xf32>
    %cst_216 = arith.constant dense<0.000000e+00> : vector<8x128xf32>
    %374 = tpu.matmul %368, %250, %cst_216 {dimension_numbers = #tpu.dot_dimension_numbers<[1], [0], [0], [1], [0, 0, 1, 1], [], []>} : vector<8x32xf32>, vector<32x128xf32>, vector<8x128xf32> -> vector<8x128xf32>
    %375 = arith.addf %373, %374 : vector<8x128xf32>
    %376 = arith.negf %375 : vector<8x128xf32>
    %377 = math.exp %376 : vector<8x128xf32>
    %cst_217 = arith.constant 1.000000e+00 : f32
    %378 = vector.broadcast %cst_217 : f32 to vector<8x128xf32>
    %379 = arith.addf %378, %377 : vector<8x128xf32>
    %380 = arith.divf %378, %379 : vector<8x128xf32>
    %381 = math.tanh %375 : vector<8x128xf32>
    %382 = vector.extract_strided_slice %380 {offsets = [0, 0], sizes = [8, 32], strides = [1, 1]} : vector<8x128xf32> to vector<8x32xf32>
    %383 = vector.extract_strided_slice %380 {offsets = [0, 32], sizes = [8, 32], strides = [1, 1]} : vector<8x128xf32> to vector<8x32xf32>
    %384 = vector.extract_strided_slice %380 {offsets = [0, 96], sizes = [8, 32], strides = [1, 1]} : vector<8x128xf32> to vector<8x32xf32>
    %385 = vector.extract_strided_slice %381 {offsets = [0, 64], sizes = [8, 32], strides = [1, 1]} : vector<8x128xf32> to vector<8x32xf32>
    %386 = arith.mulf %383, %366 : vector<8x32xf32>
    %387 = arith.mulf %382, %385 : vector<8x32xf32>
    %388 = arith.addf %386, %387 : vector<8x32xf32>
    %389 = math.tanh %388 : vector<8x32xf32>
    %390 = arith.mulf %384, %389 : vector<8x32xf32>
    %391 = vector.extract_strided_slice %390 {offsets = [0, 0], sizes = [8, 16], strides = [1, 1]} : vector<8x32xf32> to vector<8x16xf32>
    %c32_218 = arith.constant 32 : index
    %c0_219 = arith.constant 0 : index
    %392 = vector.load %arg16[%c32_218, %c0_219] : memref<64x16xf32, #tpu.memory_space<vmem>>, vector<8x16xf32>
    tpu.vector_store %arg16[%c32_218, %c0_219], %391 {strides = array<i32>} : memref<64x16xf32, #tpu.memory_space<vmem>>, vector<8x16xf32>,
    %393 = vector.extract_strided_slice %390 {offsets = [0, 16], sizes = [8, 16], strides = [1, 1]} : vector<8x32xf32> to vector<8x16xf32>
    %c24_220 = arith.constant 24 : index
    %c0_221 = arith.constant 0 : index
    %394 = vector.load %arg17[%c24_220, %c0_221] : memref<64x16xf32, #tpu.memory_space<vmem>>, vector<8x16xf32>
    tpu.vector_store %arg17[%c24_220, %c0_221], %393 {strides = array<i32>} : memref<64x16xf32, #tpu.memory_space<vmem>>, vector<8x16xf32>,
    %c40_222 = arith.constant 40 : index
    %c0_223 = arith.constant 0 : index
    %395 = vector.load %arg15[%c40_222, %c0_223] : memref<64x128xf32, #tpu.memory_space<vmem>>, vector<8x128xf32>
    %cst_224 = arith.constant dense<0.000000e+00> : vector<8x128xf32>
    %396 = tpu.matmul %390, %250, %cst_224 {dimension_numbers = #tpu.dot_dimension_numbers<[1], [0], [0], [1], [0, 0, 1, 1], [], []>} : vector<8x32xf32>, vector<32x128xf32>, vector<8x128xf32> -> vector<8x128xf32>
    %397 = arith.addf %395, %396 : vector<8x128xf32>
    %398 = arith.negf %397 : vector<8x128xf32>
    %399 = math.exp %398 : vector<8x128xf32>
    %cst_225 = arith.constant 1.000000e+00 : f32
    %400 = vector.broadcast %cst_225 : f32 to vector<8x128xf32>
    %401 = arith.addf %400, %399 : vector<8x128xf32>
    %402 = arith.divf %400, %401 : vector<8x128xf32>
    %403 = math.tanh %397 : vector<8x128xf32>
    %404 = vector.extract_strided_slice %402 {offsets = [0, 0], sizes = [8, 32], strides = [1, 1]} : vector<8x128xf32> to vector<8x32xf32>
    %405 = vector.extract_strided_slice %402 {offsets = [0, 32], sizes = [8, 32], strides = [1, 1]} : vector<8x128xf32> to vector<8x32xf32>
    %406 = vector.extract_strided_slice %402 {offsets = [0, 96], sizes = [8, 32], strides = [1, 1]} : vector<8x128xf32> to vector<8x32xf32>
    %407 = vector.extract_strided_slice %403 {offsets = [0, 64], sizes = [8, 32], strides = [1, 1]} : vector<8x128xf32> to vector<8x32xf32>
    %408 = arith.mulf %405, %388 : vector<8x32xf32>
    %409 = arith.mulf %404, %407 : vector<8x32xf32>
    %410 = arith.addf %408, %409 : vector<8x32xf32>
    %411 = math.tanh %410 : vector<8x32xf32>
    %412 = arith.mulf %406, %411 : vector<8x32xf32>
    %413 = vector.extract_strided_slice %412 {offsets = [0, 0], sizes = [8, 16], strides = [1, 1]} : vector<8x32xf32> to vector<8x16xf32>
    %c40_226 = arith.constant 40 : index
    %c0_227 = arith.constant 0 : index
    %414 = vector.load %arg16[%c40_226, %c0_227] : memref<64x16xf32, #tpu.memory_space<vmem>>, vector<8x16xf32>
    tpu.vector_store %arg16[%c40_226, %c0_227], %413 {strides = array<i32>} : memref<64x16xf32, #tpu.memory_space<vmem>>, vector<8x16xf32>,
    %415 = vector.extract_strided_slice %412 {offsets = [0, 16], sizes = [8, 16], strides = [1, 1]} : vector<8x32xf32> to vector<8x16xf32>
    %c16_228 = arith.constant 16 : index
    %c0_229 = arith.constant 0 : index
    %416 = vector.load %arg17[%c16_228, %c0_229] : memref<64x16xf32, #tpu.memory_space<vmem>>, vector<8x16xf32>
    tpu.vector_store %arg17[%c16_228, %c0_229], %415 {strides = array<i32>} : memref<64x16xf32, #tpu.memory_space<vmem>>, vector<8x16xf32>,
    %c48_230 = arith.constant 48 : index
    %c0_231 = arith.constant 0 : index
    %417 = vector.load %arg15[%c48_230, %c0_231] : memref<64x128xf32, #tpu.memory_space<vmem>>, vector<8x128xf32>
    %cst_232 = arith.constant dense<0.000000e+00> : vector<8x128xf32>
    %418 = tpu.matmul %412, %250, %cst_232 {dimension_numbers = #tpu.dot_dimension_numbers<[1], [0], [0], [1], [0, 0, 1, 1], [], []>} : vector<8x32xf32>, vector<32x128xf32>, vector<8x128xf32> -> vector<8x128xf32>
    %419 = arith.addf %417, %418 : vector<8x128xf32>
    %420 = arith.negf %419 : vector<8x128xf32>
    %421 = math.exp %420 : vector<8x128xf32>
    %cst_233 = arith.constant 1.000000e+00 : f32
    %422 = vector.broadcast %cst_233 : f32 to vector<8x128xf32>
    %423 = arith.addf %422, %421 : vector<8x128xf32>
    %424 = arith.divf %422, %423 : vector<8x128xf32>
    %425 = math.tanh %419 : vector<8x128xf32>
    %426 = vector.extract_strided_slice %424 {offsets = [0, 0], sizes = [8, 32], strides = [1, 1]} : vector<8x128xf32> to vector<8x32xf32>
    %427 = vector.extract_strided_slice %424 {offsets = [0, 32], sizes = [8, 32], strides = [1, 1]} : vector<8x128xf32> to vector<8x32xf32>
    %428 = vector.extract_strided_slice %424 {offsets = [0, 96], sizes = [8, 32], strides = [1, 1]} : vector<8x128xf32> to vector<8x32xf32>
    %429 = vector.extract_strided_slice %425 {offsets = [0, 64], sizes = [8, 32], strides = [1, 1]} : vector<8x128xf32> to vector<8x32xf32>
    %430 = arith.mulf %427, %410 : vector<8x32xf32>
    %431 = arith.mulf %426, %429 : vector<8x32xf32>
    %432 = arith.addf %430, %431 : vector<8x32xf32>
    %433 = math.tanh %432 : vector<8x32xf32>
    %434 = arith.mulf %428, %433 : vector<8x32xf32>
    %435 = vector.extract_strided_slice %434 {offsets = [0, 0], sizes = [8, 16], strides = [1, 1]} : vector<8x32xf32> to vector<8x16xf32>
    %c48_234 = arith.constant 48 : index
    %c0_235 = arith.constant 0 : index
    %436 = vector.load %arg16[%c48_234, %c0_235] : memref<64x16xf32, #tpu.memory_space<vmem>>, vector<8x16xf32>
    tpu.vector_store %arg16[%c48_234, %c0_235], %435 {strides = array<i32>} : memref<64x16xf32, #tpu.memory_space<vmem>>, vector<8x16xf32>,
    %437 = vector.extract_strided_slice %434 {offsets = [0, 16], sizes = [8, 16], strides = [1, 1]} : vector<8x32xf32> to vector<8x16xf32>
    %c8_236 = arith.constant 8 : index
    %c0_237 = arith.constant 0 : index
    %438 = vector.load %arg17[%c8_236, %c0_237] : memref<64x16xf32, #tpu.memory_space<vmem>>, vector<8x16xf32>
    tpu.vector_store %arg17[%c8_236, %c0_237], %437 {strides = array<i32>} : memref<64x16xf32, #tpu.memory_space<vmem>>, vector<8x16xf32>,
    %c56_238 = arith.constant 56 : index
    %c0_239 = arith.constant 0 : index
    %439 = vector.load %arg15[%c56_238, %c0_239] : memref<64x128xf32, #tpu.memory_space<vmem>>, vector<8x128xf32>
    %cst_240 = arith.constant dense<0.000000e+00> : vector<8x128xf32>
    %440 = tpu.matmul %434, %250, %cst_240 {dimension_numbers = #tpu.dot_dimension_numbers<[1], [0], [0], [1], [0, 0, 1, 1], [], []>} : vector<8x32xf32>, vector<32x128xf32>, vector<8x128xf32> -> vector<8x128xf32>
    %441 = arith.addf %439, %440 : vector<8x128xf32>
    %442 = arith.negf %441 : vector<8x128xf32>
    %443 = math.exp %442 : vector<8x128xf32>
    %cst_241 = arith.constant 1.000000e+00 : f32
    %444 = vector.broadcast %cst_241 : f32 to vector<8x128xf32>
    %445 = arith.addf %444, %443 : vector<8x128xf32>
    %446 = arith.divf %444, %445 : vector<8x128xf32>
    %447 = math.tanh %441 : vector<8x128xf32>
    %448 = vector.extract_strided_slice %446 {offsets = [0, 0], sizes = [8, 32], strides = [1, 1]} : vector<8x128xf32> to vector<8x32xf32>
    %449 = vector.extract_strided_slice %446 {offsets = [0, 32], sizes = [8, 32], strides = [1, 1]} : vector<8x128xf32> to vector<8x32xf32>
    %450 = vector.extract_strided_slice %446 {offsets = [0, 96], sizes = [8, 32], strides = [1, 1]} : vector<8x128xf32> to vector<8x32xf32>
    %451 = vector.extract_strided_slice %447 {offsets = [0, 64], sizes = [8, 32], strides = [1, 1]} : vector<8x128xf32> to vector<8x32xf32>
    %452 = arith.mulf %449, %432 : vector<8x32xf32>
    %453 = arith.mulf %448, %451 : vector<8x32xf32>
    %454 = arith.addf %452, %453 : vector<8x32xf32>
    %455 = math.tanh %454 : vector<8x32xf32>
    %456 = arith.mulf %450, %455 : vector<8x32xf32>
    %457 = vector.extract_strided_slice %456 {offsets = [0, 0], sizes = [8, 16], strides = [1, 1]} : vector<8x32xf32> to vector<8x16xf32>
    %c56_242 = arith.constant 56 : index
    %c0_243 = arith.constant 0 : index
    %458 = vector.load %arg16[%c56_242, %c0_243] : memref<64x16xf32, #tpu.memory_space<vmem>>, vector<8x16xf32>
    tpu.vector_store %arg16[%c56_242, %c0_243], %457 {strides = array<i32>} : memref<64x16xf32, #tpu.memory_space<vmem>>, vector<8x16xf32>,
    %459 = vector.extract_strided_slice %456 {offsets = [0, 16], sizes = [8, 16], strides = [1, 1]} : vector<8x32xf32> to vector<8x16xf32>
    %c0_244 = arith.constant 0 : index
    %c0_245 = arith.constant 0 : index
    %460 = vector.load %arg17[%c0_244, %c0_245] : memref<64x16xf32, #tpu.memory_space<vmem>>, vector<8x16xf32>
    tpu.vector_store %arg17[%c0_244, %c0_245], %459 {strides = array<i32>} : memref<64x16xf32, #tpu.memory_space<vmem>>, vector<8x16xf32>,
    %c0_246 = arith.constant 0 : index
    %c0_247 = arith.constant 0 : index
    %461 = vector.load %arg16[%c0_246, %c0_247] : memref<64x16xf32, #tpu.memory_space<vmem>>, vector<64x16xf32>
    %c0_248 = arith.constant 0 : index
    %c0_249 = arith.constant 0 : index
    %462 = vector.load %arg8[%c0_248, %c0_249] : memref<16x64xf32, #tpu.memory_space<vmem>>, vector<16x64xf32>
    %cst_250 = arith.constant dense<0.000000e+00> : vector<64x64xf32>
    %463 = tpu.matmul %461, %462, %cst_250 {dimension_numbers = #tpu.dot_dimension_numbers<[1], [0], [0], [1], [0, 0, 1, 1], [], []>} : vector<64x16xf32>, vector<16x64xf32>, vector<64x64xf32> -> vector<64x64xf32>
    %c0_251 = arith.constant 0 : index
    %c0_252 = arith.constant 0 : index
    %464 = vector.load %arg17[%c0_251, %c0_252] : memref<64x16xf32, #tpu.memory_space<vmem>>, vector<64x16xf32>
    %c0_253 = arith.constant 0 : index
    %c0_254 = arith.constant 0 : index
    %465 = vector.load %arg9[%c0_253, %c0_254] : memref<16x64xf32, #tpu.memory_space<vmem>>, vector<16x64xf32>
    %cst_255 = arith.constant dense<0.000000e+00> : vector<64x64xf32>
    %466 = tpu.matmul %464, %465, %cst_255 {dimension_numbers = #tpu.dot_dimension_numbers<[1], [0], [0], [1], [0, 0, 1, 1], [], []>} : vector<64x16xf32>, vector<16x64xf32>, vector<64x64xf32> -> vector<64x64xf32>
    %467 = arith.addf %463, %466 : vector<64x64xf32>
    %c0_256 = arith.constant 0 : index
    %c0_257 = arith.constant 0 : index
    %468 = vector.load %arg10[%c0_256, %c0_257] : memref<1x64xf32, #tpu.memory_space<vmem>>, vector<1x64xf32>
    %469 = vector.broadcast %468 : vector<1x64xf32> to vector<64x64xf32>
    %470 = arith.addf %467, %469 : vector<64x64xf32>
    %cst_258 = arith.constant 0.000000e+00 : f32
    %471 = vector.broadcast %cst_258 : f32 to vector<64x64xf32>
    %472 = arith.maximumf %470, %471 : vector<64x64xf32>
    %c0_259 = arith.constant 0 : index
    %c0_260 = arith.constant 0 : index
    %473 = vector.load %arg11[%c0_259, %c0_260] : memref<64x128xf32, #tpu.memory_space<vmem>>, vector<64x128xf32>
    %cst_261 = arith.constant dense<0.000000e+00> : vector<64x128xf32>
    %474 = tpu.matmul %472, %473, %cst_261 {dimension_numbers = #tpu.dot_dimension_numbers<[1], [0], [0], [1], [0, 0, 1, 1], [], []>} : vector<64x64xf32>, vector<64x128xf32>, vector<64x128xf32> -> vector<64x128xf32>
    %c0_262 = arith.constant 0 : index
    %c0_263 = arith.constant 0 : index
    %475 = vector.load %arg12[%c0_262, %c0_263] : memref<1x128xf32, #tpu.memory_space<vmem>>, vector<1x128xf32>
    %476 = vector.broadcast %475 : vector<1x128xf32> to vector<64x128xf32>
    %477 = arith.addf %474, %476 : vector<64x128xf32>
    %c0_264 = arith.constant 0 : index
    %c0_265 = arith.constant 0 : index
    %478 = vector.load %arg13[%c0_264, %c0_265] : memref<64x128xf32, #tpu.memory_space<vmem>>, vector<64x128xf32>
    tpu.vector_store %arg13[%c0_264, %c0_265], %477 {strides = array<i32>} : memref<64x128xf32, #tpu.memory_space<vmem>>, vector<64x128xf32>,
    return
  }
}

</mosaic_0001>

<llo_original>
// kernel: unimodal_text_forward.1
$region0: #{unimodal_text_forward.1}
  #allocation0 [shape = 'u32[]', space=smem, size = 0x4, offset = 0x4, fixed_abs, tag = 'smem constant byte address 0x4 - core index']
  #allocation1 [shape = 'u32[144,128]{1,0:T(1,128)}', space=vmem, size = 0x12000, scoped, tag = 'internal scratch']
  #allocation2 [shape = 'f32[64,128]{1,0:T(8,128)}', space=vmem, size = 0x8000, scoped, tag = 'scratch operand']
  #allocation3 [shape = 'f32[64,128]{1,0:T(8,128)}', space=vmem, size = 0x8000, scoped, tag = 'scratch operand']
  #allocation4 [shape = 'f32[64,16]{1,0:T(8,128)}', space=vmem, size = 0x8000, scoped, tag = 'scratch operand']
  #allocation5 [shape = 'f32[64,16]{1,0:T(8,128)}', space=vmem, size = 0x8000, scoped, tag = 'scratch operand']
  %s0 = inlined_call_operand.vmem [shape: f32[64,32], index: 0, kind: input, shape index: {}]
  %s1 = inlined_call_operand.vmem [shape: f32[32,128], index: 1, kind: input, shape index: {}]
  %s2 = inlined_call_operand.vmem [shape: f32[32,128], index: 2, kind: input, shape index: {}]
  %s3 = inlined_call_operand.vmem [shape: f32[1,128], index: 3, kind: input, shape index: {}]
  %s4 = inlined_call_operand.vmem [shape: f32[16,128], index: 4, kind: input, shape index: {}]
  %s5 = inlined_call_operand.vmem [shape: f32[16,128], index: 5, kind: input, shape index: {}]
  %s6 = inlined_call_operand.vmem [shape: f32[32,128], index: 6, kind: input, shape index: {}]
  %s7 = inlined_call_operand.vmem [shape: f32[1,128], index: 7, kind: input, shape index: {}]
  %s8 = inlined_call_operand.vmem [shape: f32[16,64], index: 8, kind: input, shape index: {}]
  %s9 = inlined_call_operand.vmem [shape: f32[16,64], index: 9, kind: input, shape index: {}]
  %s10 = inlined_call_operand.vmem [shape: f32[1,64], index: 10, kind: input, shape index: {}]
  %s11 = inlined_call_operand.vmem [shape: f32[64,128], index: 11, kind: input, shape index: {}]
  %s12 = inlined_call_operand.vmem [shape: f32[1,128], index: 12, kind: input, shape index: {}]
  %s13 = inlined_call_operand.vmem [shape: f32[64,128], index: 13, kind: output, shape index: {}]
  %s14 = sld [smem:[#allocation0]]
  $region62: #{unimodal_text_forward.1} parent=0
    _
  %s16 = ssub.s32 1, %s14
  %s17 = scalar_select 0, %s16, %s14
  // Predicated region
  $region2: #{unimodal_text_forward.1} parent=0 // pred_check
    _
  $region3: #{unimodal_text_forward.1} parent=0 // pred_check_branch
    %19 = sbr.rel (0) target = $region5
  $region4: #{unimodal_text_forward.1} parent=0 // pred_region
    _
  $region5: #{unimodal_text_forward.1} parent=0 // pred_fallthru
    _
  // Predicated region
  $region6: #{unimodal_text_forward.1} parent=0 // pred_check
    _
  $region7: #{unimodal_text_forward.1} parent=0 // pred_check_branch
    %21 = sbr.rel (0) target = $region9
  $region8: #{unimodal_text_forward.1} parent=0 // pred_region
    _
  $region9: #{unimodal_text_forward.1} parent=0 // pred_fallthru
    _
  // Predicated region
  $region10: #{unimodal_text_forward.1} parent=0 // pred_check
    _
  $region11: #{unimodal_text_forward.1} parent=0 // pred_check_branch
    %23 = sbr.rel (0) target = $region13
  $region12: #{unimodal_text_forward.1} parent=0 // pred_region
    _
  $region13: #{unimodal_text_forward.1} parent=0 // pred_fallthru
    _
  // Predicated region
  $region14: #{unimodal_text_forward.1} parent=0 // pred_check
    _
  $region15: #{unimodal_text_forward.1} parent=0 // pred_check_branch
    %25 = sbr.rel (0) target = $region17
  $region16: #{unimodal_text_forward.1} parent=0 // pred_region
    _
  $region17: #{unimodal_text_forward.1} parent=0 // pred_fallthru
    _
  // Predicated region
  $region18: #{unimodal_text_forward.1} parent=0 // pred_check
    _
  $region19: #{unimodal_text_forward.1} parent=0 // pred_check_branch
    %27 = sbr.rel (0) target = $region21
  $region20: #{unimodal_text_forward.1} parent=0 // pred_region
    _
  $region21: #{unimodal_text_forward.1} parent=0 // pred_fallthru
    _
  // Predicated region
  $region22: #{unimodal_text_forward.1} parent=0 // pred_check
    _
  $region23: #{unimodal_text_forward.1} parent=0 // pred_check_branch
    %29 = sbr.rel (0) target = $region25
  $region24: #{unimodal_text_forward.1} parent=0 // pred_region
    _
  $region25: #{unimodal_text_forward.1} parent=0 // pred_fallthru
    _
  // Predicated region
  $region26: #{unimodal_text_forward.1} parent=0 // pred_check
    _
  $region27: #{unimodal_text_forward.1} parent=0 // pred_check_branch
    %31 = sbr.rel (0) target = $region29
  $region28: #{unimodal_text_forward.1} parent=0 // pred_region
    _
  $region29: #{unimodal_text_forward.1} parent=0 // pred_fallthru
    _
  // Predicated region
  $region30: #{unimodal_text_forward.1} parent=0 // pred_check
    _
  $region31: #{unimodal_text_forward.1} parent=0 // pred_check_branch
    %33 = sbr.rel (0) target = $region33
  $region32: #{unimodal_text_forward.1} parent=0 // pred_region
    _
  $region33: #{unimodal_text_forward.1} parent=0 // pred_fallthru
    _
  // Predicated region
  $region34: #{unimodal_text_forward.1} parent=0 // pred_check
    _
  $region35: #{unimodal_text_forward.1} parent=0 // pred_check_branch
    %35 = sbr.rel (0) target = $region37
  $region36: #{unimodal_text_forward.1} parent=0 // pred_region
    _
  $region37: #{unimodal_text_forward.1} parent=0 // pred_fallthru
    _
  // Predicated region
  $region38: #{unimodal_text_forward.1} parent=0 // pred_check
    _
  $region39: #{unimodal_text_forward.1} parent=0 // pred_check_branch
    %37 = sbr.rel (0) target = $region41
  $region40: #{unimodal_text_forward.1} parent=0 // pred_region
    _
  $region41: #{unimodal_text_forward.1} parent=0 // pred_fallthru
    _
  // Predicated region
  $region42: #{unimodal_text_forward.1} parent=0 // pred_check
    _
  $region43: #{unimodal_text_forward.1} parent=0 // pred_check_branch
    %39 = sbr.rel (0) target = $region45
  $region44: #{unimodal_text_forward.1} parent=0 // pred_region
    _
  $region45: #{unimodal_text_forward.1} parent=0 // pred_fallthru
    _
  // Predicated region
  $region46: #{unimodal_text_forward.1} parent=0 // pred_check
    _
  $region47: #{unimodal_text_forward.1} parent=0 // pred_check_branch
    %41 = sbr.rel (0) target = $region49
  $region48: #{unimodal_text_forward.1} parent=0 // pred_region
    _
  $region49: #{unimodal_text_forward.1} parent=0 // pred_fallthru
    _
  // Predicated region
  $region50: #{unimodal_text_forward.1} parent=0 // pred_check
    _
  $region51: #{unimodal_text_forward.1} parent=0 // pred_check_branch
    %43 = sbr.rel (0) target = $region53
  $region52: #{unimodal_text_forward.1} parent=0 // pred_region
    _
  $region53: #{unimodal_text_forward.1} parent=0 // pred_fallthru
    _
  %v44 = vlaneseq
  %v45 = vand.u32 %v44, 127
  %vm46 = vcmp.lt.s32.totalorder %v45, 16
  %vm47 = vcmp.ge.s32.totalorder %v45, 32
  %vm48 = vcmp.lt.s32.totalorder %v45, 48
  %vm49 = vmand %vm47, %vm48
  %vm50 = vmor %vm46, %vm49
  %vm51 = vcmp.ge.s32.totalorder %v45, 64
  %vm52 = vcmp.lt.s32.totalorder %v45, 80
  %vm53 = vmand %vm51, %vm52
  %vm54 = vmor %vm50, %vm53
  %vm55 = vcmp.ge.s32.totalorder %v45, 96
  %vm56 = vcmp.lt.s32.totalorder %v45, 112
  %vm57 = vmand %vm55, %vm56
  %vm58 = vmor %vm54, %vm57
  %v59 = vld [vmem:[%s0] sm:$0xff]
  %v60 = vld [vmem:[%s0 + $0x8] sm:$0xff]
  %v61 = vld [vmem:[%s0 + $0x10] sm:$0xff]
  %v62 = vld [vmem:[%s0 + $0x18] sm:$0xff]
  %v63 = vld [vmem:[%s0 + $0x20] sm:$0xff]
  %v64 = vld [vmem:[%s0 + $0x28] sm:$0xff]
  %v65 = vld [vmem:[%s0 + $0x30] sm:$0xff]
  %v66 = vld [vmem:[%s0 + $0x38] sm:$0xff]
  %v67 = vld [vmem:[%s1] sm:$0xff]
  %v68 = vld [vmem:[%s1 + $0x8] sm:$0xff]
  %v69 = vld [vmem:[%s1 + $0x10] sm:$0xff]
  %v70 = vld [vmem:[%s1 + $0x18] sm:$0xff]
  %v71 = vld [vmem:[%s3] sm:$0x1]
  %v73 = vlaneseq
  %v74 = vshrl.u32 %v73, 7
  %v75 = vsub.s32 0, %v74
  %v76 = vrot.slane %v71, %v75
  %vm78 = vcmask 261120
  %v80 = vsel %vm78, %v59, 0
  %v83 = vsel %vm78, %v60, 0
  %v86 = vsel %vm78, %v61, 0
  %v89 = vsel %vm78, %v62, 0
  %v92 = vsel %vm78, %v63, 0
  %v95 = vsel %vm78, %v64, 0
  %v98 = vsel %vm78, %v65, 0
  %v101 = vsel %vm78, %v66, 0
  %103 = vmatprep.subr.mxu0 0.0
  %104 = vmatpush1.msra.mxu0 0.0
  %105 = vmatprep.subr.mxu0 0.0
  %106 = vmatpush1.msra.mxu0 0.0
  %107 = vmatprep.subr.mxu0 0.0
  %108 = vmatpush1.msra.mxu0 0.0
  %109 = vmatprep.subr.mxu0 0.0
  %110 = vmatpush1.msra.mxu0 0.0
  %111 = vmatprep.subr.mxu0 0.0
  %112 = vmatpush1.msra.mxu0 0.0
  %113 = vmatprep.subr.mxu0 0.0
  %114 = vmatpush1.msra.mxu0 0.0
  %115 = vmatprep.subr.mxu0 0.0
  %116 = vmatpush1.msra.mxu0 0.0
  %117 = vmatprep.subr.mxu0 0.0
  %118 = vmatpush1.msra.mxu0 0.0
  %119 = vmatprep.subr.mxu0 0.0
  %120 = vmatpush1.msra.mxu0 0.0
  %121 = vmatprep.subr.mxu0 0.0
  %122 = vmatpush1.msra.mxu0 0.0
  %123 = vmatprep.subr.mxu0 0.0
  %124 = vmatpush1.msra.mxu0 0.0
  %125 = vmatprep.subr.mxu0 0.0
  %126 = vmatpush1.msra.mxu0 0.0
  %127 = vmatprep.subr.mxu0 0.0
  %128 = vmatpush1.msra.mxu0 %v70
  %129 = vmatprep.subr.mxu0 0.0
  %130 = vmatpush1.msra.mxu0 %v69
  %131 = vmatprep.subr.mxu0 0.0
  %132 = vmatpush1.msra.mxu0 %v68
  %133 = vmatprep.subr.mxu0 0.0
  %134 = vmatpush1.msra.mxu0 %v67
  %135 = vmatprep.subr.mxu0 0.0
  %136 = vmatpush2.msra.mxu0 0.0
  %137 = vmatprep.subr.mxu0 0.0
  %138 = vmatpush2.msra.mxu0 0.0
  %139 = vmatprep.subr.mxu0 0.0
  %140 = vmatpush2.msra.mxu0 0.0
  %141 = vmatprep.subr.mxu0 0.0
  %142 = vmatpush2.msra.mxu0 0.0
  %143 = vmatprep.subr.mxu0 0.0
  %144 = vmatpush2.msra.mxu0 0.0
  %145 = vmatprep.subr.mxu0 0.0
  %146 = vmatpush2.msra.mxu0 0.0
  %147 = vmatprep.subr.mxu0 0.0
  %148 = vmatpush2.msra.mxu0 0.0
  %149 = vmatprep.subr.mxu0 0.0
  %150 = vmatpush2.msra.mxu0 0.0
  %151 = vmatprep.subr.mxu0 0.0
  %152 = vmatpush2.msra.mxu0 0.0
  %153 = vmatprep.subr.mxu0 0.0
  %154 = vmatpush2.msra.mxu0 0.0
  %155 = vmatprep.subr.mxu0 0.0
  %156 = vmatpush2.msra.mxu0 0.0
  %157 = vmatprep.subr.mxu0 0.0
  %158 = vmatpush2.msra.mxu0 0.0
  %159 = vmatprep.subr.mxu0 0.0
  %160 = vmatpush2.msra.mxu0 0.0
  %161 = vmatprep.subr.mxu0 0.0
  %162 = vmatpush2.msra.mxu0 0.0
  %163 = vmatprep.subr.mxu0 0.0
  %164 = vmatpush2.msra.mxu0 0.0
  %165 = vmatprep.subr.mxu0 0.0
  %166 = vmatpush2.msra.mxu0 0.0
  %167 = vmatprep.mubr.f32.mxu0 0.0
  %168 = vmatmul.mubr.f32.gmra.mxu0 %v80
  %v169 = vpop.f32.mrf.mxu0
  %v170 = vadd.f32 %v76, %v169
  %v171 = vpop.f32.mrf.mxu0
  %172 = vmatprep.mubr.f32.mxu0 0.0
  %173 = vmatmul.mubr.f32.gmra.mxu0 %v83
  %v174 = vpop.f32.mrf.mxu0
  %v175 = vadd.f32 %v76, %v174
  %v176 = vpop.f32.mrf.mxu0
  %177 = vmatprep.mubr.f32.mxu0 0.0
  %178 = vmatmul.mubr.f32.gmra.mxu0 %v86
  %v179 = vpop.f32.mrf.mxu0
  %v180 = vadd.f32 %v76, %v179
  %v181 = vpop.f32.mrf.mxu0
  %182 = vmatprep.mubr.f32.mxu0 0.0
  %183 = vmatmul.mubr.f32.gmra.mxu0 %v89
  %v184 = vpop.f32.mrf.mxu0
  %v185 = vadd.f32 %v76, %v184
  %v186 = vpop.f32.mrf.mxu0
  %187 = vmatprep.mubr.f32.mxu0 0.0
  %188 = vmatmul.mubr.f32.gmra.mxu0 %v92
  %v189 = vpop.f32.mrf.mxu0
  %v190 = vadd.f32 %v76, %v189
  %v191 = vpop.f32.mrf.mxu0
  %192 = vmatprep.mubr.f32.mxu0 0.0
  %193 = vmatmul.mubr.f32.gmra.mxu0 %v95
  %v194 = vpop.f32.mrf.mxu0
  %v195 = vadd.f32 %v76, %v194
  %v196 = vpop.f32.mrf.mxu0
  %197 = vmatprep.mubr.f32.mxu0 0.0
  %198 = vmatmul.mubr.f32.gmra.mxu0 %v98
  %v199 = vpop.f32.mrf.mxu0
  %v200 = vadd.f32 %v76, %v199
  %v201 = vpop.f32.mrf.mxu0
  %202 = vmatprep.mubr.f32.mxu0 0.0
  %203 = vmatmul.mubr.f32.gmra.mxu0 %v101
  %v204 = vpop.f32.mrf.mxu0
  %v205 = vadd.f32 %v76, %v204
  %v206 = vpop.f32.mrf.mxu0
  %207 = vdwg.mxu0
  %208 = vst [vmem:[#allocation2] sm:$0xff] %v170
  %209 = vst [vmem:[#allocation2 + $0x8] sm:$0xff] %v175
  %210 = vst [vmem:[#allocation2 + $0x10] sm:$0xff] %v180
  %211 = vst [vmem:[#allocation2 + $0x18] sm:$0xff] %v185
  %212 = vst [vmem:[#allocation2 + $0x20] sm:$0xff] %v190
  %213 = vst [vmem:[#allocation2 + $0x28] sm:$0xff] %v195
  %214 = vst [vmem:[#allocation2 + $0x30] sm:$0xff] %v200
  %215 = vst [vmem:[#allocation2 + $0x38] sm:$0xff] %v205
  %v216 = vld [vmem:[%s2] sm:$0xff]
  %v217 = vld [vmem:[%s2 + $0x8] sm:$0xff]
  %v218 = vld [vmem:[%s2 + $0x10] sm:$0xff]
  %v219 = vld [vmem:[%s2 + $0x18] sm:$0xff]
  %v220 = vld [vmem:[#allocation2] sm:$0xff]
  %v221 = vld [vmem:[#allocation2 + $0x38] sm:$0xff]
  %v222 = vsel %vm58, %v220, %v221
  %223 = vst [vmem:[#allocation3] sm:$0xff] %v222
  %v224 = vld [vmem:[#allocation2 + $0x8] sm:$0xff]
  %v225 = vld [vmem:[#allocation2 + $0x30] sm:$0xff]
  %v226 = vsel %vm58, %v224, %v225
  %227 = vst [vmem:[#allocation3 + $0x8] sm:$0xff] %v226
  %v228 = vld [vmem:[#allocation2 + $0x10] sm:$0xff]
  %v229 = vld [vmem:[#allocation2 + $0x28] sm:$0xff]
  %v230 = vsel %vm58, %v228, %v229
  %231 = vst [vmem:[#allocation3 + $0x10] sm:$0xff] %v230
  %v232 = vld [vmem:[#allocation2 + $0x18] sm:$0xff]
  %v233 = vld [vmem:[#allocation2 + $0x20] sm:$0xff]
  %v234 = vsel %vm58, %v232, %v233
  %235 = vst [vmem:[#allocation3 + $0x18] sm:$0xff] %v234
  %v236 = vld [vmem:[#allocation2 + $0x20] sm:$0xff]
  %v237 = vld [vmem:[#allocation2 + $0x18] sm:$0xff]
  %v238 = vsel %vm58, %v236, %v237
  %239 = vst [vmem:[#allocation3 + $0x20] sm:$0xff] %v238
  %v240 = vld [vmem:[#allocation2 + $0x28] sm:$0xff]
  %v241 = vld [vmem:[#allocation2 + $0x10] sm:$0xff]
  %v242 = vsel %vm58, %v240, %v241
  %243 = vst [vmem:[#allocation3 + $0x28] sm:$0xff] %v242
  %v244 = vld [vmem:[#allocation2 + $0x30] sm:$0xff]
  %v245 = vld [vmem:[#allocation2 + $0x8] sm:$0xff]
  %v246 = vsel %vm58, %v244, %v245
  %247 = vst [vmem:[#allocation3 + $0x30] sm:$0xff] %v246
  %v248 = vld [vmem:[#allocation2 + $0x38] sm:$0xff]
  %v249 = vld [vmem:[#allocation2] sm:$0xff]
  %v250 = vsel %vm58, %v248, %v249
  %251 = vst [vmem:[#allocation3 + $0x38] sm:$0xff] %v250
  %v252 = vld [vmem:[#allocation3] sm:$0xff]
  %v254 = vsel %vm78, 0.0, 0
  %256 = vmatprep.subr.mxu0 0.0
  %257 = vmatpush1.msra.mxu0 0.0
  %258 = vmatprep.subr.mxu0 0.0
  %259 = vmatpush1.msra.mxu0 0.0
  %260 = vmatprep.subr.mxu0 0.0
  %261 = vmatpush1.msra.mxu0 0.0
  %262 = vmatprep.subr.mxu0 0.0
  %263 = vmatpush1.msra.mxu0 0.0
  %264 = vmatprep.subr.mxu0 0.0
  %265 = vmatpush1.msra.mxu0 0.0
  %266 = vmatprep.subr.mxu0 0.0
  %267 = vmatpush1.msra.mxu0 0.0
  %268 = vmatprep.subr.mxu0 0.0
  %269 = vmatpush1.msra.mxu0 0.0
  %270 = vmatprep.subr.mxu0 0.0
  %271 = vmatpush1.msra.mxu0 0.0
  %272 = vmatprep.subr.mxu0 0.0
  %273 = vmatpush1.msra.mxu0 0.0
  %274 = vmatprep.subr.mxu0 0.0
  %275 = vmatpush1.msra.mxu0 0.0
  %276 = vmatprep.subr.mxu0 0.0
  %277 = vmatpush1.msra.mxu0 0.0
  %278 = vmatprep.subr.mxu0 0.0
  %279 = vmatpush1.msra.mxu0 0.0
  %280 = vmatprep.subr.mxu0 0.0
  %281 = vmatpush1.msra.mxu0 %v219
  %282 = vmatprep.subr.mxu0 0.0
  %283 = vmatpush1.msra.mxu0 %v218
  %284 = vmatprep.subr.mxu0 0.0
  %285 = vmatpush1.msra.mxu0 %v217
  %286 = vmatprep.subr.mxu0 0.0
  %287 = vmatpush1.msra.mxu0 %v216
  %288 = vmatprep.subr.mxu0 0.0
  %289 = vmatpush2.msra.mxu0 0.0
  %290 = vmatprep.subr.mxu0 0.0
  %291 = vmatpush2.msra.mxu0 0.0
  %292 = vmatprep.subr.mxu0 0.0
  %293 = vmatpush2.msra.mxu0 0.0
  %294 = vmatprep.subr.mxu0 0.0
  %295 = vmatpush2.msra.mxu0 0.0
  %296 = vmatprep.subr.mxu0 0.0
  %297 = vmatpush2.msra.mxu0 0.0
  %298 = vmatprep.subr.mxu0 0.0
  %299 = vmatpush2.msra.mxu0 0.0
  %300 = vmatprep.subr.mxu0 0.0
  %301 = vmatpush2.msra.mxu0 0.0
  %302 = vmatprep.subr.mxu0 0.0
  %303 = vmatpush2.msra.mxu0 0.0
  %304 = vmatprep.subr.mxu0 0.0
  %305 = vmatpush2.msra.mxu0 0.0
  %306 = vmatprep.subr.mxu0 0.0
  %307 = vmatpush2.msra.mxu0 0.0
  %308 = vmatprep.subr.mxu0 0.0
  %309 = vmatpush2.msra.mxu0 0.0
  %310 = vmatprep.subr.mxu0 0.0
  %311 = vmatpush2.msra.mxu0 0.0
  %312 = vmatprep.subr.mxu0 0.0
  %313 = vmatpush2.msra.mxu0 0.0
  %314 = vmatprep.subr.mxu0 0.0
  %315 = vmatpush2.msra.mxu0 0.0
  %316 = vmatprep.subr.mxu0 0.0
  %317 = vmatpush2.msra.mxu0 0.0
  %318 = vmatprep.subr.mxu0 0.0
  %319 = vmatpush2.msra.mxu0 0.0
  %320 = vmatprep.mubr.f32.mxu0 0.0
  %321 = vmatmul.mubr.f32.gmra.mxu0 %v254
  %v322 = vpop.f32.mrf.mxu0
  %v323 = vadd.f32 0.0, %v322
  %v324 = vpop.f32.mrf.mxu0
  %325 = vdwg.mxu0
  %v326 = vadd.f32 %v252, %v323
  %v327 = vxor.u32 %v326, 2147483648
  %v328 = vmul.f32 %v327, 1.442695
  %v329 = vpow.pop %v328
  %v330 = vadd.f32 %v329, 1.0
  %v331 = vrcp.pop %v330
  %v332 = vmul.f32 1.0, %v331
  %v333 = vtanh.pop %v326
  %v334 = vmul.f32 %v332, 0.0
  %336 = vrot.lane.b32.xlu0 %v333, 64
  %v337 = vpop.permute.xlu0 %336
  %v339 = vmul.f32 %v332, %v337
  %341 = vrot.lane.b32.xlu0 %v339, 32
  %v342 = vpop.permute.xlu0 %341
  %v344 = vadd.f32 %v334, %v342
  %v345 = vtanh.pop %v344
  %347 = vrot.lane.b32.xlu0 %v345, 64
  %v348 = vpop.permute.xlu0 %347
  %v350 = vmul.f32 %v332, %v348
  %352 = vrot.lane.b32.xlu0 %v350, 32
  %v353 = vpop.permute.xlu0 %352
  %vm355 = vcmask 130048
  %356 = vst.msk [vmem:[#allocation4] sm:$0xff] %vm355, %v353
  %357 = vrot.lane.b32.xlu0 %v350, 16
  %v358 = vpop.permute.xlu0 %357
  %360 = vst.msk [vmem:[#allocation5 + $0x38] sm:$0xff] %vm355, %v358
  %v361 = vld [vmem:[#allocation3 + $0x8] sm:$0xff]
  %v362 = vsel %vm78, %v353, 0
  %364 = vmatprep.subr.mxu0 0.0
  %365 = vmatpush1.msra.mxu0 0.0
  %366 = vmatprep.subr.mxu0 0.0
  %367 = vmatpush1.msra.mxu0 0.0
  %368 = vmatprep.subr.mxu0 0.0
  %369 = vmatpush1.msra.mxu0 0.0
  %370 = vmatprep.subr.mxu0 0.0
  %371 = vmatpush1.msra.mxu0 0.0
  %372 = vmatprep.subr.mxu0 0.0
  %373 = vmatpush1.msra.mxu0 0.0
  %374 = vmatprep.subr.mxu0 0.0
  %375 = vmatpush1.msra.mxu0 0.0
  %376 = vmatprep.subr.mxu0 0.0
  %377 = vmatpush1.msra.mxu0 0.0
  %378 = vmatprep.subr.mxu0 0.0
  %379 = vmatpush1.msra.mxu0 0.0
  %380 = vmatprep.subr.mxu0 0.0
  %381 = vmatpush1.msra.mxu0 0.0
  %382 = vmatprep.subr.mxu0 0.0
  %383 = vmatpush1.msra.mxu0 0.0
  %384 = vmatprep.subr.mxu0 0.0
  %385 = vmatpush1.msra.mxu0 0.0
  %386 = vmatprep.subr.mxu0 0.0
  %387 = vmatpush1.msra.mxu0 0.0
  %388 = vmatprep.subr.mxu0 0.0
  %389 = vmatpush1.msra.mxu0 %v219
  %390 = vmatprep.subr.mxu0 0.0
  %391 = vmatpush1.msra.mxu0 %v218
  %392 = vmatprep.subr.mxu0 0.0
  %393 = vmatpush1.msra.mxu0 %v217
  %394 = vmatprep.subr.mxu0 0.0
  %395 = vmatpush1.msra.mxu0 %v216
  %396 = vmatprep.subr.mxu0 0.0
  %397 = vmatpush2.msra.mxu0 0.0
  %398 = vmatprep.subr.mxu0 0.0
  %399 = vmatpush2.msra.mxu0 0.0
  %400 = vmatprep.subr.mxu0 0.0
  %401 = vmatpush2.msra.mxu0 0.0
  %402 = vmatprep.subr.mxu0 0.0
  %403 = vmatpush2.msra.mxu0 0.0
  %404 = vmatprep.subr.mxu0 0.0
  %405 = vmatpush2.msra.mxu0 0.0
  %406 = vmatprep.subr.mxu0 0.0
  %407 = vmatpush2.msra.mxu0 0.0
  %408 = vmatprep.subr.mxu0 0.0
  %409 = vmatpush2.msra.mxu0 0.0
  %410 = vmatprep.subr.mxu0 0.0
  %411 = vmatpush2.msra.mxu0 0.0
  %412 = vmatprep.subr.mxu0 0.0
  %413 = vmatpush2.msra.mxu0 0.0
  %414 = vmatprep.subr.mxu0 0.0
  %415 = vmatpush2.msra.mxu0 0.0
  %416 = vmatprep.subr.mxu0 0.0
  %417 = vmatpush2.msra.mxu0 0.0
  %418 = vmatprep.subr.mxu0 0.0
  %419 = vmatpush2.msra.mxu0 0.0
  %420 = vmatprep.subr.mxu0 0.0
  %421 = vmatpush2.msra.mxu0 0.0
  %422 = vmatprep.subr.mxu0 0.0
  %423 = vmatpush2.msra.mxu0 0.0
  %424 = vmatprep.subr.mxu0 0.0
  %425 = vmatpush2.msra.mxu0 0.0
  %426 = vmatprep.subr.mxu0 0.0
  %427 = vmatpush2.msra.mxu0 0.0
  %428 = vmatprep.mubr.f32.mxu0 0.0
  %429 = vmatmul.mubr.f32.gmra.mxu0 %v362
  %v430 = vpop.f32.mrf.mxu0
  %v431 = vadd.f32 0.0, %v430
  %v432 = vpop.f32.mrf.mxu0
  %433 = vdwg.mxu0
  %v434 = vadd.f32 %v361, %v431
  %v435 = vxor.u32 %v434, 2147483648
  %v436 = vmul.f32 %v435, 1.442695
  %v437 = vpow.pop %v436
  %v438 = vadd.f32 %v437, 1.0
  %v439 = vrcp.pop %v438
  %v440 = vmul.f32 1.0, %v439
  %v441 = vtanh.pop %v434
  %v442 = vmul.f32 %v440, %v344
  %444 = vrot.lane.b32.xlu0 %v441, 64
  %v445 = vpop.permute.xlu0 %444
  %v447 = vmul.f32 %v440, %v445
  %449 = vrot.lane.b32.xlu0 %v447, 32
  %v450 = vpop.permute.xlu0 %449
  %v452 = vadd.f32 %v442, %v450
  %v453 = vtanh.pop %v452
  %455 = vrot.lane.b32.xlu0 %v453, 64
  %v456 = vpop.permute.xlu0 %455
  %v458 = vmul.f32 %v440, %v456
  %460 = vrot.lane.b32.xlu0 %v458, 32
  %v461 = vpop.permute.xlu0 %460
  %463 = vst.msk [vmem:[#allocation4 + $0x8] sm:$0xff] %vm355, %v461
  %464 = vrot.lane.b32.xlu0 %v458, 16
  %v465 = vpop.permute.xlu0 %464
  %467 = vst.msk [vmem:[#allocation5 + $0x30] sm:$0xff] %vm355, %v465
  %v468 = vld [vmem:[#allocation3 + $0x10] sm:$0xff]
  %v469 = vsel %vm78, %v461, 0
  %471 = vmatprep.subr.mxu0 0.0
  %472 = vmatpush1.msra.mxu0 0.0
  %473 = vmatprep.subr.mxu0 0.0
  %474 = vmatpush1.msra.mxu0 0.0
  %475 = vmatprep.subr.mxu0 0.0
  %476 = vmatpush1.msra.mxu0 0.0
  %477 = vmatprep.subr.mxu0 0.0
  %478 = vmatpush1.msra.mxu0 0.0
  %479 = vmatprep.subr.mxu0 0.0
  %480 = vmatpush1.msra.mxu0 0.0
  %481 = vmatprep.subr.mxu0 0.0
  %482 = vmatpush1.msra.mxu0 0.0
  %483 = vmatprep.subr.mxu0 0.0
  %484 = vmatpush1.msra.mxu0 0.0
  %485 = vmatprep.subr.mxu0 0.0
  %486 = vmatpush1.msra.mxu0 0.0
  %487 = vmatprep.subr.mxu0 0.0
  %488 = vmatpush1.msra.mxu0 0.0
  %489 = vmatprep.subr.mxu0 0.0
  %490 = vmatpush1.msra.mxu0 0.0
  %491 = vmatprep.subr.mxu0 0.0
  %492 = vmatpush1.msra.mxu0 0.0
  %493 = vmatprep.subr.mxu0 0.0
  %494 = vmatpush1.msra.mxu0 0.0
  %495 = vmatprep.subr.mxu0 0.0
  %496 = vmatpush1.msra.mxu0 %v219
  %497 = vmatprep.subr.mxu0 0.0
  %498 = vmatpush1.msra.mxu0 %v218
  %499 = vmatprep.subr.mxu0 0.0
  %500 = vmatpush1.msra.mxu0 %v217
  %501 = vmatprep.subr.mxu0 0.0
  %502 = vmatpush1.msra.mxu0 %v216
  %503 = vmatprep.subr.mxu0 0.0
  %504 = vmatpush2.msra.mxu0 0.0
  %505 = vmatprep.subr.mxu0 0.0
  %506 = vmatpush2.msra.mxu0 0.0
  %507 = vmatprep.subr.mxu0 0.0
  %508 = vmatpush2.msra.mxu0 0.0
  %509 = vmatprep.subr.mxu0 0.0
  %510 = vmatpush2.msra.mxu0 0.0
  %511 = vmatprep.subr.mxu0 0.0
  %512 = vmatpush2.msra.mxu0 0.0
  %513 = vmatprep.subr.mxu0 0.0
  %514 = vmatpush2.msra.mxu0 0.0
  %515 = vmatprep.subr.mxu0 0.0
  %516 = vmatpush2.msra.mxu0 0.0
  %517 = vmatprep.subr.mxu0 0.0
  %518 = vmatpush2.msra.mxu0 0.0
  %519 = vmatprep.subr.mxu0 0.0
  %520 = vmatpush2.msra.mxu0 0.0
  %521 = vmatprep.subr.mxu0 0.0
  %522 = vmatpush2.msra.mxu0 0.0
  %523 = vmatprep.subr.mxu0 0.0
  %524 = vmatpush2.msra.mxu0 0.0
  %525 = vmatprep.subr.mxu0 0.0
  %526 = vmatpush2.msra.mxu0 0.0
  %527 = vmatprep.subr.mxu0 0.0
  %528 = vmatpush2.msra.mxu0 0.0
  %529 = vmatprep.subr.mxu0 0.0
  %530 = vmatpush2.msra.mxu0 0.0
  %531 = vmatprep.subr.mxu0 0.0
  %532 = vmatpush2.msra.mxu0 0.0
  %533 = vmatprep.subr.mxu0 0.0
  %534 = vmatpush2.msra.mxu0 0.0
  %535 = vmatprep.mubr.f32.mxu0 0.0
  %536 = vmatmul.mubr.f32.gmra.mxu0 %v469
  %v537 = vpop.f32.mrf.mxu0
  %v538 = vadd.f32 0.0, %v537
  %v539 = vpop.f32.mrf.mxu0
  %540 = vdwg.mxu0
  %v541 = vadd.f32 %v468, %v538
  %v542 = vxor.u32 %v541, 2147483648
  %v543 = vmul.f32 %v542, 1.442695
  %v544 = vpow.pop %v543
  %v545 = vadd.f32 %v544, 1.0
  %v546 = vrcp.pop %v545
  %v547 = vmul.f32 1.0, %v546
  %v548 = vtanh.pop %v541
  %v549 = vmul.f32 %v547, %v452
  %551 = vrot.lane.b32.xlu0 %v548, 64
  %v552 = vpop.permute.xlu0 %551
  %v554 = vmul.f32 %v547, %v552
  %556 = vrot.lane.b32.xlu0 %v554, 32
  %v557 = vpop.permute.xlu0 %556
  %v559 = vadd.f32 %v549, %v557
  %v560 = vtanh.pop %v559
  %562 = vrot.lane.b32.xlu0 %v560, 64
  %v563 = vpop.permute.xlu0 %562
  %v565 = vmul.f32 %v547, %v563
  %567 = vrot.lane.b32.xlu0 %v565, 32
  %v568 = vpop.permute.xlu0 %567
  %570 = vst.msk [vmem:[#allocation4 + $0x10] sm:$0xff] %vm355, %v568
  %571 = vrot.lane.b32.xlu0 %v565, 16
  %v572 = vpop.permute.xlu0 %571
  %574 = vst.msk [vmem:[#allocation5 + $0x28] sm:$0xff] %vm355, %v572
  %v575 = vld [vmem:[#allocation3 + $0x18] sm:$0xff]
  %v576 = vsel %vm78, %v568, 0
  %578 = vmatprep.subr.mxu0 0.0
  %579 = vmatpush1.msra.mxu0 0.0
  %580 = vmatprep.subr.mxu0 0.0
  %581 = vmatpush1.msra.mxu0 0.0
  %582 = vmatprep.subr.mxu0 0.0
  %583 = vmatpush1.msra.mxu0 0.0
  %584 = vmatprep.subr.mxu0 0.0
  %585 = vmatpush1.msra.mxu0 0.0
  %586 = vmatprep.subr.mxu0 0.0
  %587 = vmatpush1.msra.mxu0 0.0
  %588 = vmatprep.subr.mxu0 0.0
  %589 = vmatpush1.msra.mxu0 0.0
  %590 = vmatprep.subr.mxu0 0.0
  %591 = vmatpush1.msra.mxu0 0.0
  %592 = vmatprep.subr.mxu0 0.0
  %593 = vmatpush1.msra.mxu0 0.0
  %594 = vmatprep.subr.mxu0 0.0
  %595 = vmatpush1.msra.mxu0 0.0
  %596 = vmatprep.subr.mxu0 0.0
  %597 = vmatpush1.msra.mxu0 0.0
  %598 = vmatprep.subr.mxu0 0.0
  %599 = vmatpush1.msra.mxu0 0.0
  %600 = vmatprep.subr.mxu0 0.0
  %601 = vmatpush1.msra.mxu0 0.0
  %602 = vmatprep.subr.mxu0 0.0
  %603 = vmatpush1.msra.mxu0 %v219
  %604 = vmatprep.subr.mxu0 0.0
  %605 = vmatpush1.msra.mxu0 %v218
  %606 = vmatprep.subr.mxu0 0.0
  %607 = vmatpush1.msra.mxu0 %v217
  %608 = vmatprep.subr.mxu0 0.0
  %609 = vmatpush1.msra.mxu0 %v216
  %610 = vmatprep.subr.mxu0 0.0
  %611 = vmatpush2.msra.mxu0 0.0
  %612 = vmatprep.subr.mxu0 0.0
  %613 = vmatpush2.msra.mxu0 0.0
  %614 = vmatprep.subr.mxu0 0.0
  %615 = vmatpush2.msra.mxu0 0.0
  %616 = vmatprep.subr.mxu0 0.0
  %617 = vmatpush2.msra.mxu0 0.0
  %618 = vmatprep.subr.mxu0 0.0
  %619 = vmatpush2.msra.mxu0 0.0
  %620 = vmatprep.subr.mxu0 0.0
  %621 = vmatpush2.msra.mxu0 0.0
  %622 = vmatprep.subr.mxu0 0.0
  %623 = vmatpush2.msra.mxu0 0.0
  %624 = vmatprep.subr.mxu0 0.0
  %625 = vmatpush2.msra.mxu0 0.0
  %626 = vmatprep.subr.mxu0 0.0
  %627 = vmatpush2.msra.mxu0 0.0
  %628 = vmatprep.subr.mxu0 0.0
  %629 = vmatpush2.msra.mxu0 0.0
  %630 = vmatprep.subr.mxu0 0.0
  %631 = vmatpush2.msra.mxu0 0.0
  %632 = vmatprep.subr.mxu0 0.0
  %633 = vmatpush2.msra.mxu0 0.0
  %634 = vmatprep.subr.mxu0 0.0
  %635 = vmatpush2.msra.mxu0 0.0
  %636 = vmatprep.subr.mxu0 0.0
  %637 = vmatpush2.msra.mxu0 0.0
  %638 = vmatprep.subr.mxu0 0.0
  %639 = vmatpush2.msra.mxu0 0.0
  %640 = vmatprep.subr.mxu0 0.0
  %641 = vmatpush2.msra.mxu0 0.0
  %642 = vmatprep.mubr.f32.mxu0 0.0
  %643 = vmatmul.mubr.f32.gmra.mxu0 %v576
  %v644 = vpop.f32.mrf.mxu0
  %v645 = vadd.f32 0.0, %v644
  %v646 = vpop.f32.mrf.mxu0
  %647 = vdwg.mxu0
  %v648 = vadd.f32 %v575, %v645
  %v649 = vxor.u32 %v648, 2147483648
  %v650 = vmul.f32 %v649, 1.442695
  %v651 = vpow.pop %v650
  %v652 = vadd.f32 %v651, 1.0
  %v653 = vrcp.pop %v652
  %v654 = vmul.f32 1.0, %v653
  %v655 = vtanh.pop %v648
  %v656 = vmul.f32 %v654, %v559
  %658 = vrot.lane.b32.xlu0 %v655, 64
  %v659 = vpop.permute.xlu0 %658
  %v661 = vmul.f32 %v654, %v659
  %663 = vrot.lane.b32.xlu0 %v661, 32
  %v664 = vpop.permute.xlu0 %663
  %v666 = vadd.f32 %v656, %v664
  %v667 = vtanh.pop %v666
  %669 = vrot.lane.b32.xlu0 %v667, 64
  %v670 = vpop.permute.xlu0 %669
  %v672 = vmul.f32 %v654, %v670
  %674 = vrot.lane.b32.xlu0 %v672, 32
  %v675 = vpop.permute.xlu0 %674
  %677 = vst.msk [vmem:[#allocation4 + $0x18] sm:$0xff] %vm355, %v675
  %678 = vrot.lane.b32.xlu0 %v672, 16
  %v679 = vpop.permute.xlu0 %678
  %681 = vst.msk [vmem:[#allocation5 + $0x20] sm:$0xff] %vm355, %v679
  %v682 = vld [vmem:[#allocation3 + $0x20] sm:$0xff]
  %v683 = vsel %vm78, %v675, 0
  %685 = vmatprep.subr.mxu0 0.0
  %686 = vmatpush1.msra.mxu0 0.0
  %687 = vmatprep.subr.mxu0 0.0
  %688 = vmatpush1.msra.mxu0 0.0
  %689 = vmatprep.subr.mxu0 0.0
  %690 = vmatpush1.msra.mxu0 0.0
  %691 = vmatprep.subr.mxu0 0.0
  %692 = vmatpush1.msra.mxu0 0.0
  %693 = vmatprep.subr.mxu0 0.0
  %694 = vmatpush1.msra.mxu0 0.0
  %695 = vmatprep.subr.mxu0 0.0
  %696 = vmatpush1.msra.mxu0 0.0
  %697 = vmatprep.subr.mxu0 0.0
  %698 = vmatpush1.msra.mxu0 0.0
  %699 = vmatprep.subr.mxu0 0.0
  %700 = vmatpush1.msra.mxu0 0.0
  %701 = vmatprep.subr.mxu0 0.0
  %702 = vmatpush1.msra.mxu0 0.0
  %703 = vmatprep.subr.mxu0 0.0
  %704 = vmatpush1.msra.mxu0 0.0
  %705 = vmatprep.subr.mxu0 0.0
  %706 = vmatpush1.msra.mxu0 0.0
  %707 = vmatprep.subr.mxu0 0.0
  %708 = vmatpush1.msra.mxu0 0.0
  %709 = vmatprep.subr.mxu0 0.0
  %710 = vmatpush1.msra.mxu0 %v219
  %711 = vmatprep.subr.mxu0 0.0
  %712 = vmatpush1.msra.mxu0 %v218
  %713 = vmatprep.subr.mxu0 0.0
  %714 = vmatpush1.msra.mxu0 %v217
  %715 = vmatprep.subr.mxu0 0.0
  %716 = vmatpush1.msra.mxu0 %v216
  %717 = vmatprep.subr.mxu0 0.0
  %718 = vmatpush2.msra.mxu0 0.0
  %719 = vmatprep.subr.mxu0 0.0
  %720 = vmatpush2.msra.mxu0 0.0
  %721 = vmatprep.subr.mxu0 0.0
  %722 = vmatpush2.msra.mxu0 0.0
  %723 = vmatprep.subr.mxu0 0.0
  %724 = vmatpush2.msra.mxu0 0.0
  %725 = vmatprep.subr.mxu0 0.0
  %726 = vmatpush2.msra.mxu0 0.0
  %727 = vmatprep.subr.mxu0 0.0
  %728 = vmatpush2.msra.mxu0 0.0
  %729 = vmatprep.subr.mxu0 0.0
  %730 = vmatpush2.msra.mxu0 0.0
  %731 = vmatprep.subr.mxu0 0.0
  %732 = vmatpush2.msra.mxu0 0.0
  %733 = vmatprep.subr.mxu0 0.0
  %734 = vmatpush2.msra.mxu0 0.0
  %735 = vmatprep.subr.mxu0 0.0
  %736 = vmatpush2.msra.mxu0 0.0
  %737 = vmatprep.subr.mxu0 0.0
  %738 = vmatpush2.msra.mxu0 0.0
  %739 = vmatprep.subr.mxu0 0.0
  %740 = vmatpush2.msra.mxu0 0.0
  %741 = vmatprep.subr.mxu0 0.0
  %742 = vmatpush2.msra.mxu0 0.0
  %743 = vmatprep.subr.mxu0 0.0
  %744 = vmatpush2.msra.mxu0 0.0
  %745 = vmatprep.subr.mxu0 0.0
  %746 = vmatpush2.msra.mxu0 0.0
  %747 = vmatprep.subr.mxu0 0.0
  %748 = vmatpush2.msra.mxu0 0.0
  %749 = vmatprep.mubr.f32.mxu0 0.0
  %750 = vmatmul.mubr.f32.gmra.mxu0 %v683
  %v751 = vpop.f32.mrf.mxu0
  %v752 = vadd.f32 0.0, %v751
  %v753 = vpop.f32.mrf.mxu0
  %754 = vdwg.mxu0
  %v755 = vadd.f32 %v682, %v752
  %v756 = vxor.u32 %v755, 2147483648
  %v757 = vmul.f32 %v756, 1.442695
  %v758 = vpow.pop %v757
  %v759 = vadd.f32 %v758, 1.0
  %v760 = vrcp.pop %v759
  %v761 = vmul.f32 1.0, %v760
  %v762 = vtanh.pop %v755
  %v763 = vmul.f32 %v761, %v666
  %765 = vrot.lane.b32.xlu0 %v762, 64
  %v766 = vpop.permute.xlu0 %765
  %v768 = vmul.f32 %v761, %v766
  %770 = vrot.lane.b32.xlu0 %v768, 32
  %v771 = vpop.permute.xlu0 %770
  %v773 = vadd.f32 %v763, %v771
  %v774 = vtanh.pop %v773
  %776 = vrot.lane.b32.xlu0 %v774, 64
  %v777 = vpop.permute.xlu0 %776
  %v779 = vmul.f32 %v761, %v777
  %781 = vrot.lane.b32.xlu0 %v779, 32
  %v782 = vpop.permute.xlu0 %781
  %784 = vst.msk [vmem:[#allocation4 + $0x20] sm:$0xff] %vm355, %v782
  %785 = vrot.lane.b32.xlu0 %v779, 16
  %v786 = vpop.permute.xlu0 %785
  %788 = vst.msk [vmem:[#allocation5 + $0x18] sm:$0xff] %vm355, %v786
  %v789 = vld [vmem:[#allocation3 + $0x28] sm:$0xff]
  %v790 = vsel %vm78, %v782, 0
  %792 = vmatprep.subr.mxu0 0.0
  %793 = vmatpush1.msra.mxu0 0.0
  %794 = vmatprep.subr.mxu0 0.0
  %795 = vmatpush1.msra.mxu0 0.0
  %796 = vmatprep.subr.mxu0 0.0
  %797 = vmatpush1.msra.mxu0 0.0
  %798 = vmatprep.subr.mxu0 0.0
  %799 = vmatpush1.msra.mxu0 0.0
  %800 = vmatprep.subr.mxu0 0.0
  %801 = vmatpush1.msra.mxu0 0.0
  %802 = vmatprep.subr.mxu0 0.0
  %803 = vmatpush1.msra.mxu0 0.0
  %804 = vmatprep.subr.mxu0 0.0
  %805 = vmatpush1.msra.mxu0 0.0
  %806 = vmatprep.subr.mxu0 0.0
  %807 = vmatpush1.msra.mxu0 0.0
  %808 = vmatprep.subr.mxu0 0.0
  %809 = vmatpush1.msra.mxu0 0.0
  %810 = vmatprep.subr.mxu0 0.0
  %811 = vmatpush1.msra.mxu0 0.0
  %812 = vmatprep.subr.mxu0 0.0
  %813 = vmatpush1.msra.mxu0 0.0
  %814 = vmatprep.subr.mxu0 0.0
  %815 = vmatpush1.msra.mxu0 0.0
  %816 = vmatprep.subr.mxu0 0.0
  %817 = vmatpush1.msra.mxu0 %v219
  %818 = vmatprep.subr.mxu0 0.0
  %819 = vmatpush1.msra.mxu0 %v218
  %820 = vmatprep.subr.mxu0 0.0
  %821 = vmatpush1.msra.mxu0 %v217
  %822 = vmatprep.subr.mxu0 0.0
  %823 = vmatpush1.msra.mxu0 %v216
  %824 = vmatprep.subr.mxu0 0.0
  %825 = vmatpush2.msra.mxu0 0.0
  %826 = vmatprep.subr.mxu0 0.0
  %827 = vmatpush2.msra.mxu0 0.0
  %828 = vmatprep.subr.mxu0 0.0
  %829 = vmatpush2.msra.mxu0 0.0
  %830 = vmatprep.subr.mxu0 0.0
  %831 = vmatpush2.msra.mxu0 0.0
  %832 = vmatprep.subr.mxu0 0.0
  %833 = vmatpush2.msra.mxu0 0.0
  %834 = vmatprep.subr.mxu0 0.0
  %835 = vmatpush2.msra.mxu0 0.0
  %836 = vmatprep.subr.mxu0 0.0
  %837 = vmatpush2.msra.mxu0 0.0
  %838 = vmatprep.subr.mxu0 0.0
  %839 = vmatpush2.msra.mxu0 0.0
  %840 = vmatprep.subr.mxu0 0.0
  %841 = vmatpush2.msra.mxu0 0.0
  %842 = vmatprep.subr.mxu0 0.0
  %843 = vmatpush2.msra.mxu0 0.0
  %844 = vmatprep.subr.mxu0 0.0
  %845 = vmatpush2.msra.mxu0 0.0
  %846 = vmatprep.subr.mxu0 0.0
  %847 = vmatpush2.msra.mxu0 0.0
  %848 = vmatprep.subr.mxu0 0.0
  %849 = vmatpush2.msra.mxu0 0.0
  %850 = vmatprep.subr.mxu0 0.0
  %851 = vmatpush2.msra.mxu0 0.0
  %852 = vmatprep.subr.mxu0 0.0
  %853 = vmatpush2.msra.mxu0 0.0
  %854 = vmatprep.subr.mxu0 0.0
  %855 = vmatpush2.msra.mxu0 0.0
  %856 = vmatprep.mubr.f32.mxu0 0.0
  %857 = vmatmul.mubr.f32.gmra.mxu0 %v790
  %v858 = vpop.f32.mrf.mxu0
  %v859 = vadd.f32 0.0, %v858
  %v860 = vpop.f32.mrf.mxu0
  %861 = vdwg.mxu0
  %v862 = vadd.f32 %v789, %v859
  %v863 = vxor.u32 %v862, 2147483648
  %v864 = vmul.f32 %v863, 1.442695
  %v865 = vpow.pop %v864
  %v866 = vadd.f32 %v865, 1.0
  %v867 = vrcp.pop %v866
  %v868 = vmul.f32 1.0, %v867
  %v869 = vtanh.pop %v862
  %v870 = vmul.f32 %v868, %v773
  %872 = vrot.lane.b32.xlu0 %v869, 64
  %v873 = vpop.permute.xlu0 %872
  %v875 = vmul.f32 %v868, %v873
  %877 = vrot.lane.b32.xlu0 %v875, 32
  %v878 = vpop.permute.xlu0 %877
  %v880 = vadd.f32 %v870, %v878
  %v881 = vtanh.pop %v880
  %883 = vrot.lane.b32.xlu0 %v881, 64
  %v884 = vpop.permute.xlu0 %883
  %v886 = vmul.f32 %v868, %v884
  %888 = vrot.lane.b32.xlu0 %v886, 32
  %v889 = vpop.permute.xlu0 %888
  %891 = vst.msk [vmem:[#allocation4 + $0x28] sm:$0xff] %vm355, %v889
  %892 = vrot.lane.b32.xlu0 %v886, 16
  %v893 = vpop.permute.xlu0 %892
  %895 = vst.msk [vmem:[#allocation5 + $0x10] sm:$0xff] %vm355, %v893
  %v896 = vld [vmem:[#allocation3 + $0x30] sm:$0xff]
  %v897 = vsel %vm78, %v889, 0
  %899 = vmatprep.subr.mxu0 0.0
  %900 = vmatpush1.msra.mxu0 0.0
  %901 = vmatprep.subr.mxu0 0.0
  %902 = vmatpush1.msra.mxu0 0.0
  %903 = vmatprep.subr.mxu0 0.0
  %904 = vmatpush1.msra.mxu0 0.0
  %905 = vmatprep.subr.mxu0 0.0
  %906 = vmatpush1.msra.mxu0 0.0
  %907 = vmatprep.subr.mxu0 0.0
  %908 = vmatpush1.msra.mxu0 0.0
  %909 = vmatprep.subr.mxu0 0.0
  %910 = vmatpush1.msra.mxu0 0.0
  %911 = vmatprep.subr.mxu0 0.0
  %912 = vmatpush1.msra.mxu0 0.0
  %913 = vmatprep.subr.mxu0 0.0
  %914 = vmatpush1.msra.mxu0 0.0
  %915 = vmatprep.subr.mxu0 0.0
  %916 = vmatpush1.msra.mxu0 0.0
  %917 = vmatprep.subr.mxu0 0.0
  %918 = vmatpush1.msra.mxu0 0.0
  %919 = vmatprep.subr.mxu0 0.0
  %920 = vmatpush1.msra.mxu0 0.0
  %921 = vmatprep.subr.mxu0 0.0
  %922 = vmatpush1.msra.mxu0 0.0
  %923 = vmatprep.subr.mxu0 0.0
  %924 = vmatpush1.msra.mxu0 %v219
  %925 = vmatprep.subr.mxu0 0.0
  %926 = vmatpush1.msra.mxu0 %v218
  %927 = vmatprep.subr.mxu0 0.0
  %928 = vmatpush1.msra.mxu0 %v217
  %929 = vmatprep.subr.mxu0 0.0
  %930 = vmatpush1.msra.mxu0 %v216
  %931 = vmatprep.subr.mxu0 0.0
  %932 = vmatpush2.msra.mxu0 0.0
  %933 = vmatprep.subr.mxu0 0.0
  %934 = vmatpush2.msra.mxu0 0.0
  %935 = vmatprep.subr.mxu0 0.0
  %936 = vmatpush2.msra.mxu0 0.0
  %937 = vmatprep.subr.mxu0 0.0
  %938 = vmatpush2.msra.mxu0 0.0
  %939 = vmatprep.subr.mxu0 0.0
  %940 = vmatpush2.msra.mxu0 0.0
  %941 = vmatprep.subr.mxu0 0.0
  %942 = vmatpush2.msra.mxu0 0.0
  %943 = vmatprep.subr.mxu0 0.0
  %944 = vmatpush2.msra.mxu0 0.0
  %945 = vmatprep.subr.mxu0 0.0
  %946 = vmatpush2.msra.mxu0 0.0
  %947 = vmatprep.subr.mxu0 0.0
  %948 = vmatpush2.msra.mxu0 0.0
  %949 = vmatprep.subr.mxu0 0.0
  %950 = vmatpush2.msra.mxu0 0.0
  %951 = vmatprep.subr.mxu0 0.0
  %952 = vmatpush2.msra.mxu0 0.0
  %953 = vmatprep.subr.mxu0 0.0
  %954 = vmatpush2.msra.mxu0 0.0
  %955 = vmatprep.subr.mxu0 0.0
  %956 = vmatpush2.msra.mxu0 0.0
  %957 = vmatprep.subr.mxu0 0.0
  %958 = vmatpush2.msra.mxu0 0.0
  %959 = vmatprep.subr.mxu0 0.0
  %960 = vmatpush2.msra.mxu0 0.0
  %961 = vmatprep.subr.mxu0 0.0
  %962 = vmatpush2.msra.mxu0 0.0
  %963 = vmatprep.mubr.f32.mxu0 0.0
  %964 = vmatmul.mubr.f32.gmra.mxu0 %v897
  %v965 = vpop.f32.mrf.mxu0
  %v966 = vadd.f32 0.0, %v965
  %v967 = vpop.f32.mrf.mxu0
  %968 = vdwg.mxu0
  %v969 = vadd.f32 %v896, %v966
  %v970 = vxor.u32 %v969, 2147483648
  %v971 = vmul.f32 %v970, 1.442695
  %v972 = vpow.pop %v971
  %v973 = vadd.f32 %v972, 1.0
  %v974 = vrcp.pop %v973
  %v975 = vmul.f32 1.0, %v974
  %v976 = vtanh.pop %v969
  %v977 = vmul.f32 %v975, %v880
  %979 = vrot.lane.b32.xlu0 %v976, 64
  %v980 = vpop.permute.xlu0 %979
  %v982 = vmul.f32 %v975, %v980
  %984 = vrot.lane.b32.xlu0 %v982, 32
  %v985 = vpop.permute.xlu0 %984
  %v987 = vadd.f32 %v977, %v985
  %v988 = vtanh.pop %v987
  %990 = vrot.lane.b32.xlu0 %v988, 64
  %v991 = vpop.permute.xlu0 %990
  %v993 = vmul.f32 %v975, %v991
  %995 = vrot.lane.b32.xlu0 %v993, 32
  %v996 = vpop.permute.xlu0 %995
  %998 = vst.msk [vmem:[#allocation4 + $0x30] sm:$0xff] %vm355, %v996
  %999 = vrot.lane.b32.xlu0 %v993, 16
  %v1000 = vpop.permute.xlu0 %999
  %1002 = vst.msk [vmem:[#allocation5 + $0x8] sm:$0xff] %vm355, %v1000
  %v1003 = vld [vmem:[#allocation3 + $0x38] sm:$0xff]
  %v1004 = vsel %vm78, %v996, 0
  %1006 = vmatprep.subr.mxu0 0.0
  %1007 = vmatpush1.msra.mxu0 0.0
  %1008 = vmatprep.subr.mxu0 0.0
  %1009 = vmatpush1.msra.mxu0 0.0
  %1010 = vmatprep.subr.mxu0 0.0
  %1011 = vmatpush1.msra.mxu0 0.0
  %1012 = vmatprep.subr.mxu0 0.0
  %1013 = vmatpush1.msra.mxu0 0.0
  %1014 = vmatprep.subr.mxu0 0.0
  %1015 = vmatpush1.msra.mxu0 0.0
  %1016 = vmatprep.subr.mxu0 0.0
  %1017 = vmatpush1.msra.mxu0 0.0
  %1018 = vmatprep.subr.mxu0 0.0
  %1019 = vmatpush1.msra.mxu0 0.0
  %1020 = vmatprep.subr.mxu0 0.0
  %1021 = vmatpush1.msra.mxu0 0.0
  %1022 = vmatprep.subr.mxu0 0.0
  %1023 = vmatpush1.msra.mxu0 0.0
  %1024 = vmatprep.subr.mxu0 0.0
  %1025 = vmatpush1.msra.mxu0 0.0
  %1026 = vmatprep.subr.mxu0 0.0
  %1027 = vmatpush1.msra.mxu0 0.0
  %1028 = vmatprep.subr.mxu0 0.0
  %1029 = vmatpush1.msra.mxu0 0.0
  %1030 = vmatprep.subr.mxu0 0.0
  %1031 = vmatpush1.msra.mxu0 %v219
  %1032 = vmatprep.subr.mxu0 0.0
  %1033 = vmatpush1.msra.mxu0 %v218
  %1034 = vmatprep.subr.mxu0 0.0
  %1035 = vmatpush1.msra.mxu0 %v217
  %1036 = vmatprep.subr.mxu0 0.0
  %1037 = vmatpush1.msra.mxu0 %v216
  %1038 = vmatprep.subr.mxu0 0.0
  %1039 = vmatpush2.msra.mxu0 0.0
  %1040 = vmatprep.subr.mxu0 0.0
  %1041 = vmatpush2.msra.mxu0 0.0
  %1042 = vmatprep.subr.mxu0 0.0
  %1043 = vmatpush2.msra.mxu0 0.0
  %1044 = vmatprep.subr.mxu0 0.0
  %1045 = vmatpush2.msra.mxu0 0.0
  %1046 = vmatprep.subr.mxu0 0.0
  %1047 = vmatpush2.msra.mxu0 0.0
  %1048 = vmatprep.subr.mxu0 0.0
  %1049 = vmatpush2.msra.mxu0 0.0
  %1050 = vmatprep.subr.mxu0 0.0
  %1051 = vmatpush2.msra.mxu0 0.0
  %1052 = vmatprep.subr.mxu0 0.0
  %1053 = vmatpush2.msra.mxu0 0.0
  %1054 = vmatprep.subr.mxu0 0.0
  %1055 = vmatpush2.msra.mxu0 0.0
  %1056 = vmatprep.subr.mxu0 0.0
  %1057 = vmatpush2.msra.mxu0 0.0
  %1058 = vmatprep.subr.mxu0 0.0
  %1059 = vmatpush2.msra.mxu0 0.0
  %1060 = vmatprep.subr.mxu0 0.0
  %1061 = vmatpush2.msra.mxu0 0.0
  %1062 = vmatprep.subr.mxu0 0.0
  %1063 = vmatpush2.msra.mxu0 0.0
  %1064 = vmatprep.subr.mxu0 0.0
  %1065 = vmatpush2.msra.mxu0 0.0
  %1066 = vmatprep.subr.mxu0 0.0
  %1067 = vmatpush2.msra.mxu0 0.0
  %1068 = vmatprep.subr.mxu0 0.0
  %1069 = vmatpush2.msra.mxu0 0.0
  %1070 = vmatprep.mubr.f32.mxu0 0.0
  %1071 = vmatmul.mubr.f32.gmra.mxu0 %v1004
  %v1072 = vpop.f32.mrf.mxu0
  %v1073 = vadd.f32 0.0, %v1072
  %v1074 = vpop.f32.mrf.mxu0
  %1075 = vdwg.mxu0
  %v1076 = vadd.f32 %v1003, %v1073
  %v1077 = vxor.u32 %v1076, 2147483648
  %v1078 = vmul.f32 %v1077, 1.442695
  %v1079 = vpow.pop %v1078
  %v1080 = vadd.f32 %v1079, 1.0
  %v1081 = vrcp.pop %v1080
  %v1082 = vmul.f32 1.0, %v1081
  %v1083 = vtanh.pop %v1076
  %v1084 = vmul.f32 %v1082, %v987
  %1086 = vrot.lane.b32.xlu0 %v1083, 64
  %v1087 = vpop.permute.xlu0 %1086
  %v1089 = vmul.f32 %v1082, %v1087
  %1091 = vrot.lane.b32.xlu0 %v1089, 32
  %v1092 = vpop.permute.xlu0 %1091
  %v1094 = vadd.f32 %v1084, %v1092
  %v1095 = vtanh.pop %v1094
  %1097 = vrot.lane.b32.xlu0 %v1095, 64
  %v1098 = vpop.permute.xlu0 %1097
  %v1100 = vmul.f32 %v1082, %v1098
  %1102 = vrot.lane.b32.xlu0 %v1100, 32
  %v1103 = vpop.permute.xlu0 %1102
  %1105 = vst.msk [vmem:[#allocation4 + $0x38] sm:$0xff] %vm355, %v1103
  %1106 = vrot.lane.b32.xlu0 %v1100, 16
  %v1107 = vpop.permute.xlu0 %1106
  %1109 = vst.msk [vmem:[#allocation5] sm:$0xff] %vm355, %v1107
  %v1110 = vld [vmem:[#allocation4] sm:$0xff]
  %v1111 = vld [vmem:[#allocation4 + $0x8] sm:$0xff]
  %v1112 = vld [vmem:[#allocation4 + $0x10] sm:$0xff]
  %v1113 = vld [vmem:[#allocation4 + $0x18] sm:$0xff]
  %v1114 = vld [vmem:[#allocation4 + $0x20] sm:$0xff]
  %v1115 = vld [vmem:[#allocation4 + $0x28] sm:$0xff]
  %v1116 = vld [vmem:[#allocation4 + $0x30] sm:$0xff]
  %v1117 = vld [vmem:[#allocation4 + $0x38] sm:$0xff]
  %v1118 = vld [vmem:[%s4] sm:$0xff]
  %v1119 = vld [vmem:[%s4 + $0x8] sm:$0xff]
  %v1120 = vld [vmem:[#allocation5] sm:$0xff]
  %v1121 = vld [vmem:[#allocation5 + $0x8] sm:$0xff]
  %v1122 = vld [vmem:[#allocation5 + $0x10] sm:$0xff]
  %v1123 = vld [vmem:[#allocation5 + $0x18] sm:$0xff]
  %v1124 = vld [vmem:[#allocation5 + $0x20] sm:$0xff]
  %v1125 = vld [vmem:[#allocation5 + $0x28] sm:$0xff]
  %v1126 = vld [vmem:[#allocation5 + $0x30] sm:$0xff]
  %v1127 = vld [vmem:[#allocation5 + $0x38] sm:$0xff]
  %v1128 = vld [vmem:[%s5] sm:$0xff]
  %v1129 = vld [vmem:[%s5 + $0x8] sm:$0xff]
  %v1131 = vsel %vm355, %v1120, 0
  %v1134 = vsel %vm355, %v1121, 0
  %v1137 = vsel %vm355, %v1122, 0
  %v1140 = vsel %vm355, %v1123, 0
  %v1143 = vsel %vm355, %v1124, 0
  %v1146 = vsel %vm355, %v1125, 0
  %v1149 = vsel %vm355, %v1126, 0
  %v1152 = vsel %vm355, %v1127, 0
  %1154 = vmatprep.subr.mxu0 0.0
  %1155 = vmatpush1.msra.mxu0 0.0
  %1156 = vmatprep.subr.mxu0 0.0
  %1157 = vmatpush1.msra.mxu0 0.0
  %1158 = vmatprep.subr.mxu0 0.0
  %1159 = vmatpush1.msra.mxu0 0.0
  %1160 = vmatprep.subr.mxu0 0.0
  %1161 = vmatpush1.msra.mxu0 0.0
  %1162 = vmatprep.subr.mxu0 0.0
  %1163 = vmatpush1.msra.mxu0 0.0
  %1164 = vmatprep.subr.mxu0 0.0
  %1165 = vmatpush1.msra.mxu0 0.0
  %1166 = vmatprep.subr.mxu0 0.0
  %1167 = vmatpush1.msra.mxu0 0.0
  %1168 = vmatprep.subr.mxu0 0.0
  %1169 = vmatpush1.msra.mxu0 0.0
  %1170 = vmatprep.subr.mxu0 0.0
  %1171 = vmatpush1.msra.mxu0 0.0
  %1172 = vmatprep.subr.mxu0 0.0
  %1173 = vmatpush1.msra.mxu0 0.0
  %1174 = vmatprep.subr.mxu0 0.0
  %1175 = vmatpush1.msra.mxu0 0.0
  %1176 = vmatprep.subr.mxu0 0.0
  %1177 = vmatpush1.msra.mxu0 0.0
  %1178 = vmatprep.subr.mxu0 0.0
  %1179 = vmatpush1.msra.mxu0 0.0
  %1180 = vmatprep.subr.mxu0 0.0
  %1181 = vmatpush1.msra.mxu0 0.0
  %1182 = vmatprep.subr.mxu0 0.0
  %1183 = vmatpush1.msra.mxu0 %v1129
  %1184 = vmatprep.subr.mxu0 0.0
  %1185 = vmatpush1.msra.mxu0 %v1128
  %1186 = vmatprep.subr.mxu0 0.0
  %1187 = vmatpush2.msra.mxu0 0.0
  %1188 = vmatprep.subr.mxu0 0.0
  %1189 = vmatpush2.msra.mxu0 0.0
  %1190 = vmatprep.subr.mxu0 0.0
  %1191 = vmatpush2.msra.mxu0 0.0
  %1192 = vmatprep.subr.mxu0 0.0
  %1193 = vmatpush2.msra.mxu0 0.0
  %1194 = vmatprep.subr.mxu0 0.0
  %1195 = vmatpush2.msra.mxu0 0.0
  %1196 = vmatprep.subr.mxu0 0.0
  %1197 = vmatpush2.msra.mxu0 0.0
  %1198 = vmatprep.subr.mxu0 0.0
  %1199 = vmatpush2.msra.mxu0 0.0
  %1200 = vmatprep.subr.mxu0 0.0
  %1201 = vmatpush2.msra.mxu0 0.0
  %1202 = vmatprep.subr.mxu0 0.0
  %1203 = vmatpush2.msra.mxu0 0.0
  %1204 = vmatprep.subr.mxu0 0.0
  %1205 = vmatpush2.msra.mxu0 0.0
  %1206 = vmatprep.subr.mxu0 0.0
  %1207 = vmatpush2.msra.mxu0 0.0
  %1208 = vmatprep.subr.mxu0 0.0
  %1209 = vmatpush2.msra.mxu0 0.0
  %1210 = vmatprep.subr.mxu0 0.0
  %1211 = vmatpush2.msra.mxu0 0.0
  %1212 = vmatprep.subr.mxu0 0.0
  %1213 = vmatpush2.msra.mxu0 0.0
  %1214 = vmatprep.subr.mxu0 0.0
  %1215 = vmatpush2.msra.mxu0 0.0
  %1216 = vmatprep.subr.mxu0 0.0
  %1217 = vmatpush2.msra.mxu0 0.0
  %1218 = vmatprep.mubr.f32.mxu0 0.0
  %1219 = vmatmul.mubr.f32.gmra.mxu0 %v1131
  %v1220 = vpop.f32.mrf.mxu0
  %v1221 = vadd.f32 0.0, %v1220
  %v1222 = vpop.f32.mrf.mxu0
  %1223 = vmatprep.mubr.f32.mxu0 0.0
  %1224 = vmatmul.mubr.f32.gmra.mxu0 %v1134
  %v1225 = vpop.f32.mrf.mxu0
  %v1226 = vadd.f32 0.0, %v1225
  %v1227 = vpop.f32.mrf.mxu0
  %1228 = vmatprep.mubr.f32.mxu0 0.0
  %1229 = vmatmul.mubr.f32.gmra.mxu0 %v1137
  %v1230 = vpop.f32.mrf.mxu0
  %v1231 = vadd.f32 0.0, %v1230
  %v1232 = vpop.f32.mrf.mxu0
  %1233 = vmatprep.mubr.f32.mxu0 0.0
  %1234 = vmatmul.mubr.f32.gmra.mxu0 %v1140
  %v1235 = vpop.f32.mrf.mxu0
  %v1236 = vadd.f32 0.0, %v1235
  %v1237 = vpop.f32.mrf.mxu0
  %1238 = vmatprep.mubr.f32.mxu0 0.0
  %1239 = vmatmul.mubr.f32.gmra.mxu0 %v1143
  %v1240 = vpop.f32.mrf.mxu0
  %v1241 = vadd.f32 0.0, %v1240
  %v1242 = vpop.f32.mrf.mxu0
  %1243 = vmatprep.mubr.f32.mxu0 0.0
  %1244 = vmatmul.mubr.f32.gmra.mxu0 %v1146
  %v1245 = vpop.f32.mrf.mxu0
  %v1246 = vadd.f32 0.0, %v1245
  %v1247 = vpop.f32.mrf.mxu0
  %1248 = vmatprep.mubr.f32.mxu0 0.0
  %1249 = vmatmul.mubr.f32.gmra.mxu0 %v1149
  %v1250 = vpop.f32.mrf.mxu0
  %v1251 = vadd.f32 0.0, %v1250
  %v1252 = vpop.f32.mrf.mxu0
  %1253 = vmatprep.mubr.f32.mxu0 0.0
  %1254 = vmatmul.mubr.f32.gmra.mxu0 %v1152
  %v1255 = vpop.f32.mrf.mxu0
  %v1256 = vadd.f32 0.0, %v1255
  %v1257 = vpop.f32.mrf.mxu0
  %1258 = vdwg.mxu0
  %v1260 = vsel %vm355, %v1110, 0
  %v1263 = vsel %vm355, %v1111, 0
  %v1266 = vsel %vm355, %v1112, 0
  %v1269 = vsel %vm355, %v1113, 0
  %v1272 = vsel %vm355, %v1114, 0
  %v1275 = vsel %vm355, %v1115, 0
  %v1278 = vsel %vm355, %v1116, 0
  %v1281 = vsel %vm355, %v1117, 0
  %1283 = vmatprep.subr.mxu0 0.0
  %1284 = vmatpush1.msra.mxu0 0.0
  %1285 = vmatprep.subr.mxu0 0.0
  %1286 = vmatpush1.msra.mxu0 0.0
  %1287 = vmatprep.subr.mxu0 0.0
  %1288 = vmatpush1.msra.mxu0 0.0
  %1289 = vmatprep.subr.mxu0 0.0
  %1290 = vmatpush1.msra.mxu0 0.0
  %1291 = vmatprep.subr.mxu0 0.0
  %1292 = vmatpush1.msra.mxu0 0.0
  %1293 = vmatprep.subr.mxu0 0.0
  %1294 = vmatpush1.msra.mxu0 0.0
  %1295 = vmatprep.subr.mxu0 0.0
  %1296 = vmatpush1.msra.mxu0 0.0
  %1297 = vmatprep.subr.mxu0 0.0
  %1298 = vmatpush1.msra.mxu0 0.0
  %1299 = vmatprep.subr.mxu0 0.0
  %1300 = vmatpush1.msra.mxu0 0.0
  %1301 = vmatprep.subr.mxu0 0.0
  %1302 = vmatpush1.msra.mxu0 0.0
  %1303 = vmatprep.subr.mxu0 0.0
  %1304 = vmatpush1.msra.mxu0 0.0
  %1305 = vmatprep.subr.mxu0 0.0
  %1306 = vmatpush1.msra.mxu0 0.0
  %1307 = vmatprep.subr.mxu0 0.0
  %1308 = vmatpush1.msra.mxu0 0.0
  %1309 = vmatprep.subr.mxu0 0.0
  %1310 = vmatpush1.msra.mxu0 0.0
  %1311 = vmatprep.subr.mxu0 0.0
  %1312 = vmatpush1.msra.mxu0 %v1119
  %1313 = vmatprep.subr.mxu0 0.0
  %1314 = vmatpush1.msra.mxu0 %v1118
  %1315 = vmatprep.subr.mxu0 0.0
  %1316 = vmatpush2.msra.mxu0 0.0
  %1317 = vmatprep.subr.mxu0 0.0
  %1318 = vmatpush2.msra.mxu0 0.0
  %1319 = vmatprep.subr.mxu0 0.0
  %1320 = vmatpush2.msra.mxu0 0.0
  %1321 = vmatprep.subr.mxu0 0.0
  %1322 = vmatpush2.msra.mxu0 0.0
  %1323 = vmatprep.subr.mxu0 0.0
  %1324 = vmatpush2.msra.mxu0 0.0
  %1325 = vmatprep.subr.mxu0 0.0
  %1326 = vmatpush2.msra.mxu0 0.0
  %1327 = vmatprep.subr.mxu0 0.0
  %1328 = vmatpush2.msra.mxu0 0.0
  %1329 = vmatprep.subr.mxu0 0.0
  %1330 = vmatpush2.msra.mxu0 0.0
  %1331 = vmatprep.subr.mxu0 0.0
  %1332 = vmatpush2.msra.mxu0 0.0
  %1333 = vmatprep.subr.mxu0 0.0
  %1334 = vmatpush2.msra.mxu0 0.0
  %1335 = vmatprep.subr.mxu0 0.0
  %1336 = vmatpush2.msra.mxu0 0.0
  %1337 = vmatprep.subr.mxu0 0.0
  %1338 = vmatpush2.msra.mxu0 0.0
  %1339 = vmatprep.subr.mxu0 0.0
  %1340 = vmatpush2.msra.mxu0 0.0
  %1341 = vmatprep.subr.mxu0 0.0
  %1342 = vmatpush2.msra.mxu0 0.0
  %1343 = vmatprep.subr.mxu0 0.0
  %1344 = vmatpush2.msra.mxu0 0.0
  %1345 = vmatprep.subr.mxu0 0.0
  %1346 = vmatpush2.msra.mxu0 0.0
  %1347 = vmatprep.mubr.f32.mxu0 0.0
  %1348 = vmatmul.mubr.f32.gmra.mxu0 %v1260
  %v1349 = vpop.f32.mrf.mxu0
  %v1350 = vadd.f32 %v1221, %v1349
  %v1351 = vpop.f32.mrf.mxu0
  %1352 = vmatprep.mubr.f32.mxu0 0.0
  %1353 = vmatmul.mubr.f32.gmra.mxu0 %v1263
  %v1354 = vpop.f32.mrf.mxu0
  %v1355 = vadd.f32 %v1226, %v1354
  %v1356 = vpop.f32.mrf.mxu0
  %1357 = vmatprep.mubr.f32.mxu0 0.0
  %1358 = vmatmul.mubr.f32.gmra.mxu0 %v1266
  %v1359 = vpop.f32.mrf.mxu0
  %v1360 = vadd.f32 %v1231, %v1359
  %v1361 = vpop.f32.mrf.mxu0
  %1362 = vmatprep.mubr.f32.mxu0 0.0
  %1363 = vmatmul.mubr.f32.gmra.mxu0 %v1269
  %v1364 = vpop.f32.mrf.mxu0
  %v1365 = vadd.f32 %v1236, %v1364
  %v1366 = vpop.f32.mrf.mxu0
  %1367 = vmatprep.mubr.f32.mxu0 0.0
  %1368 = vmatmul.mubr.f32.gmra.mxu0 %v1272
  %v1369 = vpop.f32.mrf.mxu0
  %v1370 = vadd.f32 %v1241, %v1369
  %v1371 = vpop.f32.mrf.mxu0
  %1372 = vmatprep.mubr.f32.mxu0 0.0
  %1373 = vmatmul.mubr.f32.gmra.mxu0 %v1275
  %v1374 = vpop.f32.mrf.mxu0
  %v1375 = vadd.f32 %v1246, %v1374
  %v1376 = vpop.f32.mrf.mxu0
  %1377 = vmatprep.mubr.f32.mxu0 0.0
  %1378 = vmatmul.mubr.f32.gmra.mxu0 %v1278
  %v1379 = vpop.f32.mrf.mxu0
  %v1380 = vadd.f32 %v1251, %v1379
  %v1381 = vpop.f32.mrf.mxu0
  %1382 = vmatprep.mubr.f32.mxu0 0.0
  %1383 = vmatmul.mubr.f32.gmra.mxu0 %v1281
  %v1384 = vpop.f32.mrf.mxu0
  %v1385 = vadd.f32 %v1256, %v1384
  %v1386 = vpop.f32.mrf.mxu0
  %1387 = vdwg.mxu0
  %v1388 = vld [vmem:[%s7] sm:$0x1]
  %v1390 = vlaneseq
  %v1391 = vshrl.u32 %v1390, 7
  %v1392 = vsub.s32 0, %v1391
  %v1393 = vrot.slane %v1388, %v1392
  %v1395 = vadd.f32 %v1350, %v1393
  %v1396 = vadd.f32 %v1355, %v1393
  %v1397 = vadd.f32 %v1360, %v1393
  %v1398 = vadd.f32 %v1365, %v1393
  %v1399 = vadd.f32 %v1370, %v1393
  %v1400 = vadd.f32 %v1375, %v1393
  %v1401 = vadd.f32 %v1380, %v1393
  %v1402 = vadd.f32 %v1385, %v1393
  %1403 = vst [vmem:[#allocation2] sm:$0xff] %v1395
  %1404 = vst [vmem:[#allocation2 + $0x8] sm:$0xff] %v1396
  %1405 = vst [vmem:[#allocation2 + $0x10] sm:$0xff] %v1397
  %1406 = vst [vmem:[#allocation2 + $0x18] sm:$0xff] %v1398
  %1407 = vst [vmem:[#allocation2 + $0x20] sm:$0xff] %v1399
  %1408 = vst [vmem:[#allocation2 + $0x28] sm:$0xff] %v1400
  %1409 = vst [vmem:[#allocation2 + $0x30] sm:$0xff] %v1401
  %1410 = vst [vmem:[#allocation2 + $0x38] sm:$0xff] %v1402
  %v1411 = vld [vmem:[%s6] sm:$0xff]
  %v1412 = vld [vmem:[%s6 + $0x8] sm:$0xff]
  %v1413 = vld [vmem:[%s6 + $0x10] sm:$0xff]
  %v1414 = vld [vmem:[%s6 + $0x18] sm:$0xff]
  %v1415 = vld [vmem:[#allocation2] sm:$0xff]
  %v1416 = vld [vmem:[#allocation2 + $0x38] sm:$0xff]
  %v1417 = vsel %vm58, %v1415, %v1416
  %1418 = vst [vmem:[#allocation3] sm:$0xff] %v1417
  %v1419 = vld [vmem:[#allocation2 + $0x8] sm:$0xff]
  %v1420 = vld [vmem:[#allocation2 + $0x30] sm:$0xff]
  %v1421 = vsel %vm58, %v1419, %v1420
  %1422 = vst [vmem:[#allocation3 + $0x8] sm:$0xff] %v1421
  %v1423 = vld [vmem:[#allocation2 + $0x10] sm:$0xff]
  %v1424 = vld [vmem:[#allocation2 + $0x28] sm:$0xff]
  %v1425 = vsel %vm58, %v1423, %v1424
  %1426 = vst [vmem:[#allocation3 + $0x10] sm:$0xff] %v1425
  %v1427 = vld [vmem:[#allocation2 + $0x18] sm:$0xff]
  %v1428 = vld [vmem:[#allocation2 + $0x20] sm:$0xff]
  %v1429 = vsel %vm58, %v1427, %v1428
  %1430 = vst [vmem:[#allocation3 + $0x18] sm:$0xff] %v1429
  %v1431 = vld [vmem:[#allocation2 + $0x20] sm:$0xff]
  %v1432 = vld [vmem:[#allocation2 + $0x18] sm:$0xff]
  %v1433 = vsel %vm58, %v1431, %v1432
  %1434 = vst [vmem:[#allocation3 + $0x20] sm:$0xff] %v1433
  %v1435 = vld [vmem:[#allocation2 + $0x28] sm:$0xff]
  %v1436 = vld [vmem:[#allocation2 + $0x10] sm:$0xff]
  %v1437 = vsel %vm58, %v1435, %v1436
  %1438 = vst [vmem:[#allocation3 + $0x28] sm:$0xff] %v1437
  %v1439 = vld [vmem:[#allocation2 + $0x30] sm:$0xff]
  %v1440 = vld [vmem:[#allocation2 + $0x8] sm:$0xff]
  %v1441 = vsel %vm58, %v1439, %v1440
  %1442 = vst [vmem:[#allocation3 + $0x30] sm:$0xff] %v1441
  %v1443 = vld [vmem:[#allocation2 + $0x38] sm:$0xff]
  %v1444 = vld [vmem:[#allocation2] sm:$0xff]
  %v1445 = vsel %vm58, %v1443, %v1444
  %1446 = vst [vmem:[#allocation3 + $0x38] sm:$0xff] %v1445
  %v1447 = vld [vmem:[#allocation3] sm:$0xff]
  %1448 = vmatprep.subr.mxu0 0.0
  %1449 = vmatpush1.msra.mxu0 0.0
  %1450 = vmatprep.subr.mxu0 0.0
  %1451 = vmatpush1.msra.mxu0 0.0
  %1452 = vmatprep.subr.mxu0 0.0
  %1453 = vmatpush1.msra.mxu0 0.0
  %1454 = vmatprep.subr.mxu0 0.0
  %1455 = vmatpush1.msra.mxu0 0.0
  %1456 = vmatprep.subr.mxu0 0.0
  %1457 = vmatpush1.msra.mxu0 0.0
  %1458 = vmatprep.subr.mxu0 0.0
  %1459 = vmatpush1.msra.mxu0 0.0
  %1460 = vmatprep.subr.mxu0 0.0
  %1461 = vmatpush1.msra.mxu0 0.0
  %1462 = vmatprep.subr.mxu0 0.0
  %1463 = vmatpush1.msra.mxu0 0.0
  %1464 = vmatprep.subr.mxu0 0.0
  %1465 = vmatpush1.msra.mxu0 0.0
  %1466 = vmatprep.subr.mxu0 0.0
  %1467 = vmatpush1.msra.mxu0 0.0
  %1468 = vmatprep.subr.mxu0 0.0
  %1469 = vmatpush1.msra.mxu0 0.0
  %1470 = vmatprep.subr.mxu0 0.0
  %1471 = vmatpush1.msra.mxu0 0.0
  %1472 = vmatprep.subr.mxu0 0.0
  %1473 = vmatpush1.msra.mxu0 %v1414
  %1474 = vmatprep.subr.mxu0 0.0
  %1475 = vmatpush1.msra.mxu0 %v1413
  %1476 = vmatprep.subr.mxu0 0.0
  %1477 = vmatpush1.msra.mxu0 %v1412
  %1478 = vmatprep.subr.mxu0 0.0
  %1479 = vmatpush1.msra.mxu0 %v1411
  %1480 = vmatprep.subr.mxu0 0.0
  %1481 = vmatpush2.msra.mxu0 0.0
  %1482 = vmatprep.subr.mxu0 0.0
  %1483 = vmatpush2.msra.mxu0 0.0
  %1484 = vmatprep.subr.mxu0 0.0
  %1485 = vmatpush2.msra.mxu0 0.0
  %1486 = vmatprep.subr.mxu0 0.0
  %1487 = vmatpush2.msra.mxu0 0.0
  %1488 = vmatprep.subr.mxu0 0.0
  %1489 = vmatpush2.msra.mxu0 0.0
  %1490 = vmatprep.subr.mxu0 0.0
  %1491 = vmatpush2.msra.mxu0 0.0
  %1492 = vmatprep.subr.mxu0 0.0
  %1493 = vmatpush2.msra.mxu0 0.0
  %1494 = vmatprep.subr.mxu0 0.0
  %1495 = vmatpush2.msra.mxu0 0.0
  %1496 = vmatprep.subr.mxu0 0.0
  %1497 = vmatpush2.msra.mxu0 0.0
  %1498 = vmatprep.subr.mxu0 0.0
  %1499 = vmatpush2.msra.mxu0 0.0
  %1500 = vmatprep.subr.mxu0 0.0
  %1501 = vmatpush2.msra.mxu0 0.0
  %1502 = vmatprep.subr.mxu0 0.0
  %1503 = vmatpush2.msra.mxu0 0.0
  %1504 = vmatprep.subr.mxu0 0.0
  %1505 = vmatpush2.msra.mxu0 0.0
  %1506 = vmatprep.subr.mxu0 0.0
  %1507 = vmatpush2.msra.mxu0 0.0
  %1508 = vmatprep.subr.mxu0 0.0
  %1509 = vmatpush2.msra.mxu0 0.0
  %1510 = vmatprep.subr.mxu0 0.0
  %1511 = vmatpush2.msra.mxu0 0.0
  %1512 = vmatprep.mubr.f32.mxu0 0.0
  %1513 = vmatmul.mubr.f32.gmra.mxu0 %v254
  %v1514 = vpop.f32.mrf.mxu0
  %v1515 = vadd.f32 0.0, %v1514
  %v1516 = vpop.f32.mrf.mxu0
  %1517 = vdwg.mxu0
  %v1518 = vadd.f32 %v1447, %v1515
  %v1519 = vxor.u32 %v1518, 2147483648
  %v1520 = vmul.f32 %v1519, 1.442695
  %v1521 = vpow.pop %v1520
  %v1522 = vadd.f32 %v1521, 1.0
  %v1523 = vrcp.pop %v1522
  %v1524 = vmul.f32 1.0, %v1523
  %v1525 = vtanh.pop %v1518
  %v1526 = vmul.f32 %v1524, 0.0
  %1528 = vrot.lane.b32.xlu0 %v1525, 64
  %v1529 = vpop.permute.xlu0 %1528
  %v1531 = vmul.f32 %v1524, %v1529
  %1533 = vrot.lane.b32.xlu0 %v1531, 32
  %v1534 = vpop.permute.xlu0 %1533
  %v1536 = vadd.f32 %v1526, %v1534
  %v1537 = vtanh.pop %v1536
  %1539 = vrot.lane.b32.xlu0 %v1537, 64
  %v1540 = vpop.permute.xlu0 %1539
  %v1542 = vmul.f32 %v1524, %v1540
  %1544 = vrot.lane.b32.xlu0 %v1542, 32
  %v1545 = vpop.permute.xlu0 %1544
  %1547 = vst.msk [vmem:[#allocation4] sm:$0xff] %vm355, %v1545
  %1548 = vrot.lane.b32.xlu0 %v1542, 16
  %v1549 = vpop.permute.xlu0 %1548
  %1551 = vst.msk [vmem:[#allocation5 + $0x38] sm:$0xff] %vm355, %v1549
  %v1552 = vld [vmem:[#allocation3 + $0x8] sm:$0xff]
  %v1553 = vsel %vm78, %v1545, 0
  %1555 = vmatprep.subr.mxu0 0.0
  %1556 = vmatpush1.msra.mxu0 0.0
  %1557 = vmatprep.subr.mxu0 0.0
  %1558 = vmatpush1.msra.mxu0 0.0
  %1559 = vmatprep.subr.mxu0 0.0
  %1560 = vmatpush1.msra.mxu0 0.0
  %1561 = vmatprep.subr.mxu0 0.0
  %1562 = vmatpush1.msra.mxu0 0.0
  %1563 = vmatprep.subr.mxu0 0.0
  %1564 = vmatpush1.msra.mxu0 0.0
  %1565 = vmatprep.subr.mxu0 0.0
  %1566 = vmatpush1.msra.mxu0 0.0
  %1567 = vmatprep.subr.mxu0 0.0
  %1568 = vmatpush1.msra.mxu0 0.0
  %1569 = vmatprep.subr.mxu0 0.0
  %1570 = vmatpush1.msra.mxu0 0.0
  %1571 = vmatprep.subr.mxu0 0.0
  %1572 = vmatpush1.msra.mxu0 0.0
  %1573 = vmatprep.subr.mxu0 0.0
  %1574 = vmatpush1.msra.mxu0 0.0
  %1575 = vmatprep.subr.mxu0 0.0
  %1576 = vmatpush1.msra.mxu0 0.0
  %1577 = vmatprep.subr.mxu0 0.0
  %1578 = vmatpush1.msra.mxu0 0.0
  %1579 = vmatprep.subr.mxu0 0.0
  %1580 = vmatpush1.msra.mxu0 %v1414
  %1581 = vmatprep.subr.mxu0 0.0
  %1582 = vmatpush1.msra.mxu0 %v1413
  %1583 = vmatprep.subr.mxu0 0.0
  %1584 = vmatpush1.msra.mxu0 %v1412
  %1585 = vmatprep.subr.mxu0 0.0
  %1586 = vmatpush1.msra.mxu0 %v1411
  %1587 = vmatprep.subr.mxu0 0.0
  %1588 = vmatpush2.msra.mxu0 0.0
  %1589 = vmatprep.subr.mxu0 0.0
  %1590 = vmatpush2.msra.mxu0 0.0
  %1591 = vmatprep.subr.mxu0 0.0
  %1592 = vmatpush2.msra.mxu0 0.0
  %1593 = vmatprep.subr.mxu0 0.0
  %1594 = vmatpush2.msra.mxu0 0.0
  %1595 = vmatprep.subr.mxu0 0.0
  %1596 = vmatpush2.msra.mxu0 0.0
  %1597 = vmatprep.subr.mxu0 0.0
  %1598 = vmatpush2.msra.mxu0 0.0
  %1599 = vmatprep.subr.mxu0 0.0
  %1600 = vmatpush2.msra.mxu0 0.0
  %1601 = vmatprep.subr.mxu0 0.0
  %1602 = vmatpush2.msra.mxu0 0.0
  %1603 = vmatprep.subr.mxu0 0.0
  %1604 = vmatpush2.msra.mxu0 0.0
  %1605 = vmatprep.subr.mxu0 0.0
  %1606 = vmatpush2.msra.mxu0 0.0
  %1607 = vmatprep.subr.mxu0 0.0
  %1608 = vmatpush2.msra.mxu0 0.0
  %1609 = vmatprep.subr.mxu0 0.0
  %1610 = vmatpush2.msra.mxu0 0.0
  %1611 = vmatprep.subr.mxu0 0.0
  %1612 = vmatpush2.msra.mxu0 0.0
  %1613 = vmatprep.subr.mxu0 0.0
  %1614 = vmatpush2.msra.mxu0 0.0
  %1615 = vmatprep.subr.mxu0 0.0
  %1616 = vmatpush2.msra.mxu0 0.0
  %1617 = vmatprep.subr.mxu0 0.0
  %1618 = vmatpush2.msra.mxu0 0.0
  %1619 = vmatprep.mubr.f32.mxu0 0.0
  %1620 = vmatmul.mubr.f32.gmra.mxu0 %v1553
  %v1621 = vpop.f32.mrf.mxu0
  %v1622 = vadd.f32 0.0, %v1621
  %v1623 = vpop.f32.mrf.mxu0
  %1624 = vdwg.mxu0
  %v1625 = vadd.f32 %v1552, %v1622
  %v1626 = vxor.u32 %v1625, 2147483648
  %v1627 = vmul.f32 %v1626, 1.442695
  %v1628 = vpow.pop %v1627
  %v1629 = vadd.f32 %v1628, 1.0
  %v1630 = vrcp.pop %v1629
  %v1631 = vmul.f32 1.0, %v1630
  %v1632 = vtanh.pop %v1625
  %v1633 = vmul.f32 %v1631, %v1536
  %1635 = vrot.lane.b32.xlu0 %v1632, 64
  %v1636 = vpop.permute.xlu0 %1635
  %v1638 = vmul.f32 %v1631, %v1636
  %1640 = vrot.lane.b32.xlu0 %v1638, 32
  %v1641 = vpop.permute.xlu0 %1640
  %v1643 = vadd.f32 %v1633, %v1641
  %v1644 = vtanh.pop %v1643
  %1646 = vrot.lane.b32.xlu0 %v1644, 64
  %v1647 = vpop.permute.xlu0 %1646
  %v1649 = vmul.f32 %v1631, %v1647
  %1651 = vrot.lane.b32.xlu0 %v1649, 32
  %v1652 = vpop.permute.xlu0 %1651
  %1654 = vst.msk [vmem:[#allocation4 + $0x8] sm:$0xff] %vm355, %v1652
  %1655 = vrot.lane.b32.xlu0 %v1649, 16
  %v1656 = vpop.permute.xlu0 %1655
  %1658 = vst.msk [vmem:[#allocation5 + $0x30] sm:$0xff] %vm355, %v1656
  %v1659 = vld [vmem:[#allocation3 + $0x10] sm:$0xff]
  %v1660 = vsel %vm78, %v1652, 0
  %1662 = vmatprep.subr.mxu0 0.0
  %1663 = vmatpush1.msra.mxu0 0.0
  %1664 = vmatprep.subr.mxu0 0.0
  %1665 = vmatpush1.msra.mxu0 0.0
  %1666 = vmatprep.subr.mxu0 0.0
  %1667 = vmatpush1.msra.mxu0 0.0
  %1668 = vmatprep.subr.mxu0 0.0
  %1669 = vmatpush1.msra.mxu0 0.0
  %1670 = vmatprep.subr.mxu0 0.0
  %1671 = vmatpush1.msra.mxu0 0.0
  %1672 = vmatprep.subr.mxu0 0.0
  %1673 = vmatpush1.msra.mxu0 0.0
  %1674 = vmatprep.subr.mxu0 0.0
  %1675 = vmatpush1.msra.mxu0 0.0
  %1676 = vmatprep.subr.mxu0 0.0
  %1677 = vmatpush1.msra.mxu0 0.0
  %1678 = vmatprep.subr.mxu0 0.0
  %1679 = vmatpush1.msra.mxu0 0.0
  %1680 = vmatprep.subr.mxu0 0.0
  %1681 = vmatpush1.msra.mxu0 0.0
  %1682 = vmatprep.subr.mxu0 0.0
  %1683 = vmatpush1.msra.mxu0 0.0
  %1684 = vmatprep.subr.mxu0 0.0
  %1685 = vmatpush1.msra.mxu0 0.0
  %1686 = vmatprep.subr.mxu0 0.0
  %1687 = vmatpush1.msra.mxu0 %v1414
  %1688 = vmatprep.subr.mxu0 0.0
  %1689 = vmatpush1.msra.mxu0 %v1413
  %1690 = vmatprep.subr.mxu0 0.0
  %1691 = vmatpush1.msra.mxu0 %v1412
  %1692 = vmatprep.subr.mxu0 0.0
  %1693 = vmatpush1.msra.mxu0 %v1411
  %1694 = vmatprep.subr.mxu0 0.0
  %1695 = vmatpush2.msra.mxu0 0.0
  %1696 = vmatprep.subr.mxu0 0.0
  %1697 = vmatpush2.msra.mxu0 0.0
  %1698 = vmatprep.subr.mxu0 0.0
  %1699 = vmatpush2.msra.mxu0 0.0
  %1700 = vmatprep.subr.mxu0 0.0
  %1701 = vmatpush2.msra.mxu0 0.0
  %1702 = vmatprep.subr.mxu0 0.0
  %1703 = vmatpush2.msra.mxu0 0.0
  %1704 = vmatprep.subr.mxu0 0.0
  %1705 = vmatpush2.msra.mxu0 0.0
  %1706 = vmatprep.subr.mxu0 0.0
  %1707 = vmatpush2.msra.mxu0 0.0
  %1708 = vmatprep.subr.mxu0 0.0
  %1709 = vmatpush2.msra.mxu0 0.0
  %1710 = vmatprep.subr.mxu0 0.0
  %1711 = vmatpush2.msra.mxu0 0.0
  %1712 = vmatprep.subr.mxu0 0.0
  %1713 = vmatpush2.msra.mxu0 0.0
  %1714 = vmatprep.subr.mxu0 0.0
  %1715 = vmatpush2.msra.mxu0 0.0
  %1716 = vmatprep.subr.mxu0 0.0
  %1717 = vmatpush2.msra.mxu0 0.0
  %1718 = vmatprep.subr.mxu0 0.0
  %1719 = vmatpush2.msra.mxu0 0.0
  %1720 = vmatprep.subr.mxu0 0.0
  %1721 = vmatpush2.msra.mxu0 0.0
  %1722 = vmatprep.subr.mxu0 0.0
  %1723 = vmatpush2.msra.mxu0 0.0
  %1724 = vmatprep.subr.mxu0 0.0
  %1725 = vmatpush2.msra.mxu0 0.0
  %1726 = vmatprep.mubr.f32.mxu0 0.0
  %1727 = vmatmul.mubr.f32.gmra.mxu0 %v1660
  %v1728 = vpop.f32.mrf.mxu0
  %v1729 = vadd.f32 0.0, %v1728
  %v1730 = vpop.f32.mrf.mxu0
  %1731 = vdwg.mxu0
  %v1732 = vadd.f32 %v1659, %v1729
  %v1733 = vxor.u32 %v1732, 2147483648
  %v1734 = vmul.f32 %v1733, 1.442695
  %v1735 = vpow.pop %v1734
  %v1736 = vadd.f32 %v1735, 1.0
  %v1737 = vrcp.pop %v1736
  %v1738 = vmul.f32 1.0, %v1737
  %v1739 = vtanh.pop %v1732
  %v1740 = vmul.f32 %v1738, %v1643
  %1742 = vrot.lane.b32.xlu0 %v1739, 64
  %v1743 = vpop.permute.xlu0 %1742
  %v1745 = vmul.f32 %v1738, %v1743
  %1747 = vrot.lane.b32.xlu0 %v1745, 32
  %v1748 = vpop.permute.xlu0 %1747
  %v1750 = vadd.f32 %v1740, %v1748
  %v1751 = vtanh.pop %v1750
  %1753 = vrot.lane.b32.xlu0 %v1751, 64
  %v1754 = vpop.permute.xlu0 %1753
  %v1756 = vmul.f32 %v1738, %v1754
  %1758 = vrot.lane.b32.xlu0 %v1756, 32
  %v1759 = vpop.permute.xlu0 %1758
  %1761 = vst.msk [vmem:[#allocation4 + $0x10] sm:$0xff] %vm355, %v1759
  %1762 = vrot.lane.b32.xlu0 %v1756, 16
  %v1763 = vpop.permute.xlu0 %1762
  %1765 = vst.msk [vmem:[#allocation5 + $0x28] sm:$0xff] %vm355, %v1763
  %v1766 = vld [vmem:[#allocation3 + $0x18] sm:$0xff]
  %v1767 = vsel %vm78, %v1759, 0
  %1769 = vmatprep.subr.mxu0 0.0
  %1770 = vmatpush1.msra.mxu0 0.0
  %1771 = vmatprep.subr.mxu0 0.0
  %1772 = vmatpush1.msra.mxu0 0.0
  %1773 = vmatprep.subr.mxu0 0.0
  %1774 = vmatpush1.msra.mxu0 0.0
  %1775 = vmatprep.subr.mxu0 0.0
  %1776 = vmatpush1.msra.mxu0 0.0
  %1777 = vmatprep.subr.mxu0 0.0
  %1778 = vmatpush1.msra.mxu0 0.0
  %1779 = vmatprep.subr.mxu0 0.0
  %1780 = vmatpush1.msra.mxu0 0.0
  %1781 = vmatprep.subr.mxu0 0.0
  %1782 = vmatpush1.msra.mxu0 0.0
  %1783 = vmatprep.subr.mxu0 0.0
  %1784 = vmatpush1.msra.mxu0 0.0
  %1785 = vmatprep.subr.mxu0 0.0
  %1786 = vmatpush1.msra.mxu0 0.0
  %1787 = vmatprep.subr.mxu0 0.0
  %1788 = vmatpush1.msra.mxu0 0.0
  %1789 = vmatprep.subr.mxu0 0.0
  %1790 = vmatpush1.msra.mxu0 0.0
  %1791 = vmatprep.subr.mxu0 0.0
  %1792 = vmatpush1.msra.mxu0 0.0
  %1793 = vmatprep.subr.mxu0 0.0
  %1794 = vmatpush1.msra.mxu0 %v1414
  %1795 = vmatprep.subr.mxu0 0.0
  %1796 = vmatpush1.msra.mxu0 %v1413
  %1797 = vmatprep.subr.mxu0 0.0
  %1798 = vmatpush1.msra.mxu0 %v1412
  %1799 = vmatprep.subr.mxu0 0.0
  %1800 = vmatpush1.msra.mxu0 %v1411
  %1801 = vmatprep.subr.mxu0 0.0
  %1802 = vmatpush2.msra.mxu0 0.0
  %1803 = vmatprep.subr.mxu0 0.0
  %1804 = vmatpush2.msra.mxu0 0.0
  %1805 = vmatprep.subr.mxu0 0.0
  %1806 = vmatpush2.msra.mxu0 0.0
  %1807 = vmatprep.subr.mxu0 0.0
  %1808 = vmatpush2.msra.mxu0 0.0
  %1809 = vmatprep.subr.mxu0 0.0
  %1810 = vmatpush2.msra.mxu0 0.0
  %1811 = vmatprep.subr.mxu0 0.0
  %1812 = vmatpush2.msra.mxu0 0.0
  %1813 = vmatprep.subr.mxu0 0.0
  %1814 = vmatpush2.msra.mxu0 0.0
  %1815 = vmatprep.subr.mxu0 0.0
  %1816 = vmatpush2.msra.mxu0 0.0
  %1817 = vmatprep.subr.mxu0 0.0
  %1818 = vmatpush2.msra.mxu0 0.0
  %1819 = vmatprep.subr.mxu0 0.0
  %1820 = vmatpush2.msra.mxu0 0.0
  %1821 = vmatprep.subr.mxu0 0.0
  %1822 = vmatpush2.msra.mxu0 0.0
  %1823 = vmatprep.subr.mxu0 0.0
  %1824 = vmatpush2.msra.mxu0 0.0
  %1825 = vmatprep.subr.mxu0 0.0
  %1826 = vmatpush2.msra.mxu0 0.0
  %1827 = vmatprep.subr.mxu0 0.0
  %1828 = vmatpush2.msra.mxu0 0.0
  %1829 = vmatprep.subr.mxu0 0.0
  %1830 = vmatpush2.msra.mxu0 0.0
  %1831 = vmatprep.subr.mxu0 0.0
  %1832 = vmatpush2.msra.mxu0 0.0
  %1833 = vmatprep.mubr.f32.mxu0 0.0
  %1834 = vmatmul.mubr.f32.gmra.mxu0 %v1767
  %v1835 = vpop.f32.mrf.mxu0
  %v1836 = vadd.f32 0.0, %v1835
  %v1837 = vpop.f32.mrf.mxu0
  %1838 = vdwg.mxu0
  %v1839 = vadd.f32 %v1766, %v1836
  %v1840 = vxor.u32 %v1839, 2147483648
  %v1841 = vmul.f32 %v1840, 1.442695
  %v1842 = vpow.pop %v1841
  %v1843 = vadd.f32 %v1842, 1.0
  %v1844 = vrcp.pop %v1843
  %v1845 = vmul.f32 1.0, %v1844
  %v1846 = vtanh.pop %v1839
  %v1847 = vmul.f32 %v1845, %v1750
  %1849 = vrot.lane.b32.xlu0 %v1846, 64
  %v1850 = vpop.permute.xlu0 %1849
  %v1852 = vmul.f32 %v1845, %v1850
  %1854 = vrot.lane.b32.xlu0 %v1852, 32
  %v1855 = vpop.permute.xlu0 %1854
  %v1857 = vadd.f32 %v1847, %v1855
  %v1858 = vtanh.pop %v1857
  %1860 = vrot.lane.b32.xlu0 %v1858, 64
  %v1861 = vpop.permute.xlu0 %1860
  %v1863 = vmul.f32 %v1845, %v1861
  %1865 = vrot.lane.b32.xlu0 %v1863, 32
  %v1866 = vpop.permute.xlu0 %1865
  %1868 = vst.msk [vmem:[#allocation4 + $0x18] sm:$0xff] %vm355, %v1866
  %1869 = vrot.lane.b32.xlu0 %v1863, 16
  %v1870 = vpop.permute.xlu0 %1869
  %1872 = vst.msk [vmem:[#allocation5 + $0x20] sm:$0xff] %vm355, %v1870
  %v1873 = vld [vmem:[#allocation3 + $0x20] sm:$0xff]
  %v1874 = vsel %vm78, %v1866, 0
  %1876 = vmatprep.subr.mxu0 0.0
  %1877 = vmatpush1.msra.mxu0 0.0
  %1878 = vmatprep.subr.mxu0 0.0
  %1879 = vmatpush1.msra.mxu0 0.0
  %1880 = vmatprep.subr.mxu0 0.0
  %1881 = vmatpush1.msra.mxu0 0.0
  %1882 = vmatprep.subr.mxu0 0.0
  %1883 = vmatpush1.msra.mxu0 0.0
  %1884 = vmatprep.subr.mxu0 0.0
  %1885 = vmatpush1.msra.mxu0 0.0
  %1886 = vmatprep.subr.mxu0 0.0
  %1887 = vmatpush1.msra.mxu0 0.0
  %1888 = vmatprep.subr.mxu0 0.0
  %1889 = vmatpush1.msra.mxu0 0.0
  %1890 = vmatprep.subr.mxu0 0.0
  %1891 = vmatpush1.msra.mxu0 0.0
  %1892 = vmatprep.subr.mxu0 0.0
  %1893 = vmatpush1.msra.mxu0 0.0
  %1894 = vmatprep.subr.mxu0 0.0
  %1895 = vmatpush1.msra.mxu0 0.0
  %1896 = vmatprep.subr.mxu0 0.0
  %1897 = vmatpush1.msra.mxu0 0.0
  %1898 = vmatprep.subr.mxu0 0.0
  %1899 = vmatpush1.msra.mxu0 0.0
  %1900 = vmatprep.subr.mxu0 0.0
  %1901 = vmatpush1.msra.mxu0 %v1414
  %1902 = vmatprep.subr.mxu0 0.0
  %1903 = vmatpush1.msra.mxu0 %v1413
  %1904 = vmatprep.subr.mxu0 0.0
  %1905 = vmatpush1.msra.mxu0 %v1412
  %1906 = vmatprep.subr.mxu0 0.0
  %1907 = vmatpush1.msra.mxu0 %v1411
  %1908 = vmatprep.subr.mxu0 0.0
  %1909 = vmatpush2.msra.mxu0 0.0
  %1910 = vmatprep.subr.mxu0 0.0
  %1911 = vmatpush2.msra.mxu0 0.0
  %1912 = vmatprep.subr.mxu0 0.0
  %1913 = vmatpush2.msra.mxu0 0.0
  %1914 = vmatprep.subr.mxu0 0.0
  %1915 = vmatpush2.msra.mxu0 0.0
  %1916 = vmatprep.subr.mxu0 0.0
  %1917 = vmatpush2.msra.mxu0 0.0
  %1918 = vmatprep.subr.mxu0 0.0
  %1919 = vmatpush2.msra.mxu0 0.0
  %1920 = vmatprep.subr.mxu0 0.0
  %1921 = vmatpush2.msra.mxu0 0.0
  %1922 = vmatprep.subr.mxu0 0.0
  %1923 = vmatpush2.msra.mxu0 0.0
  %1924 = vmatprep.subr.mxu0 0.0
  %1925 = vmatpush2.msra.mxu0 0.0
  %1926 = vmatprep.subr.mxu0 0.0
  %1927 = vmatpush2.msra.mxu0 0.0
  %1928 = vmatprep.subr.mxu0 0.0
  %1929 = vmatpush2.msra.mxu0 0.0
  %1930 = vmatprep.subr.mxu0 0.0
  %1931 = vmatpush2.msra.mxu0 0.0
  %1932 = vmatprep.subr.mxu0 0.0
  %1933 = vmatpush2.msra.mxu0 0.0
  %1934 = vmatprep.subr.mxu0 0.0
  %1935 = vmatpush2.msra.mxu0 0.0
  %1936 = vmatprep.subr.mxu0 0.0
  %1937 = vmatpush2.msra.mxu0 0.0
  %1938 = vmatprep.subr.mxu0 0.0
  %1939 = vmatpush2.msra.mxu0 0.0
  %1940 = vmatprep.mubr.f32.mxu0 0.0
  %1941 = vmatmul.mubr.f32.gmra.mxu0 %v1874
  %v1942 = vpop.f32.mrf.mxu0
  %v1943 = vadd.f32 0.0, %v1942
  %v1944 = vpop.f32.mrf.mxu0
  %1945 = vdwg.mxu0
  %v1946 = vadd.f32 %v1873, %v1943
  %v1947 = vxor.u32 %v1946, 2147483648
  %v1948 = vmul.f32 %v1947, 1.442695
  %v1949 = vpow.pop %v1948
  %v1950 = vadd.f32 %v1949, 1.0
  %v1951 = vrcp.pop %v1950
  %v1952 = vmul.f32 1.0, %v1951
  %v1953 = vtanh.pop %v1946
  %v1954 = vmul.f32 %v1952, %v1857
  %1956 = vrot.lane.b32.xlu0 %v1953, 64
  %v1957 = vpop.permute.xlu0 %1956
  %v1959 = vmul.f32 %v1952, %v1957
  %1961 = vrot.lane.b32.xlu0 %v1959, 32
  %v1962 = vpop.permute.xlu0 %1961
  %v1964 = vadd.f32 %v1954, %v1962
  %v1965 = vtanh.pop %v1964
  %1967 = vrot.lane.b32.xlu0 %v1965, 64
  %v1968 = vpop.permute.xlu0 %1967
  %v1970 = vmul.f32 %v1952, %v1968
  %1972 = vrot.lane.b32.xlu0 %v1970, 32
  %v1973 = vpop.permute.xlu0 %1972
  %1975 = vst.msk [vmem:[#allocation4 + $0x20] sm:$0xff] %vm355, %v1973
  %1976 = vrot.lane.b32.xlu0 %v1970, 16
  %v1977 = vpop.permute.xlu0 %1976
  %1979 = vst.msk [vmem:[#allocation5 + $0x18] sm:$0xff] %vm355, %v1977
  %v1980 = vld [vmem:[#allocation3 + $0x28] sm:$0xff]
  %v1981 = vsel %vm78, %v1973, 0
  %1983 = vmatprep.subr.mxu0 0.0
  %1984 = vmatpush1.msra.mxu0 0.0
  %1985 = vmatprep.subr.mxu0 0.0
  %1986 = vmatpush1.msra.mxu0 0.0
  %1987 = vmatprep.subr.mxu0 0.0
  %1988 = vmatpush1.msra.mxu0 0.0
  %1989 = vmatprep.subr.mxu0 0.0
  %1990 = vmatpush1.msra.mxu0 0.0
  %1991 = vmatprep.subr.mxu0 0.0
  %1992 = vmatpush1.msra.mxu0 0.0
  %1993 = vmatprep.subr.mxu0 0.0
  %1994 = vmatpush1.msra.mxu0 0.0
  %1995 = vmatprep.subr.mxu0 0.0
  %1996 = vmatpush1.msra.mxu0 0.0
  %1997 = vmatprep.subr.mxu0 0.0
  %1998 = vmatpush1.msra.mxu0 0.0
  %1999 = vmatprep.subr.mxu0 0.0
  %2000 = vmatpush1.msra.mxu0 0.0
  %2001 = vmatprep.subr.mxu0 0.0
  %2002 = vmatpush1.msra.mxu0 0.0
  %2003 = vmatprep.subr.mxu0 0.0
  %2004 = vmatpush1.msra.mxu0 0.0
  %2005 = vmatprep.subr.mxu0 0.0
  %2006 = vmatpush1.msra.mxu0 0.0
  %2007 = vmatprep.subr.mxu0 0.0
  %2008 = vmatpush1.msra.mxu0 %v1414
  %2009 = vmatprep.subr.mxu0 0.0
  %2010 = vmatpush1.msra.mxu0 %v1413
  %2011 = vmatprep.subr.mxu0 0.0
  %2012 = vmatpush1.msra.mxu0 %v1412
  %2013 = vmatprep.subr.mxu0 0.0
  %2014 = vmatpush1.msra.mxu0 %v1411
  %2015 = vmatprep.subr.mxu0 0.0
  %2016 = vmatpush2.msra.mxu0 0.0
  %2017 = vmatprep.subr.mxu0 0.0
  %2018 = vmatpush2.msra.mxu0 0.0
  %2019 = vmatprep.subr.mxu0 0.0
  %2020 = vmatpush2.msra.mxu0 0.0
  %2021 = vmatprep.subr.mxu0 0.0
  %2022 = vmatpush2.msra.mxu0 0.0
  %2023 = vmatprep.subr.mxu0 0.0
  %2024 = vmatpush2.msra.mxu0 0.0
  %2025 = vmatprep.subr.mxu0 0.0
  %2026 = vmatpush2.msra.mxu0 0.0
  %2027 = vmatprep.subr.mxu0 0.0
  %2028 = vmatpush2.msra.mxu0 0.0
  %2029 = vmatprep.subr.mxu0 0.0
  %2030 = vmatpush2.msra.mxu0 0.0
  %2031 = vmatprep.subr.mxu0 0.0
  %2032 = vmatpush2.msra.mxu0 0.0
  %2033 = vmatprep.subr.mxu0 0.0
  %2034 = vmatpush2.msra.mxu0 0.0
  %2035 = vmatprep.subr.mxu0 0.0
  %2036 = vmatpush2.msra.mxu0 0.0
  %2037 = vmatprep.subr.mxu0 0.0
  %2038 = vmatpush2.msra.mxu0 0.0
  %2039 = vmatprep.subr.mxu0 0.0
  %2040 = vmatpush2.msra.mxu0 0.0
  %2041 = vmatprep.subr.mxu0 0.0
  %2042 = vmatpush2.msra.mxu0 0.0
  %2043 = vmatprep.subr.mxu0 0.0
  %2044 = vmatpush2.msra.mxu0 0.0
  %2045 = vmatprep.subr.mxu0 0.0
  %2046 = vmatpush2.msra.mxu0 0.0
  %2047 = vmatprep.mubr.f32.mxu0 0.0
  %2048 = vmatmul.mubr.f32.gmra.mxu0 %v1981
  %v2049 = vpop.f32.mrf.mxu0
  %v2050 = vadd.f32 0.0, %v2049
  %v2051 = vpop.f32.mrf.mxu0
  %2052 = vdwg.mxu0
  %v2053 = vadd.f32 %v1980, %v2050
  %v2054 = vxor.u32 %v2053, 2147483648
  %v2055 = vmul.f32 %v2054, 1.442695
  %v2056 = vpow.pop %v2055
  %v2057 = vadd.f32 %v2056, 1.0
  %v2058 = vrcp.pop %v2057
  %v2059 = vmul.f32 1.0, %v2058
  %v2060 = vtanh.pop %v2053
  %v2061 = vmul.f32 %v2059, %v1964
  %2063 = vrot.lane.b32.xlu0 %v2060, 64
  %v2064 = vpop.permute.xlu0 %2063
  %v2066 = vmul.f32 %v2059, %v2064
  %2068 = vrot.lane.b32.xlu0 %v2066, 32
  %v2069 = vpop.permute.xlu0 %2068
  %v2071 = vadd.f32 %v2061, %v2069
  %v2072 = vtanh.pop %v2071
  %2074 = vrot.lane.b32.xlu0 %v2072, 64
  %v2075 = vpop.permute.xlu0 %2074
  %v2077 = vmul.f32 %v2059, %v2075
  %2079 = vrot.lane.b32.xlu0 %v2077, 32
  %v2080 = vpop.permute.xlu0 %2079
  %2082 = vst.msk [vmem:[#allocation4 + $0x28] sm:$0xff] %vm355, %v2080
  %2083 = vrot.lane.b32.xlu0 %v2077, 16
  %v2084 = vpop.permute.xlu0 %2083
  %2086 = vst.msk [vmem:[#allocation5 + $0x10] sm:$0xff] %vm355, %v2084
  %v2087 = vld [vmem:[#allocation3 + $0x30] sm:$0xff]
  %v2088 = vsel %vm78, %v2080, 0
  %2090 = vmatprep.subr.mxu0 0.0
  %2091 = vmatpush1.msra.mxu0 0.0
  %2092 = vmatprep.subr.mxu0 0.0
  %2093 = vmatpush1.msra.mxu0 0.0
  %2094 = vmatprep.subr.mxu0 0.0
  %2095 = vmatpush1.msra.mxu0 0.0
  %2096 = vmatprep.subr.mxu0 0.0
  %2097 = vmatpush1.msra.mxu0 0.0
  %2098 = vmatprep.subr.mxu0 0.0
  %2099 = vmatpush1.msra.mxu0 0.0
  %2100 = vmatprep.subr.mxu0 0.0
  %2101 = vmatpush1.msra.mxu0 0.0
  %2102 = vmatprep.subr.mxu0 0.0
  %2103 = vmatpush1.msra.mxu0 0.0
  %2104 = vmatprep.subr.mxu0 0.0
  %2105 = vmatpush1.msra.mxu0 0.0
  %2106 = vmatprep.subr.mxu0 0.0
  %2107 = vmatpush1.msra.mxu0 0.0
  %2108 = vmatprep.subr.mxu0 0.0
  %2109 = vmatpush1.msra.mxu0 0.0
  %2110 = vmatprep.subr.mxu0 0.0
  %2111 = vmatpush1.msra.mxu0 0.0
  %2112 = vmatprep.subr.mxu0 0.0
  %2113 = vmatpush1.msra.mxu0 0.0
  %2114 = vmatprep.subr.mxu0 0.0
  %2115 = vmatpush1.msra.mxu0 %v1414
  %2116 = vmatprep.subr.mxu0 0.0
  %2117 = vmatpush1.msra.mxu0 %v1413
  %2118 = vmatprep.subr.mxu0 0.0
  %2119 = vmatpush1.msra.mxu0 %v1412
  %2120 = vmatprep.subr.mxu0 0.0
  %2121 = vmatpush1.msra.mxu0 %v1411
  %2122 = vmatprep.subr.mxu0 0.0
  %2123 = vmatpush2.msra.mxu0 0.0
  %2124 = vmatprep.subr.mxu0 0.0
  %2125 = vmatpush2.msra.mxu0 0.0
  %2126 = vmatprep.subr.mxu0 0.0
  %2127 = vmatpush2.msra.mxu0 0.0
  %2128 = vmatprep.subr.mxu0 0.0
  %2129 = vmatpush2.msra.mxu0 0.0
  %2130 = vmatprep.subr.mxu0 0.0
  %2131 = vmatpush2.msra.mxu0 0.0
  %2132 = vmatprep.subr.mxu0 0.0
  %2133 = vmatpush2.msra.mxu0 0.0
  %2134 = vmatprep.subr.mxu0 0.0
  %2135 = vmatpush2.msra.mxu0 0.0
  %2136 = vmatprep.subr.mxu0 0.0
  %2137 = vmatpush2.msra.mxu0 0.0
  %2138 = vmatprep.subr.mxu0 0.0
  %2139 = vmatpush2.msra.mxu0 0.0
  %2140 = vmatprep.subr.mxu0 0.0
  %2141 = vmatpush2.msra.mxu0 0.0
  %2142 = vmatprep.subr.mxu0 0.0
  %2143 = vmatpush2.msra.mxu0 0.0
  %2144 = vmatprep.subr.mxu0 0.0
  %2145 = vmatpush2.msra.mxu0 0.0
  %2146 = vmatprep.subr.mxu0 0.0
  %2147 = vmatpush2.msra.mxu0 0.0
  %2148 = vmatprep.subr.mxu0 0.0
  %2149 = vmatpush2.msra.mxu0 0.0
  %2150 = vmatprep.subr.mxu0 0.0
  %2151 = vmatpush2.msra.mxu0 0.0
  %2152 = vmatprep.subr.mxu0 0.0
  %2153 = vmatpush2.msra.mxu0 0.0
  %2154 = vmatprep.mubr.f32.mxu0 0.0
  %2155 = vmatmul.mubr.f32.gmra.mxu0 %v2088
  %v2156 = vpop.f32.mrf.mxu0
  %v2157 = vadd.f32 0.0, %v2156
  %v2158 = vpop.f32.mrf.mxu0
  %2159 = vdwg.mxu0
  %v2160 = vadd.f32 %v2087, %v2157
  %v2161 = vxor.u32 %v2160, 2147483648
  %v2162 = vmul.f32 %v2161, 1.442695
  %v2163 = vpow.pop %v2162
  %v2164 = vadd.f32 %v2163, 1.0
  %v2165 = vrcp.pop %v2164
  %v2166 = vmul.f32 1.0, %v2165
  %v2167 = vtanh.pop %v2160
  %v2168 = vmul.f32 %v2166, %v2071
  %2170 = vrot.lane.b32.xlu0 %v2167, 64
  %v2171 = vpop.permute.xlu0 %2170
  %v2173 = vmul.f32 %v2166, %v2171
  %2175 = vrot.lane.b32.xlu0 %v2173, 32
  %v2176 = vpop.permute.xlu0 %2175
  %v2178 = vadd.f32 %v2168, %v2176
  %v2179 = vtanh.pop %v2178
  %2181 = vrot.lane.b32.xlu0 %v2179, 64
  %v2182 = vpop.permute.xlu0 %2181
  %v2184 = vmul.f32 %v2166, %v2182
  %2186 = vrot.lane.b32.xlu0 %v2184, 32
  %v2187 = vpop.permute.xlu0 %2186
  %2189 = vst.msk [vmem:[#allocation4 + $0x30] sm:$0xff] %vm355, %v2187
  %2190 = vrot.lane.b32.xlu0 %v2184, 16
  %v2191 = vpop.permute.xlu0 %2190
  %2193 = vst.msk [vmem:[#allocation5 + $0x8] sm:$0xff] %vm355, %v2191
  %v2194 = vld [vmem:[#allocation3 + $0x38] sm:$0xff]
  %v2195 = vsel %vm78, %v2187, 0
  %2197 = vmatprep.subr.mxu0 0.0
  %2198 = vmatpush1.msra.mxu0 0.0
  %2199 = vmatprep.subr.mxu0 0.0
  %2200 = vmatpush1.msra.mxu0 0.0
  %2201 = vmatprep.subr.mxu0 0.0
  %2202 = vmatpush1.msra.mxu0 0.0
  %2203 = vmatprep.subr.mxu0 0.0
  %2204 = vmatpush1.msra.mxu0 0.0
  %2205 = vmatprep.subr.mxu0 0.0
  %2206 = vmatpush1.msra.mxu0 0.0
  %2207 = vmatprep.subr.mxu0 0.0
  %2208 = vmatpush1.msra.mxu0 0.0
  %2209 = vmatprep.subr.mxu0 0.0
  %2210 = vmatpush1.msra.mxu0 0.0
  %2211 = vmatprep.subr.mxu0 0.0
  %2212 = vmatpush1.msra.mxu0 0.0
  %2213 = vmatprep.subr.mxu0 0.0
  %2214 = vmatpush1.msra.mxu0 0.0
  %2215 = vmatprep.subr.mxu0 0.0
  %2216 = vmatpush1.msra.mxu0 0.0
  %2217 = vmatprep.subr.mxu0 0.0
  %2218 = vmatpush1.msra.mxu0 0.0
  %2219 = vmatprep.subr.mxu0 0.0
  %2220 = vmatpush1.msra.mxu0 0.0
  %2221 = vmatprep.subr.mxu0 0.0
  %2222 = vmatpush1.msra.mxu0 %v1414
  %2223 = vmatprep.subr.mxu0 0.0
  %2224 = vmatpush1.msra.mxu0 %v1413
  %2225 = vmatprep.subr.mxu0 0.0
  %2226 = vmatpush1.msra.mxu0 %v1412
  %2227 = vmatprep.subr.mxu0 0.0
  %2228 = vmatpush1.msra.mxu0 %v1411
  %2229 = vmatprep.subr.mxu0 0.0
  %2230 = vmatpush2.msra.mxu0 0.0
  %2231 = vmatprep.subr.mxu0 0.0
  %2232 = vmatpush2.msra.mxu0 0.0
  %2233 = vmatprep.subr.mxu0 0.0
  %2234 = vmatpush2.msra.mxu0 0.0
  %2235 = vmatprep.subr.mxu0 0.0
  %2236 = vmatpush2.msra.mxu0 0.0
  %2237 = vmatprep.subr.mxu0 0.0
  %2238 = vmatpush2.msra.mxu0 0.0
  %2239 = vmatprep.subr.mxu0 0.0
  %2240 = vmatpush2.msra.mxu0 0.0
  %2241 = vmatprep.subr.mxu0 0.0
  %2242 = vmatpush2.msra.mxu0 0.0
  %2243 = vmatprep.subr.mxu0 0.0
  %2244 = vmatpush2.msra.mxu0 0.0
  %2245 = vmatprep.subr.mxu0 0.0
  %2246 = vmatpush2.msra.mxu0 0.0
  %2247 = vmatprep.subr.mxu0 0.0
  %2248 = vmatpush2.msra.mxu0 0.0
  %2249 = vmatprep.subr.mxu0 0.0
  %2250 = vmatpush2.msra.mxu0 0.0
  %2251 = vmatprep.subr.mxu0 0.0
  %2252 = vmatpush2.msra.mxu0 0.0
  %2253 = vmatprep.subr.mxu0 0.0
  %2254 = vmatpush2.msra.mxu0 0.0
  %2255 = vmatprep.subr.mxu0 0.0
  %2256 = vmatpush2.msra.mxu0 0.0
  %2257 = vmatprep.subr.mxu0 0.0
  %2258 = vmatpush2.msra.mxu0 0.0
  %2259 = vmatprep.subr.mxu0 0.0
  %2260 = vmatpush2.msra.mxu0 0.0
  %2261 = vmatprep.mubr.f32.mxu0 0.0
  %2262 = vmatmul.mubr.f32.gmra.mxu0 %v2195
  %v2263 = vpop.f32.mrf.mxu0
  %v2264 = vadd.f32 0.0, %v2263
  %v2265 = vpop.f32.mrf.mxu0
  %2266 = vdwg.mxu0
  %v2267 = vadd.f32 %v2194, %v2264
  %v2268 = vxor.u32 %v2267, 2147483648
  %v2269 = vmul.f32 %v2268, 1.442695
  %v2270 = vpow.pop %v2269
  %v2271 = vadd.f32 %v2270, 1.0
  %v2272 = vrcp.pop %v2271
  %v2273 = vmul.f32 1.0, %v2272
  %v2274 = vtanh.pop %v2267
  %v2275 = vmul.f32 %v2273, %v2178
  %2277 = vrot.lane.b32.xlu0 %v2274, 64
  %v2278 = vpop.permute.xlu0 %2277
  %v2280 = vmul.f32 %v2273, %v2278
  %2282 = vrot.lane.b32.xlu0 %v2280, 32
  %v2283 = vpop.permute.xlu0 %2282
  %v2285 = vadd.f32 %v2275, %v2283
  %v2286 = vtanh.pop %v2285
  %2288 = vrot.lane.b32.xlu0 %v2286, 64
  %v2289 = vpop.permute.xlu0 %2288
  %v2291 = vmul.f32 %v2273, %v2289
  %2293 = vrot.lane.b32.xlu0 %v2291, 32
  %v2294 = vpop.permute.xlu0 %2293
  %2296 = vst.msk [vmem:[#allocation4 + $0x38] sm:$0xff] %vm355, %v2294
  %2297 = vrot.lane.b32.xlu0 %v2291, 16
  %v2298 = vpop.permute.xlu0 %2297
  %2300 = vst.msk [vmem:[#allocation5] sm:$0xff] %vm355, %v2298
  %v2301 = vld [vmem:[#allocation4] sm:$0xff]
  %v2302 = vld [vmem:[#allocation4 + $0x8] sm:$0xff]
  %v2303 = vld [vmem:[#allocation4 + $0x10] sm:$0xff]
  %v2304 = vld [vmem:[#allocation4 + $0x18] sm:$0xff]
  %v2305 = vld [vmem:[#allocation4 + $0x20] sm:$0xff]
  %v2306 = vld [vmem:[#allocation4 + $0x28] sm:$0xff]
  %v2307 = vld [vmem:[#allocation4 + $0x30] sm:$0xff]
  %v2308 = vld [vmem:[#allocation4 + $0x38] sm:$0xff]
  %v2309 = vld [vmem:[%s8] sm:$0xff]
  %v2310 = vld [vmem:[%s8 + $0x8] sm:$0xff]
  %v2311 = vld [vmem:[#allocation5] sm:$0xff]
  %v2312 = vld [vmem:[#allocation5 + $0x8] sm:$0xff]
  %v2313 = vld [vmem:[#allocation5 + $0x10] sm:$0xff]
  %v2314 = vld [vmem:[#allocation5 + $0x18] sm:$0xff]
  %v2315 = vld [vmem:[#allocation5 + $0x20] sm:$0xff]
  %v2316 = vld [vmem:[#allocation5 + $0x28] sm:$0xff]
  %v2317 = vld [vmem:[#allocation5 + $0x30] sm:$0xff]
  %v2318 = vld [vmem:[#allocation5 + $0x38] sm:$0xff]
  %v2319 = vld [vmem:[%s9] sm:$0xff]
  %v2320 = vld [vmem:[%s9 + $0x8] sm:$0xff]
  %v2322 = vsel %vm355, %v2311, 0
  %v2325 = vsel %vm355, %v2312, 0
  %v2328 = vsel %vm355, %v2313, 0
  %v2331 = vsel %vm355, %v2314, 0
  %v2334 = vsel %vm355, %v2315, 0
  %v2337 = vsel %vm355, %v2316, 0
  %v2340 = vsel %vm355, %v2317, 0
  %v2343 = vsel %vm355, %v2318, 0
  %2345 = vmatprep.subr.mxu0 0.0
  %2346 = vmatpush1.msra.mxu0 0.0
  %2347 = vmatprep.subr.mxu0 0.0
  %2348 = vmatpush1.msra.mxu0 0.0
  %2349 = vmatprep.subr.mxu0 0.0
  %2350 = vmatpush1.msra.mxu0 0.0
  %2351 = vmatprep.subr.mxu0 0.0
  %2352 = vmatpush1.msra.mxu0 0.0
  %2353 = vmatprep.subr.mxu0 0.0
  %2354 = vmatpush1.msra.mxu0 0.0
  %2355 = vmatprep.subr.mxu0 0.0
  %2356 = vmatpush1.msra.mxu0 0.0
  %2357 = vmatprep.subr.mxu0 0.0
  %2358 = vmatpush1.msra.mxu0 0.0
  %2359 = vmatprep.subr.mxu0 0.0
  %2360 = vmatpush1.msra.mxu0 0.0
  %2361 = vmatprep.subr.mxu0 0.0
  %2362 = vmatpush1.msra.mxu0 0.0
  %2363 = vmatprep.subr.mxu0 0.0
  %2364 = vmatpush1.msra.mxu0 0.0
  %2365 = vmatprep.subr.mxu0 0.0
  %2366 = vmatpush1.msra.mxu0 0.0
  %2367 = vmatprep.subr.mxu0 0.0
  %2368 = vmatpush1.msra.mxu0 0.0
  %2369 = vmatprep.subr.mxu0 0.0
  %2370 = vmatpush1.msra.mxu0 0.0
  %2371 = vmatprep.subr.mxu0 0.0
  %2372 = vmatpush1.msra.mxu0 0.0
  %2373 = vmatprep.subr.mxu0 0.0
  %2374 = vmatpush1.msra.mxu0 %v2320
  %2375 = vmatprep.subr.mxu0 0.0
  %2376 = vmatpush1.msra.mxu0 %v2319
  %2377 = vmatprep.subr.mxu0 0.0
  %2378 = vmatpush2.msra.mxu0 0.0
  %2379 = vmatprep.subr.mxu0 0.0
  %2380 = vmatpush2.msra.mxu0 0.0
  %2381 = vmatprep.subr.mxu0 0.0
  %2382 = vmatpush2.msra.mxu0 0.0
  %2383 = vmatprep.subr.mxu0 0.0
  %2384 = vmatpush2.msra.mxu0 0.0
  %2385 = vmatprep.subr.mxu0 0.0
  %2386 = vmatpush2.msra.mxu0 0.0
  %2387 = vmatprep.subr.mxu0 0.0
  %2388 = vmatpush2.msra.mxu0 0.0
  %2389 = vmatprep.subr.mxu0 0.0
  %2390 = vmatpush2.msra.mxu0 0.0
  %2391 = vmatprep.subr.mxu0 0.0
  %2392 = vmatpush2.msra.mxu0 0.0
  %2393 = vmatprep.subr.mxu0 0.0
  %2394 = vmatpush2.msra.mxu0 0.0
  %2395 = vmatprep.subr.mxu0 0.0
  %2396 = vmatpush2.msra.mxu0 0.0
  %2397 = vmatprep.subr.mxu0 0.0
  %2398 = vmatpush2.msra.mxu0 0.0
  %2399 = vmatprep.subr.mxu0 0.0
  %2400 = vmatpush2.msra.mxu0 0.0
  %2401 = vmatprep.subr.mxu0 0.0
  %2402 = vmatpush2.msra.mxu0 0.0
  %2403 = vmatprep.subr.mxu0 0.0
  %2404 = vmatpush2.msra.mxu0 0.0
  %2405 = vmatprep.subr.mxu0 0.0
  %2406 = vmatpush2.msra.mxu0 0.0
  %2407 = vmatprep.subr.mxu0 0.0
  %2408 = vmatpush2.msra.mxu0 0.0
  %2409 = vmatprep.mubr.f32.mxu0 0.0
  %2410 = vmatmul.mubr.f32.gmra.mxu0 %v2322
  %v2411 = vpop.f32.mrf.mxu0
  %v2412 = vadd.f32 0.0, %v2411
  %v2413 = vpop.f32.mrf.mxu0
  %2414 = vmatprep.mubr.f32.mxu0 0.0
  %2415 = vmatmul.mubr.f32.gmra.mxu0 %v2325
  %v2416 = vpop.f32.mrf.mxu0
  %v2417 = vadd.f32 0.0, %v2416
  %v2418 = vpop.f32.mrf.mxu0
  %2419 = vmatprep.mubr.f32.mxu0 0.0
  %2420 = vmatmul.mubr.f32.gmra.mxu0 %v2328
  %v2421 = vpop.f32.mrf.mxu0
  %v2422 = vadd.f32 0.0, %v2421
  %v2423 = vpop.f32.mrf.mxu0
  %2424 = vmatprep.mubr.f32.mxu0 0.0
  %2425 = vmatmul.mubr.f32.gmra.mxu0 %v2331
  %v2426 = vpop.f32.mrf.mxu0
  %v2427 = vadd.f32 0.0, %v2426
  %v2428 = vpop.f32.mrf.mxu0
  %2429 = vmatprep.mubr.f32.mxu0 0.0
  %2430 = vmatmul.mubr.f32.gmra.mxu0 %v2334
  %v2431 = vpop.f32.mrf.mxu0
  %v2432 = vadd.f32 0.0, %v2431
  %v2433 = vpop.f32.mrf.mxu0
  %2434 = vmatprep.mubr.f32.mxu0 0.0
  %2435 = vmatmul.mubr.f32.gmra.mxu0 %v2337
  %v2436 = vpop.f32.mrf.mxu0
  %v2437 = vadd.f32 0.0, %v2436
  %v2438 = vpop.f32.mrf.mxu0
  %2439 = vmatprep.mubr.f32.mxu0 0.0
  %2440 = vmatmul.mubr.f32.gmra.mxu0 %v2340
  %v2441 = vpop.f32.mrf.mxu0
  %v2442 = vadd.f32 0.0, %v2441
  %v2443 = vpop.f32.mrf.mxu0
  %2444 = vmatprep.mubr.f32.mxu0 0.0
  %2445 = vmatmul.mubr.f32.gmra.mxu0 %v2343
  %v2446 = vpop.f32.mrf.mxu0
  %v2447 = vadd.f32 0.0, %v2446
  %v2448 = vpop.f32.mrf.mxu0
  %2449 = vdwg.mxu0
  %v2451 = vsel %vm355, %v2301, 0
  %v2454 = vsel %vm355, %v2302, 0
  %v2457 = vsel %vm355, %v2303, 0
  %v2460 = vsel %vm355, %v2304, 0
  %v2463 = vsel %vm355, %v2305, 0
  %v2466 = vsel %vm355, %v2306, 0
  %v2469 = vsel %vm355, %v2307, 0
  %v2472 = vsel %vm355, %v2308, 0
  %2474 = vmatprep.subr.mxu0 0.0
  %2475 = vmatpush1.msra.mxu0 0.0
  %2476 = vmatprep.subr.mxu0 0.0
  %2477 = vmatpush1.msra.mxu0 0.0
  %2478 = vmatprep.subr.mxu0 0.0
  %2479 = vmatpush1.msra.mxu0 0.0
  %2480 = vmatprep.subr.mxu0 0.0
  %2481 = vmatpush1.msra.mxu0 0.0
  %2482 = vmatprep.subr.mxu0 0.0
  %2483 = vmatpush1.msra.mxu0 0.0
  %2484 = vmatprep.subr.mxu0 0.0
  %2485 = vmatpush1.msra.mxu0 0.0
  %2486 = vmatprep.subr.mxu0 0.0
  %2487 = vmatpush1.msra.mxu0 0.0
  %2488 = vmatprep.subr.mxu0 0.0
  %2489 = vmatpush1.msra.mxu0 0.0
  %2490 = vmatprep.subr.mxu0 0.0
  %2491 = vmatpush1.msra.mxu0 0.0
  %2492 = vmatprep.subr.mxu0 0.0
  %2493 = vmatpush1.msra.mxu0 0.0
  %2494 = vmatprep.subr.mxu0 0.0
  %2495 = vmatpush1.msra.mxu0 0.0
  %2496 = vmatprep.subr.mxu0 0.0
  %2497 = vmatpush1.msra.mxu0 0.0
  %2498 = vmatprep.subr.mxu0 0.0
  %2499 = vmatpush1.msra.mxu0 0.0
  %2500 = vmatprep.subr.mxu0 0.0
  %2501 = vmatpush1.msra.mxu0 0.0
  %2502 = vmatprep.subr.mxu0 0.0
  %2503 = vmatpush1.msra.mxu0 %v2310
  %2504 = vmatprep.subr.mxu0 0.0
  %2505 = vmatpush1.msra.mxu0 %v2309
  %2506 = vmatprep.subr.mxu0 0.0
  %2507 = vmatpush2.msra.mxu0 0.0
  %2508 = vmatprep.subr.mxu0 0.0
  %2509 = vmatpush2.msra.mxu0 0.0
  %2510 = vmatprep.subr.mxu0 0.0
  %2511 = vmatpush2.msra.mxu0 0.0
  %2512 = vmatprep.subr.mxu0 0.0
  %2513 = vmatpush2.msra.mxu0 0.0
  %2514 = vmatprep.subr.mxu0 0.0
  %2515 = vmatpush2.msra.mxu0 0.0
  %2516 = vmatprep.subr.mxu0 0.0
  %2517 = vmatpush2.msra.mxu0 0.0
  %2518 = vmatprep.subr.mxu0 0.0
  %2519 = vmatpush2.msra.mxu0 0.0
  %2520 = vmatprep.subr.mxu0 0.0
  %2521 = vmatpush2.msra.mxu0 0.0
  %2522 = vmatprep.subr.mxu0 0.0
  %2523 = vmatpush2.msra.mxu0 0.0
  %2524 = vmatprep.subr.mxu0 0.0
  %2525 = vmatpush2.msra.mxu0 0.0
  %2526 = vmatprep.subr.mxu0 0.0
  %2527 = vmatpush2.msra.mxu0 0.0
  %2528 = vmatprep.subr.mxu0 0.0
  %2529 = vmatpush2.msra.mxu0 0.0
  %2530 = vmatprep.subr.mxu0 0.0
  %2531 = vmatpush2.msra.mxu0 0.0
  %2532 = vmatprep.subr.mxu0 0.0
  %2533 = vmatpush2.msra.mxu0 0.0
  %2534 = vmatprep.subr.mxu0 0.0
  %2535 = vmatpush2.msra.mxu0 0.0
  %2536 = vmatprep.subr.mxu0 0.0
  %2537 = vmatpush2.msra.mxu0 0.0
  %2538 = vmatprep.mubr.f32.mxu0 0.0
  %2539 = vmatmul.mubr.f32.gmra.mxu0 %v2451
  %v2540 = vpop.f32.mrf.mxu0
  %v2541 = vadd.f32 %v2412, %v2540
  %v2542 = vpop.f32.mrf.mxu0
  %2543 = vmatprep.mubr.f32.mxu0 0.0
  %2544 = vmatmul.mubr.f32.gmra.mxu0 %v2454
  %v2545 = vpop.f32.mrf.mxu0
  %v2546 = vadd.f32 %v2417, %v2545
  %v2547 = vpop.f32.mrf.mxu0
  %2548 = vmatprep.mubr.f32.mxu0 0.0
  %2549 = vmatmul.mubr.f32.gmra.mxu0 %v2457
  %v2550 = vpop.f32.mrf.mxu0
  %v2551 = vadd.f32 %v2422, %v2550
  %v2552 = vpop.f32.mrf.mxu0
  %2553 = vmatprep.mubr.f32.mxu0 0.0
  %2554 = vmatmul.mubr.f32.gmra.mxu0 %v2460
  %v2555 = vpop.f32.mrf.mxu0
  %v2556 = vadd.f32 %v2427, %v2555
  %v2557 = vpop.f32.mrf.mxu0
  %2558 = vmatprep.mubr.f32.mxu0 0.0
  %2559 = vmatmul.mubr.f32.gmra.mxu0 %v2463
  %v2560 = vpop.f32.mrf.mxu0
  %v2561 = vadd.f32 %v2432, %v2560
  %v2562 = vpop.f32.mrf.mxu0
  %2563 = vmatprep.mubr.f32.mxu0 0.0
  %2564 = vmatmul.mubr.f32.gmra.mxu0 %v2466
  %v2565 = vpop.f32.mrf.mxu0
  %v2566 = vadd.f32 %v2437, %v2565
  %v2567 = vpop.f32.mrf.mxu0
  %2568 = vmatprep.mubr.f32.mxu0 0.0
  %2569 = vmatmul.mubr.f32.gmra.mxu0 %v2469
  %v2570 = vpop.f32.mrf.mxu0
  %v2571 = vadd.f32 %v2442, %v2570
  %v2572 = vpop.f32.mrf.mxu0
  %2573 = vmatprep.mubr.f32.mxu0 0.0
  %2574 = vmatmul.mubr.f32.gmra.mxu0 %v2472
  %v2575 = vpop.f32.mrf.mxu0
  %v2576 = vadd.f32 %v2447, %v2575
  %v2577 = vpop.f32.mrf.mxu0
  %2578 = vdwg.mxu0
  %v2579 = vld [vmem:[%s10] sm:$0x1]
  %v2581 = vlaneseq
  %v2582 = vshrl.u32 %v2581, 7
  %v2583 = vsub.s32 0, %v2582
  %v2584 = vrot.slane %v2579, %v2583
  %v2586 = vadd.f32 %v2541, %v2584
  %v2587 = vadd.f32 %v2546, %v2584
  %v2588 = vadd.f32 %v2551, %v2584
  %v2589 = vadd.f32 %v2556, %v2584
  %v2590 = vadd.f32 %v2561, %v2584
  %v2591 = vadd.f32 %v2566, %v2584
  %v2592 = vadd.f32 %v2571, %v2584
  %v2593 = vadd.f32 %v2576, %v2584
  %v2594 = vmax.f32 %v2586, 0.0
  %v2595 = vmax.f32 %v2587, 0.0
  %v2596 = vmax.f32 %v2588, 0.0
  %v2597 = vmax.f32 %v2589, 0.0
  %v2598 = vmax.f32 %v2590, 0.0
  %v2599 = vmax.f32 %v2591, 0.0
  %v2600 = vmax.f32 %v2592, 0.0
  %v2601 = vmax.f32 %v2593, 0.0
  %v2602 = vld [vmem:[%s11] sm:$0xff]
  %v2603 = vld [vmem:[%s11 + $0x8] sm:$0xff]
  %v2604 = vld [vmem:[%s11 + $0x10] sm:$0xff]
  %v2605 = vld [vmem:[%s11 + $0x18] sm:$0xff]
  %v2606 = vld [vmem:[%s11 + $0x20] sm:$0xff]
  %v2607 = vld [vmem:[%s11 + $0x28] sm:$0xff]
  %v2608 = vld [vmem:[%s11 + $0x30] sm:$0xff]
  %v2609 = vld [vmem:[%s11 + $0x38] sm:$0xff]
  %v2610 = vld [vmem:[%s12] sm:$0x1]
  %v2612 = vlaneseq
  %v2613 = vshrl.u32 %v2612, 7
  %v2614 = vsub.s32 0, %v2613
  %v2615 = vrot.slane %v2610, %v2614
  %vm2617 = vcmask 523264
  %v2619 = vsel %vm2617, %v2594, 0
  %v2622 = vsel %vm2617, %v2595, 0
  %v2625 = vsel %vm2617, %v2596, 0
  %v2628 = vsel %vm2617, %v2597, 0
  %v2631 = vsel %vm2617, %v2598, 0
  %v2634 = vsel %vm2617, %v2599, 0
  %v2637 = vsel %vm2617, %v2600, 0
  %v2640 = vsel %vm2617, %v2601, 0
  %2642 = vmatprep.subr.mxu0 0.0
  %2643 = vmatpush1.msra.mxu0 0.0
  %2644 = vmatprep.subr.mxu0 0.0
  %2645 = vmatpush1.msra.mxu0 0.0
  %2646 = vmatprep.subr.mxu0 0.0
  %2647 = vmatpush1.msra.mxu0 0.0
  %2648 = vmatprep.subr.mxu0 0.0
  %2649 = vmatpush1.msra.mxu0 0.0
  %2650 = vmatprep.subr.mxu0 0.0
  %2651 = vmatpush1.msra.mxu0 0.0
  %2652 = vmatprep.subr.mxu0 0.0
  %2653 = vmatpush1.msra.mxu0 0.0
  %2654 = vmatprep.subr.mxu0 0.0
  %2655 = vmatpush1.msra.mxu0 0.0
  %2656 = vmatprep.subr.mxu0 0.0
  %2657 = vmatpush1.msra.mxu0 0.0
  %2658 = vmatprep.subr.mxu0 0.0
  %2659 = vmatpush1.msra.mxu0 %v2609
  %2660 = vmatprep.subr.mxu0 0.0
  %2661 = vmatpush1.msra.mxu0 %v2608
  %2662 = vmatprep.subr.mxu0 0.0
  %2663 = vmatpush1.msra.mxu0 %v2607
  %2664 = vmatprep.subr.mxu0 0.0
  %2665 = vmatpush1.msra.mxu0 %v2606
  %2666 = vmatprep.subr.mxu0 0.0
  %2667 = vmatpush1.msra.mxu0 %v2605
  %2668 = vmatprep.subr.mxu0 0.0
  %2669 = vmatpush1.msra.mxu0 %v2604
  %2670 = vmatprep.subr.mxu0 0.0
  %2671 = vmatpush1.msra.mxu0 %v2603
  %2672 = vmatprep.subr.mxu0 0.0
  %2673 = vmatpush1.msra.mxu0 %v2602
  %2674 = vmatprep.subr.mxu0 0.0
  %2675 = vmatpush2.msra.mxu0 0.0
  %2676 = vmatprep.subr.mxu0 0.0
  %2677 = vmatpush2.msra.mxu0 0.0
  %2678 = vmatprep.subr.mxu0 0.0
  %2679 = vmatpush2.msra.mxu0 0.0
  %2680 = vmatprep.subr.mxu0 0.0
  %2681 = vmatpush2.msra.mxu0 0.0
  %2682 = vmatprep.subr.mxu0 0.0
  %2683 = vmatpush2.msra.mxu0 0.0
  %2684 = vmatprep.subr.mxu0 0.0
  %2685 = vmatpush2.msra.mxu0 0.0
  %2686 = vmatprep.subr.mxu0 0.0
  %2687 = vmatpush2.msra.mxu0 0.0
  %2688 = vmatprep.subr.mxu0 0.0
  %2689 = vmatpush2.msra.mxu0 0.0
  %2690 = vmatprep.subr.mxu0 0.0
  %2691 = vmatpush2.msra.mxu0 0.0
  %2692 = vmatprep.subr.mxu0 0.0
  %2693 = vmatpush2.msra.mxu0 0.0
  %2694 = vmatprep.subr.mxu0 0.0
  %2695 = vmatpush2.msra.mxu0 0.0
  %2696 = vmatprep.subr.mxu0 0.0
  %2697 = vmatpush2.msra.mxu0 0.0
  %2698 = vmatprep.subr.mxu0 0.0
  %2699 = vmatpush2.msra.mxu0 0.0
  %2700 = vmatprep.subr.mxu0 0.0
  %2701 = vmatpush2.msra.mxu0 0.0
  %2702 = vmatprep.subr.mxu0 0.0
  %2703 = vmatpush2.msra.mxu0 0.0
  %2704 = vmatprep.subr.mxu0 0.0
  %2705 = vmatpush2.msra.mxu0 0.0
  %2706 = vmatprep.mubr.f32.mxu0 0.0
  %2707 = vmatmul.mubr.f32.gmra.mxu0 %v2619
  %v2708 = vpop.f32.mrf.mxu0
  %v2709 = vadd.f32 %v2615, %v2708
  %v2710 = vpop.f32.mrf.mxu0
  %2711 = vmatprep.mubr.f32.mxu0 0.0
  %2712 = vmatmul.mubr.f32.gmra.mxu0 %v2622
  %v2713 = vpop.f32.mrf.mxu0
  %v2714 = vadd.f32 %v2615, %v2713
  %v2715 = vpop.f32.mrf.mxu0
  %2716 = vmatprep.mubr.f32.mxu0 0.0
  %2717 = vmatmul.mubr.f32.gmra.mxu0 %v2625
  %v2718 = vpop.f32.mrf.mxu0
  %v2719 = vadd.f32 %v2615, %v2718
  %v2720 = vpop.f32.mrf.mxu0
  %2721 = vmatprep.mubr.f32.mxu0 0.0
  %2722 = vmatmul.mubr.f32.gmra.mxu0 %v2628
  %v2723 = vpop.f32.mrf.mxu0
  %v2724 = vadd.f32 %v2615, %v2723
  %v2725 = vpop.f32.mrf.mxu0
  %2726 = vmatprep.mubr.f32.mxu0 0.0
  %2727 = vmatmul.mubr.f32.gmra.mxu0 %v2631
  %v2728 = vpop.f32.mrf.mxu0
  %v2729 = vadd.f32 %v2615, %v2728
  %v2730 = vpop.f32.mrf.mxu0
  %2731 = vmatprep.mubr.f32.mxu0 0.0
  %2732 = vmatmul.mubr.f32.gmra.mxu0 %v2634
  %v2733 = vpop.f32.mrf.mxu0
  %v2734 = vadd.f32 %v2615, %v2733
  %v2735 = vpop.f32.mrf.mxu0
  %2736 = vmatprep.mubr.f32.mxu0 0.0
  %2737 = vmatmul.mubr.f32.gmra.mxu0 %v2637
  %v2738 = vpop.f32.mrf.mxu0
  %v2739 = vadd.f32 %v2615, %v2738
  %v2740 = vpop.f32.mrf.mxu0
  %2741 = vmatprep.mubr.f32.mxu0 0.0
  %2742 = vmatmul.mubr.f32.gmra.mxu0 %v2640
  %v2743 = vpop.f32.mrf.mxu0
  %v2744 = vadd.f32 %v2615, %v2743
  %v2745 = vpop.f32.mrf.mxu0
  %2746 = vdwg.mxu0
  %2747 = vst [vmem:[%s13] sm:$0xff] %v2709
  %2748 = vst [vmem:[%s13 + $0x8] sm:$0xff] %v2714
  %2749 = vst [vmem:[%s13 + $0x10] sm:$0xff] %v2719
  %2750 = vst [vmem:[%s13 + $0x18] sm:$0xff] %v2724
  %2751 = vst [vmem:[%s13 + $0x20] sm:$0xff] %v2729
  %2752 = vst [vmem:[%s13 + $0x28] sm:$0xff] %v2734
  %2753 = vst [vmem:[%s13 + $0x30] sm:$0xff] %v2739
  %2754 = vst [vmem:[%s13 + $0x38] sm:$0xff] %v2744
  // Predicated region
  $region54: #{unimodal_text_forward.1} parent=0 // pred_check
    _
  $region55: #{unimodal_text_forward.1} parent=0 // pred_check_branch
    %2756 = sbr.rel (0) target = $region57
  $region56: #{unimodal_text_forward.1} parent=0 // pred_region
    _
  $region57: #{unimodal_text_forward.1} parent=0 // pred_fallthru
    _
  // Predicated region
  $region58: #{unimodal_text_forward.1} parent=0 // pred_check
    _
  $region59: #{unimodal_text_forward.1} parent=0 // pred_check_branch
    %2758 = sbr.rel (0) target = $region61
  $region60: #{unimodal_text_forward.1} parent=0 // pred_region
    _
  $region61: #{unimodal_text_forward.1} parent=0 // pred_fallthru
    _

</llo_original>
